<compile_context>
chip_gen: v7x
topology: tpu7x:2x2x1
jax: 0.10.0
libtpu: 0.0.40
codegen_flags: <defaults>
</compile_context>

<pallas_src>
import math
import functools

import jax
import jax.numpy as jnp
import numpy as np
from jax.experimental import pallas as pl
from jax.experimental.pallas import tpu as pltpu


# ----------------------------------------------------------------------------
# VMEM budgeting helpers (generation-aware)
# ----------------------------------------------------------------------------
def _vmem_budget_cap_bytes() -> int:
    """Per-core VMEM budget: physical capacity minus ~25% headroom."""
    try:
        cap = int(pltpu.get_tpu_info().vmem_capacity_bytes)
    except Exception:
        cap = 64 << 20              # assume the smallest generation (v7x: 64 MiB/TC)
    return (cap // 4) * 3           # leave ~25% for Mosaic-internal scratch


def _vmem_limit_bytes(need: int, cap: int) -> int:
    return int(min(max(need, 16 << 20), cap))


# ----------------------------------------------------------------------------
# Path A: small vocab -> one-hot matmul on the MXU
# ----------------------------------------------------------------------------
def _token_embedding_onehot_kernel(ids_ref, table_ref, out_ref, *,
                                   scale: float, vocab_size: int):
    # ids_ref   : (tb, 1) int32 VMEM block of token ids
    # table_ref : (V, E)  VMEM -- whole table, resident across grid steps
    # out_ref   : (tb, E) lane-dense output block
    ids = ids_ref[...]                                               # (tb, 1)
    iota = jax.lax.broadcasted_iota(jnp.int32, (ids.shape[0], vocab_size), 1)
    one_hot = (ids == iota).astype(table_ref.dtype)                  # (tb, V)
    # Exact row selection: HIGHEST precision keeps f32 tables bit-exact.
    acc = jnp.dot(one_hot, table_ref[...],
                  preferred_element_type=jnp.float32,
                  precision=jax.lax.Precision.HIGHEST)               # (tb, E) f32
    # One block-wide scale (full (8,128) vregs), single unmasked store.
    out_ref[...] = (acc * scale).astype(out_ref.dtype)


def _onehot_embedding(ids, emb_table, *, tb, grid, scale, cap):
    n_padded = ids.shape[0]
    V, E = emb_table.shape
    itemsize = jnp.dtype(emb_table.dtype).itemsize
    need = (2 * V * E * itemsize          # resident table (default double-buffered)
            + 2 * tb * E * itemsize       # pipelined output blocks
            + tb * V * 4 + tb * E * 4     # one-hot + f32 accumulator intermediates
            + (4 << 20))
    # TODO(synk): pipeline_mode=pl.Buffered(1) on the table spec would halve its
    # footprint (constant index -> no prefetch needed) once verified on target jax.
    kernel = functools.partial(_token_embedding_onehot_kernel,
                               scale=scale, vocab_size=V)
    return pl.pallas_call(
        kernel,
        out_shape=jax.ShapeDtypeStruct((n_padded, E), emb_table.dtype),
        grid_spec=pltpu.PrefetchScalarGridSpec(
            num_scalar_prefetch=0,
            grid=grid,
            in_specs=[
                pl.BlockSpec((tb, 1), lambda i: (i, 0)),   # per-step id tile (VMEM)
                pl.BlockSpec((V, E), lambda i: (0, 0)),    # whole table, fetched once
            ],
            out_specs=pl.BlockSpec((tb, E), lambda i: (i, 0)),
        ),
        compiler_params=pltpu.CompilerParams(
            dimension_semantics=("parallel",),             # independent token blocks
            vmem_limit_bytes=_vmem_limit_bytes(need, cap)),
    )(ids.reshape(n_padded, 1), emb_table)


# ----------------------------------------------------------------------------
# Path B: general vocab -> table stays in HBM, DMA row-gather ring
# ----------------------------------------------------------------------------
def _token_embedding_gather_kernel(tok_ref, table_ref, out_ref, gbuf, sem, *,
                                   scale: float, tokens_per_block: int,
                                   inflight: int):
    # tok_ref   : (N_padded,) int32 SMEM (scalar-prefetched token ids)
    # table_ref : (V, E) HBM ref (memory_space=pl.ANY) -- rows fetched on demand
    # out_ref   : (tb, E) VMEM output block
    # gbuf      : (tb, E) VMEM scratch slab receiving DMA'd rows
    # sem       : (inflight,) DMA semaphores (copy ring)
    i = pl.program_id(0)
    base = i * tokens_per_block

    def row_copy(j):
        tok = tok_ref[base + j]
        return pltpu.make_async_copy(
            table_ref.at[pl.ds(tok, 1), :],
            gbuf.at[pl.ds(j, 1), :],
            sem.at[j % inflight])

    # Prime the DMA ring.
    for j in range(inflight):
        row_copy(j).start()

    def body(j, carry):
        row_copy(j).wait()
        @pl.when(j + inflight < tokens_per_block)
        def _():
            row_copy(j + inflight).start()
        return carry

    jax.lax.fori_loop(0, tokens_per_block, body, 0, unroll=4)

    # Rows land via the DMA engines (no vst-slot traffic); the only vector work
    # is ONE block-wide f32 scale + unmasked store.
    out_ref[...] = (gbuf[...].astype(jnp.float32) * scale).astype(out_ref.dtype)


def _dma_gather_embedding(ids, emb_table, *, tb, grid, scale, cap, inflight):
    n_padded = ids.shape[0]
    V, E = emb_table.shape
    itemsize = jnp.dtype(emb_table.dtype).itemsize
    need = 2 * tb * E * itemsize + tb * E * itemsize + (4 << 20)
    kernel = functools.partial(_token_embedding_gather_kernel, scale=scale,
                               tokens_per_block=tb, inflight=inflight)
    # TODO(synk): for very long sequences (N >~ 256K tokens) the whole-sequence
    # scalar prefetch pads SMEM aggressively; switch ids to per-block tiles.
    return pl.pallas_call(
        kernel,
        out_shape=jax.ShapeDtypeStruct((n_padded, E), emb_table.dtype),
        grid_spec=pltpu.PrefetchScalarGridSpec(
            num_scalar_prefetch=1,                           # token ids -> SMEM
            grid=grid,
            in_specs=[pl.BlockSpec(memory_space=pl.ANY)],    # table stays in HBM
            out_specs=pl.BlockSpec((tb, E), lambda i, tok: (i, 0)),
            scratch_shapes=[
                pltpu.VMEM((tb, E), emb_table.dtype),        # gathered row slab
                pltpu.SemaphoreType.DMA((inflight,)),        # DMA ring
            ]),
        compiler_params=pltpu.CompilerParams(
            dimension_semantics=("parallel",),
            vmem_limit_bytes=_vmem_limit_bytes(need, cap)),
    )(ids, emb_table)


# ----------------------------------------------------------------------------
# Wrapper: mirrors TokenEmbedding.forward
# ----------------------------------------------------------------------------
def token_embedding_forward(tokens: jax.Array, emb_table: jax.Array, *,
                            block_tokens: int = 512,
                            onehot_max_vocab: int = 2048,
                            use_onehot: bool | None = None,
                            dma_inflight: int = 8) -> jax.Array:
    """tokens: integer array of any shape; emb_table: (vocab, emb_size).

    Returns tokens.shape + (emb_size,), equal to emb_table[tokens] * sqrt(emb_size).
    """
    V, E = emb_table.shape
    scale = float(math.sqrt(E))
    orig_shape = tokens.shape

    ids = tokens.reshape(-1).astype(jnp.int32)            # == tokens.long()
    ids = jnp.clip(ids, 0, V - 1)                         # no unchecked OOB gathers
    N = int(ids.shape[0])

    # Tokens per grid step: multiple of 8 (sublane), clamped for tiny inputs,
    # last dim of the output block = full E (lane-dense, unmasked stores).
    tb = max(8, min(block_tokens, ((N + 7) // 8) * 8))
    tb -= tb % 8
    n_pad = (-N) % tb
    if n_pad:
        ids = jnp.concatenate([ids, jnp.zeros((n_pad,), jnp.int32)])
    n_padded = N + n_pad
    grid = (n_padded // tb,)

    itemsize = jnp.dtype(emb_table.dtype).itemsize
    cap = _vmem_budget_cap_bytes()

    if use_onehot is None:
        onehot_need = (2 * V * E * itemsize + 2 * tb * E * itemsize
                       + tb * V * 4 + tb * E * 4 + (4 << 20))
        use_onehot = (V <= onehot_max_vocab) and (onehot_need <= cap)

    if use_onehot:
        out = _onehot_embedding(ids, emb_table, tb=tb, grid=grid,
                                scale=scale, cap=cap)
    else:
        out = _dma_gather_embedding(ids, emb_table, tb=tb, grid=grid,
                                    scale=scale, cap=cap,
                                    inflight=max(1, min(dma_inflight, tb)))
    return out[:N].reshape(*orig_shape, E)


# ----------------------------------------------------------------------------
# Demo / self-check
# ----------------------------------------------------------------------------
if __name__ == "__main__":
    VOCAB, EMB = 1000, 128
    SEQ, BATCH = 8, 2

    key = jax.random.PRNGKey(0)
    k_tok, k_emb = jax.random.split(key)
    tokens = jax.random.randint(k_tok, (SEQ, BATCH), 0, VOCAB, dtype=jnp.int32)
    # nn.Embedding default init ~ N(0, 1)
    emb_table = jax.random.normal(k_emb, (VOCAB, EMB), dtype=jnp.float32)

    ref = np.asarray(emb_table)[np.asarray(tokens)] * math.sqrt(EMB)

    # Default dispatch (small vocab -> one-hot / MXU path).
    out = jax.block_until_ready(token_embedding_forward(tokens, emb_table))
    assert out.shape == (SEQ, BATCH, EMB)
    np.testing.assert_allclose(np.asarray(out), ref, rtol=1e-5, atol=1e-5)

    # General path (table in HBM + DMA row gather), forced for coverage.
    out_g = jax.block_until_ready(
        token_embedding_forward(tokens, emb_table, use_onehot=False))
    assert out_g.shape == (SEQ, BATCH, EMB)
    np.testing.assert_allclose(np.asarray(out_g), ref, rtol=1e-6, atol=1e-6)

    print("KERNEL_OK")
</pallas_src>

<mosaic_0001>
module attributes {stable_mosaic.version = 11 : i64} {
  func.func @_token_embedding_onehot_kernel(%arg0: i32, %arg1: memref<16x1xi32, #tpu.memory_space<vmem>>, %arg2: memref<1000x128xf32, #tpu.memory_space<vmem>>, %arg3: memref<16x128xf32, #tpu.memory_space<vmem>>) attributes {dimension_semantics = [#tpu.dimension_semantics<parallel>], iteration_bounds = array<i64: 1>, scalar_prefetch = 0 : i64, scratch_operands = 0 : i64, tpu.core_type = #tpu.core_type<tc>, window_params = [{transform_indices = @transform_0, window_bounds = array<i64: 16, 1>}, {pipeline_mode = #tpu.pipeline_mode<synchronous>, transform_indices = @transform_1, window_bounds = array<i64: 1000, 128>}, {transform_indices = @transform_2, window_bounds = array<i64: 16, 128>}]} {
    %c0 = arith.constant 0 : index
    %c0_0 = arith.constant 0 : index
    %0 = vector.load %arg1[%c0, %c0_0] : memref<16x1xi32, #tpu.memory_space<vmem>>, vector<16x1xi32>
    %1 = tpu.iota {dimensions = array<i32: 1>} : vector<16x1000xi32>
    %2 = vector.broadcast %0 : vector<16x1xi32> to vector<16x1000xi32>
    %3 = arith.cmpi eq, %2, %1 : vector<16x1000xi32>
    %4 = arith.extui %3 : vector<16x1000xi1> to vector<16x1000xi32>
    %5 = arith.sitofp %4 : vector<16x1000xi32> to vector<16x1000xf32>
    %c0_1 = arith.constant 0 : index
    %c0_2 = arith.constant 0 : index
    %6 = vector.load %arg2[%c0_1, %c0_2] : memref<1000x128xf32, #tpu.memory_space<vmem>>, vector<1000x128xf32>
    %cst = arith.constant dense<0.000000e+00> : vector<16x128xf32>
    %7 = tpu.matmul %5, %6, %cst {dimension_numbers = #tpu.dot_dimension_numbers<[1], [0], [0], [1], [0, 0, 1, 1], [], []>, precision = #tpu.contract_precision<fp32>} : vector<16x1000xf32>, vector<1000x128xf32>, vector<16x128xf32> -> vector<16x128xf32>
    %cst_3 = arith.constant 11.3137083 : f32
    %8 = vector.broadcast %cst_3 : f32 to vector<16x128xf32>
    %9 = arith.mulf %7, %8 : vector<16x128xf32>
    %c0_4 = arith.constant 0 : index
    %c0_5 = arith.constant 0 : index
    %10 = vector.load %arg3[%c0_4, %c0_5] : memref<16x128xf32, #tpu.memory_space<vmem>>, vector<16x128xf32>
    tpu.vector_store %arg3[%c0_4, %c0_5], %9 {strides = array<i32>} : memref<16x128xf32, #tpu.memory_space<vmem>>, vector<16x128xf32>,
    return
  }
  func.func @transform_0(%arg0: i32) -> (i32, i32) {
    %c0_i32 = arith.constant 0 : i32
    %c0_i32_0 = arith.constant 0 : i32
    return %arg0, %c0_i32 : i32, i32
  }
  func.func @transform_1(%arg0: i32) -> (i32, i32) {
    %c0_i32 = arith.constant 0 : i32
    %c0_i32_0 = arith.constant 0 : i32
    %c0_i32_1 = arith.constant 0 : i32
    return %c0_i32, %c0_i32_0 : i32, i32
  }
  func.func @transform_2(%arg0: i32) -> (i32, i32) {
    %c0_i32 = arith.constant 0 : i32
    %c0_i32_0 = arith.constant 0 : i32
    return %arg0, %c0_i32 : i32, i32
  }
}

</mosaic_0001>

<llo_original>
// kernel: tpu_custom_call.1
$region0: #{tpu_custom_call.1}
  #allocation0 [shape = 'u32[]', space=smem, size = 0x4, offset = 0x4, fixed_abs, tag = 'smem constant byte address 0x4 - core index']
  #allocation1 [shape = 'u32[144,128]{1,0:T(1,128)}', space=vmem, size = 0x12000, scoped, tag = 'internal scratch']
  %s0 = inlined_call_operand.vmem [shape: s32[16,1], index: 0, kind: input, shape index: {}]
  %s1 = inlined_call_operand.hbm [shape: f32[1000,128], index: 1, kind: input, shape index: {}]
  %s2 = inlined_call_operand.hbm [shape: f32[16,128], index: 2, kind: output, shape index: {}]
  %s3 = sld [smem:[#allocation0]]
  $region22: #{tpu_custom_call.1} parent=0
    _
  %s5 = ssub.s32 1, %s3
  %s6 = scalar_select 0, %s5, %s3
  $region1: #{tpu_custom_call.1} parent=0
    #allocation2 [shape = 'u8[512000]{0}', space=vmem, size = 0x7d000, scoped, tag = 'input window, operand 1, single buffered']
    #allocation3 [shape = 's32[1]{0}', space=sflag, size = 0x4, scoped, tag = 'scoped memory for tpu_custom_call.1']
    #allocation4 [shape = 's32[1]{0}', space=sflag, size = 0x4, scoped, tag = 'scoped memory for tpu_custom_call.1']
    #allocation5 [shape = 'u8[8192]{0}', space=vmem, size = 0x2000, scoped, tag = 'output window, operand 0, single buffered']
    %7 = vsyncpa [#allocation3], 0
    %8 = vsyncpa [#allocation4], 0
    // Predicated region
    $region2: #{tpu_custom_call.1} parent=1 // pred_check
      _
    $region3: #{tpu_custom_call.1} parent=1 // pred_check_branch
      %10 = sbr.rel (0) target = $region5
    $region4: #{tpu_custom_call.1} parent=1 // pred_region
      _
    $region5: #{tpu_custom_call.1} parent=1 // pred_fallthru
      _
    // Predicated region
    $region6: #{tpu_custom_call.1} parent=1 // pred_check
      _
    $region7: #{tpu_custom_call.1} parent=1 // pred_check_branch
      %12 = sbr.rel (0) target = $region9
    $region8: #{tpu_custom_call.1} parent=1 // pred_region
      %s14 = ssub.s32 16000, 16000
      %15 = vsyncadd [#allocation3], %s14
      %s16 = sshll.u32 [#allocation2], 4
      %s17 = int_to_ptr.vmem [resolvable:$true] %s16
      %22 = dma.hbm_to_vmem [thread:$0]  %s1, 16000, %s17, [#allocation3], 128, 128, 8
    $region9: #{tpu_custom_call.1} parent=1 // pred_fallthru
      _
    // Predicated region
    $region10: #{tpu_custom_call.1} parent=1 // pred_check
      _
    $region11: #{tpu_custom_call.1} parent=1 // pred_check_branch
      %24 = sbr.rel (0) target = $region13
    $region12: #{tpu_custom_call.1} parent=1 // pred_region
      %25 = dma.done [#allocation3], 16000
    $region13: #{tpu_custom_call.1} parent=1 // pred_fallthru
      _
    %v26 = vld [vmem:[%s0] sm:$0xff]
    %v27 = vld [vmem:[%s0 + $0x8] sm:$0xff]
    %v28 = vlaneseq
    %v29 = vand.u32 %v28, 127
    %v30 = vadd.s32 %v29, 128
    %v31 = vadd.s32 %v29, 256
    %v32 = vadd.s32 %v29, 384
    %v33 = vadd.s32 %v29, 512
    %v34 = vadd.s32 %v29, 640
    %v35 = vadd.s32 %v29, 768
    %v36 = vadd.s32 %v29, 896
    %37 = vset.pattern.permute.xlu0 0
    %38 = vperm.xlu0 %37, %v26
    %v39 = vpop.permute.xlu0 %38
    %40 = vset.pattern.permute.xlu0 0
    %41 = vperm.xlu0 %40, %v27
    %v42 = vpop.permute.xlu0 %41
    %vm43 = vcmp.eq.s32.totalorder %v39, %v29
    %vm44 = vcmp.eq.s32.totalorder %v39, %v30
    %vm45 = vcmp.eq.s32.totalorder %v39, %v31
    %vm46 = vcmp.eq.s32.totalorder %v39, %v32
    %vm47 = vcmp.eq.s32.totalorder %v39, %v33
    %vm48 = vcmp.eq.s32.totalorder %v39, %v34
    %vm49 = vcmp.eq.s32.totalorder %v39, %v35
    %vm50 = vcmp.eq.s32.totalorder %v39, %v36
    %vm51 = vcmp.eq.s32.totalorder %v42, %v29
    %vm52 = vcmp.eq.s32.totalorder %v42, %v30
    %vm53 = vcmp.eq.s32.totalorder %v42, %v31
    %vm54 = vcmp.eq.s32.totalorder %v42, %v32
    %vm55 = vcmp.eq.s32.totalorder %v42, %v33
    %vm56 = vcmp.eq.s32.totalorder %v42, %v34
    %vm57 = vcmp.eq.s32.totalorder %v42, %v35
    %vm58 = vcmp.eq.s32.totalorder %v42, %v36
    %v59 = vsel %vm43, 1, 0
    %v60 = vsel %vm44, 1, 0
    %v61 = vsel %vm45, 1, 0
    %v62 = vsel %vm46, 1, 0
    %v63 = vsel %vm47, 1, 0
    %v64 = vsel %vm48, 1, 0
    %v65 = vsel %vm49, 1, 0
    %v66 = vsel %vm50, 1, 0
    %v67 = vsel %vm51, 1, 0
    %v68 = vsel %vm52, 1, 0
    %v69 = vsel %vm53, 1, 0
    %v70 = vsel %vm54, 1, 0
    %v71 = vsel %vm55, 1, 0
    %v72 = vsel %vm56, 1, 0
    %v73 = vsel %vm57, 1, 0
    %v74 = vsel %vm58, 1, 0
    %v75 = vcvt.s32.f32 %v59
    %v76 = vcvt.s32.f32 %v60
    %v77 = vcvt.s32.f32 %v61
    %v78 = vcvt.s32.f32 %v62
    %v79 = vcvt.s32.f32 %v63
    %v80 = vcvt.s32.f32 %v64
    %v81 = vcvt.s32.f32 %v65
    %v82 = vcvt.s32.f32 %v66
    %v83 = vcvt.s32.f32 %v67
    %v84 = vcvt.s32.f32 %v68
    %v85 = vcvt.s32.f32 %v69
    %v86 = vcvt.s32.f32 %v70
    %v87 = vcvt.s32.f32 %v71
    %v88 = vcvt.s32.f32 %v72
    %v89 = vcvt.s32.f32 %v73
    %v90 = vcvt.s32.f32 %v74
    %v91 = vld [vmem:[#allocation2] sm:$0xff]
    %v92 = vld [vmem:[#allocation2 + $0x8] sm:$0xff]
    %v93 = vld [vmem:[#allocation2 + $0x10] sm:$0xff]
    %v94 = vld [vmem:[#allocation2 + $0x18] sm:$0xff]
    %v95 = vld [vmem:[#allocation2 + $0x20] sm:$0xff]
    %v96 = vld [vmem:[#allocation2 + $0x28] sm:$0xff]
    %v97 = vld [vmem:[#allocation2 + $0x30] sm:$0xff]
    %v98 = vld [vmem:[#allocation2 + $0x38] sm:$0xff]
    %v99 = vld [vmem:[#allocation2 + $0x40] sm:$0xff]
    %v100 = vld [vmem:[#allocation2 + $0x48] sm:$0xff]
    %v101 = vld [vmem:[#allocation2 + $0x50] sm:$0xff]
    %v102 = vld [vmem:[#allocation2 + $0x58] sm:$0xff]
    %v103 = vld [vmem:[#allocation2 + $0x60] sm:$0xff]
    %v104 = vld [vmem:[#allocation2 + $0x68] sm:$0xff]
    %v105 = vld [vmem:[#allocation2 + $0x70] sm:$0xff]
    %v106 = vld [vmem:[#allocation2 + $0x78] sm:$0xff]
    %v107 = vld [vmem:[#allocation2 + $0x80] sm:$0xff]
    %v108 = vld [vmem:[#allocation2 + $0x88] sm:$0xff]
    %v109 = vld [vmem:[#allocation2 + $0x90] sm:$0xff]
    %v110 = vld [vmem:[#allocation2 + $0x98] sm:$0xff]
    %v111 = vld [vmem:[#allocation2 + $0xa0] sm:$0xff]
    %v112 = vld [vmem:[#allocation2 + $0xa8] sm:$0xff]
    %v113 = vld [vmem:[#allocation2 + $0xb0] sm:$0xff]
    %v114 = vld [vmem:[#allocation2 + $0xb8] sm:$0xff]
    %v115 = vld [vmem:[#allocation2 + $0xc0] sm:$0xff]
    %v116 = vld [vmem:[#allocation2 + $0xc8] sm:$0xff]
    %v117 = vld [vmem:[#allocation2 + $0xd0] sm:$0xff]
    %v118 = vld [vmem:[#allocation2 + $0xd8] sm:$0xff]
    %v119 = vld [vmem:[#allocation2 + $0xe0] sm:$0xff]
    %v120 = vld [vmem:[#allocation2 + $0xe8] sm:$0xff]
    %v121 = vld [vmem:[#allocation2 + $0xf0] sm:$0xff]
    %v122 = vld [vmem:[#allocation2 + $0xf8] sm:$0xff]
    %v123 = vld [vmem:[#allocation2 + $0x100] sm:$0xff]
    %v124 = vld [vmem:[#allocation2 + $0x108] sm:$0xff]
    %v125 = vld [vmem:[#allocation2 + $0x110] sm:$0xff]
    %v126 = vld [vmem:[#allocation2 + $0x118] sm:$0xff]
    %v127 = vld [vmem:[#allocation2 + $0x120] sm:$0xff]
    %v128 = vld [vmem:[#allocation2 + $0x128] sm:$0xff]
    %v129 = vld [vmem:[#allocation2 + $0x130] sm:$0xff]
    %v130 = vld [vmem:[#allocation2 + $0x138] sm:$0xff]
    %v131 = vld [vmem:[#allocation2 + $0x140] sm:$0xff]
    %v132 = vld [vmem:[#allocation2 + $0x148] sm:$0xff]
    %v133 = vld [vmem:[#allocation2 + $0x150] sm:$0xff]
    %v134 = vld [vmem:[#allocation2 + $0x158] sm:$0xff]
    %v135 = vld [vmem:[#allocation2 + $0x160] sm:$0xff]
    %v136 = vld [vmem:[#allocation2 + $0x168] sm:$0xff]
    %v137 = vld [vmem:[#allocation2 + $0x170] sm:$0xff]
    %v138 = vld [vmem:[#allocation2 + $0x178] sm:$0xff]
    %v139 = vld [vmem:[#allocation2 + $0x180] sm:$0xff]
    %v140 = vld [vmem:[#allocation2 + $0x188] sm:$0xff]
    %v141 = vld [vmem:[#allocation2 + $0x190] sm:$0xff]
    %v142 = vld [vmem:[#allocation2 + $0x198] sm:$0xff]
    %v143 = vld [vmem:[#allocation2 + $0x1a0] sm:$0xff]
    %v144 = vld [vmem:[#allocation2 + $0x1a8] sm:$0xff]
    %v145 = vld [vmem:[#allocation2 + $0x1b0] sm:$0xff]
    %v146 = vld [vmem:[#allocation2 + $0x1b8] sm:$0xff]
    %v147 = vld [vmem:[#allocation2 + $0x1c0] sm:$0xff]
    %v148 = vld [vmem:[#allocation2 + $0x1c8] sm:$0xff]
    %v149 = vld [vmem:[#allocation2 + $0x1d0] sm:$0xff]
    %v150 = vld [vmem:[#allocation2 + $0x1d8] sm:$0xff]
    %v151 = vld [vmem:[#allocation2 + $0x1e0] sm:$0xff]
    %v152 = vld [vmem:[#allocation2 + $0x1e8] sm:$0xff]
    %v153 = vld [vmem:[#allocation2 + $0x1f0] sm:$0xff]
    %v154 = vld [vmem:[#allocation2 + $0x1f8] sm:$0xff]
    %v155 = vld [vmem:[#allocation2 + $0x200] sm:$0xff]
    %v156 = vld [vmem:[#allocation2 + $0x208] sm:$0xff]
    %v157 = vld [vmem:[#allocation2 + $0x210] sm:$0xff]
    %v158 = vld [vmem:[#allocation2 + $0x218] sm:$0xff]
    %v159 = vld [vmem:[#allocation2 + $0x220] sm:$0xff]
    %v160 = vld [vmem:[#allocation2 + $0x228] sm:$0xff]
    %v161 = vld [vmem:[#allocation2 + $0x230] sm:$0xff]
    %v162 = vld [vmem:[#allocation2 + $0x238] sm:$0xff]
    %v163 = vld [vmem:[#allocation2 + $0x240] sm:$0xff]
    %v164 = vld [vmem:[#allocation2 + $0x248] sm:$0xff]
    %v165 = vld [vmem:[#allocation2 + $0x250] sm:$0xff]
    %v166 = vld [vmem:[#allocation2 + $0x258] sm:$0xff]
    %v167 = vld [vmem:[#allocation2 + $0x260] sm:$0xff]
    %v168 = vld [vmem:[#allocation2 + $0x268] sm:$0xff]
    %v169 = vld [vmem:[#allocation2 + $0x270] sm:$0xff]
    %v170 = vld [vmem:[#allocation2 + $0x278] sm:$0xff]
    %v171 = vld [vmem:[#allocation2 + $0x280] sm:$0xff]
    %v172 = vld [vmem:[#allocation2 + $0x288] sm:$0xff]
    %v173 = vld [vmem:[#allocation2 + $0x290] sm:$0xff]
    %v174 = vld [vmem:[#allocation2 + $0x298] sm:$0xff]
    %v175 = vld [vmem:[#allocation2 + $0x2a0] sm:$0xff]
    %v176 = vld [vmem:[#allocation2 + $0x2a8] sm:$0xff]
    %v177 = vld [vmem:[#allocation2 + $0x2b0] sm:$0xff]
    %v178 = vld [vmem:[#allocation2 + $0x2b8] sm:$0xff]
    %v179 = vld [vmem:[#allocation2 + $0x2c0] sm:$0xff]
    %v180 = vld [vmem:[#allocation2 + $0x2c8] sm:$0xff]
    %v181 = vld [vmem:[#allocation2 + $0x2d0] sm:$0xff]
    %v182 = vld [vmem:[#allocation2 + $0x2d8] sm:$0xff]
    %v183 = vld [vmem:[#allocation2 + $0x2e0] sm:$0xff]
    %v184 = vld [vmem:[#allocation2 + $0x2e8] sm:$0xff]
    %v185 = vld [vmem:[#allocation2 + $0x2f0] sm:$0xff]
    %v186 = vld [vmem:[#allocation2 + $0x2f8] sm:$0xff]
    %v187 = vld [vmem:[#allocation2 + $0x300] sm:$0xff]
    %v188 = vld [vmem:[#allocation2 + $0x308] sm:$0xff]
    %v189 = vld [vmem:[#allocation2 + $0x310] sm:$0xff]
    %v190 = vld [vmem:[#allocation2 + $0x318] sm:$0xff]
    %v191 = vld [vmem:[#allocation2 + $0x320] sm:$0xff]
    %v192 = vld [vmem:[#allocation2 + $0x328] sm:$0xff]
    %v193 = vld [vmem:[#allocation2 + $0x330] sm:$0xff]
    %v194 = vld [vmem:[#allocation2 + $0x338] sm:$0xff]
    %v195 = vld [vmem:[#allocation2 + $0x340] sm:$0xff]
    %v196 = vld [vmem:[#allocation2 + $0x348] sm:$0xff]
    %v197 = vld [vmem:[#allocation2 + $0x350] sm:$0xff]
    %v198 = vld [vmem:[#allocation2 + $0x358] sm:$0xff]
    %v199 = vld [vmem:[#allocation2 + $0x360] sm:$0xff]
    %v200 = vld [vmem:[#allocation2 + $0x368] sm:$0xff]
    %v201 = vld [vmem:[#allocation2 + $0x370] sm:$0xff]
    %v202 = vld [vmem:[#allocation2 + $0x378] sm:$0xff]
    %v203 = vld [vmem:[#allocation2 + $0x380] sm:$0xff]
    %v204 = vld [vmem:[#allocation2 + $0x388] sm:$0xff]
    %v205 = vld [vmem:[#allocation2 + $0x390] sm:$0xff]
    %v206 = vld [vmem:[#allocation2 + $0x398] sm:$0xff]
    %v207 = vld [vmem:[#allocation2 + $0x3a0] sm:$0xff]
    %v208 = vld [vmem:[#allocation2 + $0x3a8] sm:$0xff]
    %v209 = vld [vmem:[#allocation2 + $0x3b0] sm:$0xff]
    %v210 = vld [vmem:[#allocation2 + $0x3b8] sm:$0xff]
    %v211 = vld [vmem:[#allocation2 + $0x3c0] sm:$0xff]
    %v212 = vld [vmem:[#allocation2 + $0x3c8] sm:$0xff]
    %v213 = vld [vmem:[#allocation2 + $0x3d0] sm:$0xff]
    %v214 = vld [vmem:[#allocation2 + $0x3d8] sm:$0xff]
    %v215 = vld [vmem:[#allocation2 + $0x3e0] sm:$0xff]
    %vm216 = vcmask 850944
    %v218 = vsel %vm216, %v82, 0
    %v221 = vsel %vm216, %v90, 0
    %223 = vmatprep.subr.mxu0 0.0
    %v224 = vand.u32 %v91, 4294901760
    %225 = vmatpush1.msra.mxu0 %v224
    %226 = vmatprep.subr.mxu0 0.0
    %v227 = vand.u32 %v92, 4294901760
    %228 = vmatpush1.msra.mxu0 %v227
    %229 = vmatprep.subr.mxu0 0.0
    %v230 = vand.u32 %v93, 4294901760
    %231 = vmatpush1.msra.mxu0 %v230
    %232 = vmatprep.subr.mxu0 0.0
    %v233 = vand.u32 %v94, 4294901760
    %234 = vmatpush1.msra.mxu0 %v233
    %235 = vmatprep.subr.mxu0 0.0
    %v236 = vand.u32 %v95, 4294901760
    %237 = vmatpush1.msra.mxu0 %v236
    %238 = vmatprep.subr.mxu0 0.0
    %v239 = vand.u32 %v96, 4294901760
    %240 = vmatpush1.msra.mxu0 %v239
    %241 = vmatprep.subr.mxu0 0.0
    %v242 = vand.u32 %v97, 4294901760
    %243 = vmatpush1.msra.mxu0 %v242
    %244 = vmatprep.subr.mxu0 0.0
    %v245 = vand.u32 %v98, 4294901760
    %246 = vmatpush1.msra.mxu0 %v245
    %247 = vmatprep.subr.mxu0 0.0
    %v248 = vand.u32 %v99, 4294901760
    %249 = vmatpush1.msra.mxu0 %v248
    %250 = vmatprep.subr.mxu0 0.0
    %v251 = vand.u32 %v100, 4294901760
    %252 = vmatpush1.msra.mxu0 %v251
    %253 = vmatprep.subr.mxu0 0.0
    %v254 = vand.u32 %v101, 4294901760
    %255 = vmatpush1.msra.mxu0 %v254
    %256 = vmatprep.subr.mxu0 0.0
    %v257 = vand.u32 %v102, 4294901760
    %258 = vmatpush1.msra.mxu0 %v257
    %259 = vmatprep.subr.mxu0 0.0
    %v260 = vand.u32 %v103, 4294901760
    %261 = vmatpush1.msra.mxu0 %v260
    %262 = vmatprep.subr.mxu0 0.0
    %v263 = vand.u32 %v104, 4294901760
    %264 = vmatpush1.msra.mxu0 %v263
    %265 = vmatprep.subr.mxu0 0.0
    %v266 = vand.u32 %v105, 4294901760
    %267 = vmatpush1.msra.mxu0 %v266
    %268 = vmatprep.subr.mxu0 0.0
    %v269 = vand.u32 %v106, 4294901760
    %270 = vmatpush1.msra.mxu0 %v269
    %271 = vmatprep.subr.mxu0 0.0
    %v272 = vand.u32 %v107, 4294901760
    %273 = vmatpush1.msra.mxu0 %v272
    %274 = vmatprep.subr.mxu0 0.0
    %v275 = vand.u32 %v108, 4294901760
    %276 = vmatpush1.msra.mxu0 %v275
    %277 = vmatprep.subr.mxu0 0.0
    %v278 = vand.u32 %v109, 4294901760
    %279 = vmatpush1.msra.mxu0 %v278
    %280 = vmatprep.subr.mxu0 0.0
    %v281 = vand.u32 %v110, 4294901760
    %282 = vmatpush1.msra.mxu0 %v281
    %283 = vmatprep.subr.mxu0 0.0
    %v284 = vand.u32 %v111, 4294901760
    %285 = vmatpush1.msra.mxu0 %v284
    %286 = vmatprep.subr.mxu0 0.0
    %v287 = vand.u32 %v112, 4294901760
    %288 = vmatpush1.msra.mxu0 %v287
    %289 = vmatprep.subr.mxu0 0.0
    %v290 = vand.u32 %v113, 4294901760
    %291 = vmatpush1.msra.mxu0 %v290
    %292 = vmatprep.subr.mxu0 0.0
    %v293 = vand.u32 %v114, 4294901760
    %294 = vmatpush1.msra.mxu0 %v293
    %295 = vmatprep.subr.mxu0 0.0
    %v296 = vand.u32 %v115, 4294901760
    %297 = vmatpush1.msra.mxu0 %v296
    %298 = vmatprep.subr.mxu0 0.0
    %v299 = vand.u32 %v116, 4294901760
    %300 = vmatpush1.msra.mxu0 %v299
    %301 = vmatprep.subr.mxu0 0.0
    %v302 = vand.u32 %v117, 4294901760
    %303 = vmatpush1.msra.mxu0 %v302
    %304 = vmatprep.subr.mxu0 0.0
    %v305 = vand.u32 %v118, 4294901760
    %306 = vmatpush1.msra.mxu0 %v305
    %307 = vmatprep.subr.mxu0 0.0
    %v308 = vand.u32 %v119, 4294901760
    %309 = vmatpush1.msra.mxu0 %v308
    %310 = vmatprep.subr.mxu0 0.0
    %v311 = vand.u32 %v120, 4294901760
    %312 = vmatpush1.msra.mxu0 %v311
    %313 = vmatprep.subr.mxu0 0.0
    %v314 = vand.u32 %v121, 4294901760
    %315 = vmatpush1.msra.mxu0 %v314
    %316 = vmatprep.subr.mxu0 0.0
    %v317 = vand.u32 %v122, 4294901760
    %318 = vmatpush1.msra.mxu0 %v317
    %v319 = vand.u32 %v76, 4294901760
    %v320 = vsub.f32 %v76, %v319
    %v321 = vand.u32 %v320, 4294901760
    %v322 = vsub.f32 %v320, %v321
    %v323 = vand.u32 %v322, 4294901760
    %324 = vmatprep.mubr.f32.mxu0 %v323
    %v325 = vand.u32 %v75, 4294901760
    %v326 = vsub.f32 %v75, %v325
    %v327 = vand.u32 %v326, 4294901760
    %v328 = vsub.f32 %v326, %v327
    %v329 = vand.u32 %v328, 4294901760
    %330 = vmatmul.mubr.f32.gmra.mrb[0].mxu0 %v329
    %v331 = vpop.f32.mrb[0].mxu0
    %v332 = vadd.f32 0.0, %v331
    %v333 = vpop.f32.mrb[0].mxu0
    %v334 = vand.u32 %v84, 4294901760
    %v335 = vsub.f32 %v84, %v334
    %v336 = vand.u32 %v335, 4294901760
    %v337 = vsub.f32 %v335, %v336
    %v338 = vand.u32 %v337, 4294901760
    %339 = vmatprep.mubr.f32.mxu0 %v338
    %v340 = vand.u32 %v83, 4294901760
    %v341 = vsub.f32 %v83, %v340
    %v342 = vand.u32 %v341, 4294901760
    %v343 = vsub.f32 %v341, %v342
    %v344 = vand.u32 %v343, 4294901760
    %345 = vmatmul.mubr.f32.gmra.mrb[0].mxu0 %v344
    %v346 = vpop.f32.mrb[0].mxu0
    %v347 = vadd.f32 0.0, %v346
    %v348 = vpop.f32.mrb[0].mxu0
    %349 = vdwg.mxu0
    %350 = vmatprep.subr.mxu0 0.0
    %v351 = vand.u32 %v91, 4294901760
    %v352 = vsub.f32 %v91, %v351
    %v353 = vand.u32 %v352, 4294901760
    %v354 = vsub.f32 %v352, %v353
    %v355 = vand.u32 %v354, 4294901760
    %356 = vmatpush1.msra.mxu0 %v355
    %357 = vmatprep.subr.mxu0 0.0
    %v358 = vand.u32 %v92, 4294901760
    %v359 = vsub.f32 %v92, %v358
    %v360 = vand.u32 %v359, 4294901760
    %v361 = vsub.f32 %v359, %v360
    %v362 = vand.u32 %v361, 4294901760
    %363 = vmatpush1.msra.mxu0 %v362
    %364 = vmatprep.subr.mxu0 0.0
    %v365 = vand.u32 %v93, 4294901760
    %v366 = vsub.f32 %v93, %v365
    %v367 = vand.u32 %v366, 4294901760
    %v368 = vsub.f32 %v366, %v367
    %v369 = vand.u32 %v368, 4294901760
    %370 = vmatpush1.msra.mxu0 %v369
    %371 = vmatprep.subr.mxu0 0.0
    %v372 = vand.u32 %v94, 4294901760
    %v373 = vsub.f32 %v94, %v372
    %v374 = vand.u32 %v373, 4294901760
    %v375 = vsub.f32 %v373, %v374
    %v376 = vand.u32 %v375, 4294901760
    %377 = vmatpush1.msra.mxu0 %v376
    %378 = vmatprep.subr.mxu0 0.0
    %v379 = vand.u32 %v95, 4294901760
    %v380 = vsub.f32 %v95, %v379
    %v381 = vand.u32 %v380, 4294901760
    %v382 = vsub.f32 %v380, %v381
    %v383 = vand.u32 %v382, 4294901760
    %384 = vmatpush1.msra.mxu0 %v383
    %385 = vmatprep.subr.mxu0 0.0
    %v386 = vand.u32 %v96, 4294901760
    %v387 = vsub.f32 %v96, %v386
    %v388 = vand.u32 %v387, 4294901760
    %v389 = vsub.f32 %v387, %v388
    %v390 = vand.u32 %v389, 4294901760
    %391 = vmatpush1.msra.mxu0 %v390
    %392 = vmatprep.subr.mxu0 0.0
    %v393 = vand.u32 %v97, 4294901760
    %v394 = vsub.f32 %v97, %v393
    %v395 = vand.u32 %v394, 4294901760
    %v396 = vsub.f32 %v394, %v395
    %v397 = vand.u32 %v396, 4294901760
    %398 = vmatpush1.msra.mxu0 %v397
    %399 = vmatprep.subr.mxu0 0.0
    %v400 = vand.u32 %v98, 4294901760
    %v401 = vsub.f32 %v98, %v400
    %v402 = vand.u32 %v401, 4294901760
    %v403 = vsub.f32 %v401, %v402
    %v404 = vand.u32 %v403, 4294901760
    %405 = vmatpush1.msra.mxu0 %v404
    %406 = vmatprep.subr.mxu0 0.0
    %v407 = vand.u32 %v99, 4294901760
    %v408 = vsub.f32 %v99, %v407
    %v409 = vand.u32 %v408, 4294901760
    %v410 = vsub.f32 %v408, %v409
    %v411 = vand.u32 %v410, 4294901760
    %412 = vmatpush1.msra.mxu0 %v411
    %413 = vmatprep.subr.mxu0 0.0
    %v414 = vand.u32 %v100, 4294901760
    %v415 = vsub.f32 %v100, %v414
    %v416 = vand.u32 %v415, 4294901760
    %v417 = vsub.f32 %v415, %v416
    %v418 = vand.u32 %v417, 4294901760
    %419 = vmatpush1.msra.mxu0 %v418
    %420 = vmatprep.subr.mxu0 0.0
    %v421 = vand.u32 %v101, 4294901760
    %v422 = vsub.f32 %v101, %v421
    %v423 = vand.u32 %v422, 4294901760
    %v424 = vsub.f32 %v422, %v423
    %v425 = vand.u32 %v424, 4294901760
    %426 = vmatpush1.msra.mxu0 %v425
    %427 = vmatprep.subr.mxu0 0.0
    %v428 = vand.u32 %v102, 4294901760
    %v429 = vsub.f32 %v102, %v428
    %v430 = vand.u32 %v429, 4294901760
    %v431 = vsub.f32 %v429, %v430
    %v432 = vand.u32 %v431, 4294901760
    %433 = vmatpush1.msra.mxu0 %v432
    %434 = vmatprep.subr.mxu0 0.0
    %v435 = vand.u32 %v103, 4294901760
    %v436 = vsub.f32 %v103, %v435
    %v437 = vand.u32 %v436, 4294901760
    %v438 = vsub.f32 %v436, %v437
    %v439 = vand.u32 %v438, 4294901760
    %440 = vmatpush1.msra.mxu0 %v439
    %441 = vmatprep.subr.mxu0 0.0
    %v442 = vand.u32 %v104, 4294901760
    %v443 = vsub.f32 %v104, %v442
    %v444 = vand.u32 %v443, 4294901760
    %v445 = vsub.f32 %v443, %v444
    %v446 = vand.u32 %v445, 4294901760
    %447 = vmatpush1.msra.mxu0 %v446
    %448 = vmatprep.subr.mxu0 0.0
    %v449 = vand.u32 %v105, 4294901760
    %v450 = vsub.f32 %v105, %v449
    %v451 = vand.u32 %v450, 4294901760
    %v452 = vsub.f32 %v450, %v451
    %v453 = vand.u32 %v452, 4294901760
    %454 = vmatpush1.msra.mxu0 %v453
    %455 = vmatprep.subr.mxu0 0.0
    %v456 = vand.u32 %v106, 4294901760
    %v457 = vsub.f32 %v106, %v456
    %v458 = vand.u32 %v457, 4294901760
    %v459 = vsub.f32 %v457, %v458
    %v460 = vand.u32 %v459, 4294901760
    %461 = vmatpush1.msra.mxu0 %v460
    %462 = vmatprep.subr.mxu0 0.0
    %v463 = vand.u32 %v107, 4294901760
    %v464 = vsub.f32 %v107, %v463
    %v465 = vand.u32 %v464, 4294901760
    %v466 = vsub.f32 %v464, %v465
    %v467 = vand.u32 %v466, 4294901760
    %468 = vmatpush1.msra.mxu0 %v467
    %469 = vmatprep.subr.mxu0 0.0
    %v470 = vand.u32 %v108, 4294901760
    %v471 = vsub.f32 %v108, %v470
    %v472 = vand.u32 %v471, 4294901760
    %v473 = vsub.f32 %v471, %v472
    %v474 = vand.u32 %v473, 4294901760
    %475 = vmatpush1.msra.mxu0 %v474
    %476 = vmatprep.subr.mxu0 0.0
    %v477 = vand.u32 %v109, 4294901760
    %v478 = vsub.f32 %v109, %v477
    %v479 = vand.u32 %v478, 4294901760
    %v480 = vsub.f32 %v478, %v479
    %v481 = vand.u32 %v480, 4294901760
    %482 = vmatpush1.msra.mxu0 %v481
    %483 = vmatprep.subr.mxu0 0.0
    %v484 = vand.u32 %v110, 4294901760
    %v485 = vsub.f32 %v110, %v484
    %v486 = vand.u32 %v485, 4294901760
    %v487 = vsub.f32 %v485, %v486
    %v488 = vand.u32 %v487, 4294901760
    %489 = vmatpush1.msra.mxu0 %v488
    %490 = vmatprep.subr.mxu0 0.0
    %v491 = vand.u32 %v111, 4294901760
    %v492 = vsub.f32 %v111, %v491
    %v493 = vand.u32 %v492, 4294901760
    %v494 = vsub.f32 %v492, %v493
    %v495 = vand.u32 %v494, 4294901760
    %496 = vmatpush1.msra.mxu0 %v495
    %497 = vmatprep.subr.mxu0 0.0
    %v498 = vand.u32 %v112, 4294901760
    %v499 = vsub.f32 %v112, %v498
    %v500 = vand.u32 %v499, 4294901760
    %v501 = vsub.f32 %v499, %v500
    %v502 = vand.u32 %v501, 4294901760
    %503 = vmatpush1.msra.mxu0 %v502
    %504 = vmatprep.subr.mxu0 0.0
    %v505 = vand.u32 %v113, 4294901760
    %v506 = vsub.f32 %v113, %v505
    %v507 = vand.u32 %v506, 4294901760
    %v508 = vsub.f32 %v506, %v507
    %v509 = vand.u32 %v508, 4294901760
    %510 = vmatpush1.msra.mxu0 %v509
    %511 = vmatprep.subr.mxu0 0.0
    %v512 = vand.u32 %v114, 4294901760
    %v513 = vsub.f32 %v114, %v512
    %v514 = vand.u32 %v513, 4294901760
    %v515 = vsub.f32 %v513, %v514
    %v516 = vand.u32 %v515, 4294901760
    %517 = vmatpush1.msra.mxu0 %v516
    %518 = vmatprep.subr.mxu0 0.0
    %v519 = vand.u32 %v115, 4294901760
    %v520 = vsub.f32 %v115, %v519
    %v521 = vand.u32 %v520, 4294901760
    %v522 = vsub.f32 %v520, %v521
    %v523 = vand.u32 %v522, 4294901760
    %524 = vmatpush1.msra.mxu0 %v523
    %525 = vmatprep.subr.mxu0 0.0
    %v526 = vand.u32 %v116, 4294901760
    %v527 = vsub.f32 %v116, %v526
    %v528 = vand.u32 %v527, 4294901760
    %v529 = vsub.f32 %v527, %v528
    %v530 = vand.u32 %v529, 4294901760
    %531 = vmatpush1.msra.mxu0 %v530
    %532 = vmatprep.subr.mxu0 0.0
    %v533 = vand.u32 %v117, 4294901760
    %v534 = vsub.f32 %v117, %v533
    %v535 = vand.u32 %v534, 4294901760
    %v536 = vsub.f32 %v534, %v535
    %v537 = vand.u32 %v536, 4294901760
    %538 = vmatpush1.msra.mxu0 %v537
    %539 = vmatprep.subr.mxu0 0.0
    %v540 = vand.u32 %v118, 4294901760
    %v541 = vsub.f32 %v118, %v540
    %v542 = vand.u32 %v541, 4294901760
    %v543 = vsub.f32 %v541, %v542
    %v544 = vand.u32 %v543, 4294901760
    %545 = vmatpush1.msra.mxu0 %v544
    %546 = vmatprep.subr.mxu0 0.0
    %v547 = vand.u32 %v119, 4294901760
    %v548 = vsub.f32 %v119, %v547
    %v549 = vand.u32 %v548, 4294901760
    %v550 = vsub.f32 %v548, %v549
    %v551 = vand.u32 %v550, 4294901760
    %552 = vmatpush1.msra.mxu0 %v551
    %553 = vmatprep.subr.mxu0 0.0
    %v554 = vand.u32 %v120, 4294901760
    %v555 = vsub.f32 %v120, %v554
    %v556 = vand.u32 %v555, 4294901760
    %v557 = vsub.f32 %v555, %v556
    %v558 = vand.u32 %v557, 4294901760
    %559 = vmatpush1.msra.mxu0 %v558
    %560 = vmatprep.subr.mxu0 0.0
    %v561 = vand.u32 %v121, 4294901760
    %v562 = vsub.f32 %v121, %v561
    %v563 = vand.u32 %v562, 4294901760
    %v564 = vsub.f32 %v562, %v563
    %v565 = vand.u32 %v564, 4294901760
    %566 = vmatpush1.msra.mxu0 %v565
    %567 = vmatprep.subr.mxu0 0.0
    %v568 = vand.u32 %v122, 4294901760
    %v569 = vsub.f32 %v122, %v568
    %v570 = vand.u32 %v569, 4294901760
    %v571 = vsub.f32 %v569, %v570
    %v572 = vand.u32 %v571, 4294901760
    %573 = vmatpush1.msra.mxu0 %v572
    %v574 = vand.u32 %v76, 4294901760
    %575 = vmatprep.mubr.f32.mxu0 %v574
    %v576 = vand.u32 %v75, 4294901760
    %577 = vmatmul.mubr.f32.gmra.mrb[0].mxu0 %v576
    %v578 = vpop.f32.mrb[0].mxu0
    %v579 = vadd.f32 %v332, %v578
    %v580 = vpop.f32.mrb[0].mxu0
    %v581 = vand.u32 %v84, 4294901760
    %582 = vmatprep.mubr.f32.mxu0 %v581
    %v583 = vand.u32 %v83, 4294901760
    %584 = vmatmul.mubr.f32.gmra.mrb[0].mxu0 %v583
    %v585 = vpop.f32.mrb[0].mxu0
    %v586 = vadd.f32 %v347, %v585
    %v587 = vpop.f32.mrb[0].mxu0
    %588 = vdwg.mxu0
    %589 = vmatprep.subr.mxu0 0.0
    %v590 = vand.u32 %v91, 4294901760
    %v591 = vsub.f32 %v91, %v590
    %592 = vmatpush1.msra.mxu0 %v591
    %593 = vmatprep.subr.mxu0 0.0
    %v594 = vand.u32 %v92, 4294901760
    %v595 = vsub.f32 %v92, %v594
    %596 = vmatpush1.msra.mxu0 %v595
    %597 = vmatprep.subr.mxu0 0.0
    %v598 = vand.u32 %v93, 4294901760
    %v599 = vsub.f32 %v93, %v598
    %600 = vmatpush1.msra.mxu0 %v599
    %601 = vmatprep.subr.mxu0 0.0
    %v602 = vand.u32 %v94, 4294901760
    %v603 = vsub.f32 %v94, %v602
    %604 = vmatpush1.msra.mxu0 %v603
    %605 = vmatprep.subr.mxu0 0.0
    %v606 = vand.u32 %v95, 4294901760
    %v607 = vsub.f32 %v95, %v606
    %608 = vmatpush1.msra.mxu0 %v607
    %609 = vmatprep.subr.mxu0 0.0
    %v610 = vand.u32 %v96, 4294901760
    %v611 = vsub.f32 %v96, %v610
    %612 = vmatpush1.msra.mxu0 %v611
    %613 = vmatprep.subr.mxu0 0.0
    %v614 = vand.u32 %v97, 4294901760
    %v615 = vsub.f32 %v97, %v614
    %616 = vmatpush1.msra.mxu0 %v615
    %617 = vmatprep.subr.mxu0 0.0
    %v618 = vand.u32 %v98, 4294901760
    %v619 = vsub.f32 %v98, %v618
    %620 = vmatpush1.msra.mxu0 %v619
    %621 = vmatprep.subr.mxu0 0.0
    %v622 = vand.u32 %v99, 4294901760
    %v623 = vsub.f32 %v99, %v622
    %624 = vmatpush1.msra.mxu0 %v623
    %625 = vmatprep.subr.mxu0 0.0
    %v626 = vand.u32 %v100, 4294901760
    %v627 = vsub.f32 %v100, %v626
    %628 = vmatpush1.msra.mxu0 %v627
    %629 = vmatprep.subr.mxu0 0.0
    %v630 = vand.u32 %v101, 4294901760
    %v631 = vsub.f32 %v101, %v630
    %632 = vmatpush1.msra.mxu0 %v631
    %633 = vmatprep.subr.mxu0 0.0
    %v634 = vand.u32 %v102, 4294901760
    %v635 = vsub.f32 %v102, %v634
    %636 = vmatpush1.msra.mxu0 %v635
    %637 = vmatprep.subr.mxu0 0.0
    %v638 = vand.u32 %v103, 4294901760
    %v639 = vsub.f32 %v103, %v638
    %640 = vmatpush1.msra.mxu0 %v639
    %641 = vmatprep.subr.mxu0 0.0
    %v642 = vand.u32 %v104, 4294901760
    %v643 = vsub.f32 %v104, %v642
    %644 = vmatpush1.msra.mxu0 %v643
    %645 = vmatprep.subr.mxu0 0.0
    %v646 = vand.u32 %v105, 4294901760
    %v647 = vsub.f32 %v105, %v646
    %648 = vmatpush1.msra.mxu0 %v647
    %649 = vmatprep.subr.mxu0 0.0
    %v650 = vand.u32 %v106, 4294901760
    %v651 = vsub.f32 %v106, %v650
    %652 = vmatpush1.msra.mxu0 %v651
    %653 = vmatprep.subr.mxu0 0.0
    %v654 = vand.u32 %v107, 4294901760
    %v655 = vsub.f32 %v107, %v654
    %656 = vmatpush1.msra.mxu0 %v655
    %657 = vmatprep.subr.mxu0 0.0
    %v658 = vand.u32 %v108, 4294901760
    %v659 = vsub.f32 %v108, %v658
    %660 = vmatpush1.msra.mxu0 %v659
    %661 = vmatprep.subr.mxu0 0.0
    %v662 = vand.u32 %v109, 4294901760
    %v663 = vsub.f32 %v109, %v662
    %664 = vmatpush1.msra.mxu0 %v663
    %665 = vmatprep.subr.mxu0 0.0
    %v666 = vand.u32 %v110, 4294901760
    %v667 = vsub.f32 %v110, %v666
    %668 = vmatpush1.msra.mxu0 %v667
    %669 = vmatprep.subr.mxu0 0.0
    %v670 = vand.u32 %v111, 4294901760
    %v671 = vsub.f32 %v111, %v670
    %672 = vmatpush1.msra.mxu0 %v671
    %673 = vmatprep.subr.mxu0 0.0
    %v674 = vand.u32 %v112, 4294901760
    %v675 = vsub.f32 %v112, %v674
    %676 = vmatpush1.msra.mxu0 %v675
    %677 = vmatprep.subr.mxu0 0.0
    %v678 = vand.u32 %v113, 4294901760
    %v679 = vsub.f32 %v113, %v678
    %680 = vmatpush1.msra.mxu0 %v679
    %681 = vmatprep.subr.mxu0 0.0
    %v682 = vand.u32 %v114, 4294901760
    %v683 = vsub.f32 %v114, %v682
    %684 = vmatpush1.msra.mxu0 %v683
    %685 = vmatprep.subr.mxu0 0.0
    %v686 = vand.u32 %v115, 4294901760
    %v687 = vsub.f32 %v115, %v686
    %688 = vmatpush1.msra.mxu0 %v687
    %689 = vmatprep.subr.mxu0 0.0
    %v690 = vand.u32 %v116, 4294901760
    %v691 = vsub.f32 %v116, %v690
    %692 = vmatpush1.msra.mxu0 %v691
    %693 = vmatprep.subr.mxu0 0.0
    %v694 = vand.u32 %v117, 4294901760
    %v695 = vsub.f32 %v117, %v694
    %696 = vmatpush1.msra.mxu0 %v695
    %697 = vmatprep.subr.mxu0 0.0
    %v698 = vand.u32 %v118, 4294901760
    %v699 = vsub.f32 %v118, %v698
    %700 = vmatpush1.msra.mxu0 %v699
    %701 = vmatprep.subr.mxu0 0.0
    %v702 = vand.u32 %v119, 4294901760
    %v703 = vsub.f32 %v119, %v702
    %704 = vmatpush1.msra.mxu0 %v703
    %705 = vmatprep.subr.mxu0 0.0
    %v706 = vand.u32 %v120, 4294901760
    %v707 = vsub.f32 %v120, %v706
    %708 = vmatpush1.msra.mxu0 %v707
    %709 = vmatprep.subr.mxu0 0.0
    %v710 = vand.u32 %v121, 4294901760
    %v711 = vsub.f32 %v121, %v710
    %712 = vmatpush1.msra.mxu0 %v711
    %713 = vmatprep.subr.mxu0 0.0
    %v714 = vand.u32 %v122, 4294901760
    %v715 = vsub.f32 %v122, %v714
    %716 = vmatpush1.msra.mxu0 %v715
    %v717 = vand.u32 %v76, 4294901760
    %v718 = vsub.f32 %v76, %v717
    %719 = vmatprep.mubr.f32.mxu0 %v718
    %v720 = vand.u32 %v75, 4294901760
    %v721 = vsub.f32 %v75, %v720
    %722 = vmatmul.mubr.f32.gmra.mrb[0].mxu0 %v721
    %v723 = vpop.f32.mrb[0].mxu0
    %v724 = vadd.f32 %v579, %v723
    %v725 = vpop.f32.mrb[0].mxu0
    %v726 = vand.u32 %v84, 4294901760
    %v727 = vsub.f32 %v84, %v726
    %728 = vmatprep.mubr.f32.mxu0 %v727
    %v729 = vand.u32 %v83, 4294901760
    %v730 = vsub.f32 %v83, %v729
    %731 = vmatmul.mubr.f32.gmra.mrb[0].mxu0 %v730
    %v732 = vpop.f32.mrb[0].mxu0
    %v733 = vadd.f32 %v586, %v732
    %v734 = vpop.f32.mrb[0].mxu0
    %735 = vdwg.mxu0
    %736 = vmatprep.subr.mxu0 0.0
    %v737 = vand.u32 %v91, 4294901760
    %738 = vmatpush1.msra.mxu0 %v737
    %739 = vmatprep.subr.mxu0 0.0
    %v740 = vand.u32 %v92, 4294901760
    %741 = vmatpush1.msra.mxu0 %v740
    %742 = vmatprep.subr.mxu0 0.0
    %v743 = vand.u32 %v93, 4294901760
    %744 = vmatpush1.msra.mxu0 %v743
    %745 = vmatprep.subr.mxu0 0.0
    %v746 = vand.u32 %v94, 4294901760
    %747 = vmatpush1.msra.mxu0 %v746
    %748 = vmatprep.subr.mxu0 0.0
    %v749 = vand.u32 %v95, 4294901760
    %750 = vmatpush1.msra.mxu0 %v749
    %751 = vmatprep.subr.mxu0 0.0
    %v752 = vand.u32 %v96, 4294901760
    %753 = vmatpush1.msra.mxu0 %v752
    %754 = vmatprep.subr.mxu0 0.0
    %v755 = vand.u32 %v97, 4294901760
    %756 = vmatpush1.msra.mxu0 %v755
    %757 = vmatprep.subr.mxu0 0.0
    %v758 = vand.u32 %v98, 4294901760
    %759 = vmatpush1.msra.mxu0 %v758
    %760 = vmatprep.subr.mxu0 0.0
    %v761 = vand.u32 %v99, 4294901760
    %762 = vmatpush1.msra.mxu0 %v761
    %763 = vmatprep.subr.mxu0 0.0
    %v764 = vand.u32 %v100, 4294901760
    %765 = vmatpush1.msra.mxu0 %v764
    %766 = vmatprep.subr.mxu0 0.0
    %v767 = vand.u32 %v101, 4294901760
    %768 = vmatpush1.msra.mxu0 %v767
    %769 = vmatprep.subr.mxu0 0.0
    %v770 = vand.u32 %v102, 4294901760
    %771 = vmatpush1.msra.mxu0 %v770
    %772 = vmatprep.subr.mxu0 0.0
    %v773 = vand.u32 %v103, 4294901760
    %774 = vmatpush1.msra.mxu0 %v773
    %775 = vmatprep.subr.mxu0 0.0
    %v776 = vand.u32 %v104, 4294901760
    %777 = vmatpush1.msra.mxu0 %v776
    %778 = vmatprep.subr.mxu0 0.0
    %v779 = vand.u32 %v105, 4294901760
    %780 = vmatpush1.msra.mxu0 %v779
    %781 = vmatprep.subr.mxu0 0.0
    %v782 = vand.u32 %v106, 4294901760
    %783 = vmatpush1.msra.mxu0 %v782
    %784 = vmatprep.subr.mxu0 0.0
    %v785 = vand.u32 %v107, 4294901760
    %786 = vmatpush1.msra.mxu0 %v785
    %787 = vmatprep.subr.mxu0 0.0
    %v788 = vand.u32 %v108, 4294901760
    %789 = vmatpush1.msra.mxu0 %v788
    %790 = vmatprep.subr.mxu0 0.0
    %v791 = vand.u32 %v109, 4294901760
    %792 = vmatpush1.msra.mxu0 %v791
    %793 = vmatprep.subr.mxu0 0.0
    %v794 = vand.u32 %v110, 4294901760
    %795 = vmatpush1.msra.mxu0 %v794
    %796 = vmatprep.subr.mxu0 0.0
    %v797 = vand.u32 %v111, 4294901760
    %798 = vmatpush1.msra.mxu0 %v797
    %799 = vmatprep.subr.mxu0 0.0
    %v800 = vand.u32 %v112, 4294901760
    %801 = vmatpush1.msra.mxu0 %v800
    %802 = vmatprep.subr.mxu0 0.0
    %v803 = vand.u32 %v113, 4294901760
    %804 = vmatpush1.msra.mxu0 %v803
    %805 = vmatprep.subr.mxu0 0.0
    %v806 = vand.u32 %v114, 4294901760
    %807 = vmatpush1.msra.mxu0 %v806
    %808 = vmatprep.subr.mxu0 0.0
    %v809 = vand.u32 %v115, 4294901760
    %810 = vmatpush1.msra.mxu0 %v809
    %811 = vmatprep.subr.mxu0 0.0
    %v812 = vand.u32 %v116, 4294901760
    %813 = vmatpush1.msra.mxu0 %v812
    %814 = vmatprep.subr.mxu0 0.0
    %v815 = vand.u32 %v117, 4294901760
    %816 = vmatpush1.msra.mxu0 %v815
    %817 = vmatprep.subr.mxu0 0.0
    %v818 = vand.u32 %v118, 4294901760
    %819 = vmatpush1.msra.mxu0 %v818
    %820 = vmatprep.subr.mxu0 0.0
    %v821 = vand.u32 %v119, 4294901760
    %822 = vmatpush1.msra.mxu0 %v821
    %823 = vmatprep.subr.mxu0 0.0
    %v824 = vand.u32 %v120, 4294901760
    %825 = vmatpush1.msra.mxu0 %v824
    %826 = vmatprep.subr.mxu0 0.0
    %v827 = vand.u32 %v121, 4294901760
    %828 = vmatpush1.msra.mxu0 %v827
    %829 = vmatprep.subr.mxu0 0.0
    %v830 = vand.u32 %v122, 4294901760
    %831 = vmatpush1.msra.mxu0 %v830
    %v832 = vand.u32 %v76, 4294901760
    %v833 = vsub.f32 %v76, %v832
    %v834 = vand.u32 %v833, 4294901760
    %835 = vmatprep.mubr.f32.mxu0 %v834
    %v836 = vand.u32 %v75, 4294901760
    %v837 = vsub.f32 %v75, %v836
    %v838 = vand.u32 %v837, 4294901760
    %839 = vmatmul.mubr.f32.gmra.mrb[0].mxu0 %v838
    %v840 = vpop.f32.mrb[0].mxu0
    %v841 = vadd.f32 %v724, %v840
    %v842 = vpop.f32.mrb[0].mxu0
    %v843 = vand.u32 %v84, 4294901760
    %v844 = vsub.f32 %v84, %v843
    %v845 = vand.u32 %v844, 4294901760
    %846 = vmatprep.mubr.f32.mxu0 %v845
    %v847 = vand.u32 %v83, 4294901760
    %v848 = vsub.f32 %v83, %v847
    %v849 = vand.u32 %v848, 4294901760
    %850 = vmatmul.mubr.f32.gmra.mrb[0].mxu0 %v849
    %v851 = vpop.f32.mrb[0].mxu0
    %v852 = vadd.f32 %v733, %v851
    %v853 = vpop.f32.mrb[0].mxu0
    %854 = vdwg.mxu0
    %855 = vmatprep.subr.mxu0 0.0
    %v856 = vand.u32 %v91, 4294901760
    %v857 = vsub.f32 %v91, %v856
    %v858 = vand.u32 %v857, 4294901760
    %859 = vmatpush1.msra.mxu0 %v858
    %860 = vmatprep.subr.mxu0 0.0
    %v861 = vand.u32 %v92, 4294901760
    %v862 = vsub.f32 %v92, %v861
    %v863 = vand.u32 %v862, 4294901760
    %864 = vmatpush1.msra.mxu0 %v863
    %865 = vmatprep.subr.mxu0 0.0
    %v866 = vand.u32 %v93, 4294901760
    %v867 = vsub.f32 %v93, %v866
    %v868 = vand.u32 %v867, 4294901760
    %869 = vmatpush1.msra.mxu0 %v868
    %870 = vmatprep.subr.mxu0 0.0
    %v871 = vand.u32 %v94, 4294901760
    %v872 = vsub.f32 %v94, %v871
    %v873 = vand.u32 %v872, 4294901760
    %874 = vmatpush1.msra.mxu0 %v873
    %875 = vmatprep.subr.mxu0 0.0
    %v876 = vand.u32 %v95, 4294901760
    %v877 = vsub.f32 %v95, %v876
    %v878 = vand.u32 %v877, 4294901760
    %879 = vmatpush1.msra.mxu0 %v878
    %880 = vmatprep.subr.mxu0 0.0
    %v881 = vand.u32 %v96, 4294901760
    %v882 = vsub.f32 %v96, %v881
    %v883 = vand.u32 %v882, 4294901760
    %884 = vmatpush1.msra.mxu0 %v883
    %885 = vmatprep.subr.mxu0 0.0
    %v886 = vand.u32 %v97, 4294901760
    %v887 = vsub.f32 %v97, %v886
    %v888 = vand.u32 %v887, 4294901760
    %889 = vmatpush1.msra.mxu0 %v888
    %890 = vmatprep.subr.mxu0 0.0
    %v891 = vand.u32 %v98, 4294901760
    %v892 = vsub.f32 %v98, %v891
    %v893 = vand.u32 %v892, 4294901760
    %894 = vmatpush1.msra.mxu0 %v893
    %895 = vmatprep.subr.mxu0 0.0
    %v896 = vand.u32 %v99, 4294901760
    %v897 = vsub.f32 %v99, %v896
    %v898 = vand.u32 %v897, 4294901760
    %899 = vmatpush1.msra.mxu0 %v898
    %900 = vmatprep.subr.mxu0 0.0
    %v901 = vand.u32 %v100, 4294901760
    %v902 = vsub.f32 %v100, %v901
    %v903 = vand.u32 %v902, 4294901760
    %904 = vmatpush1.msra.mxu0 %v903
    %905 = vmatprep.subr.mxu0 0.0
    %v906 = vand.u32 %v101, 4294901760
    %v907 = vsub.f32 %v101, %v906
    %v908 = vand.u32 %v907, 4294901760
    %909 = vmatpush1.msra.mxu0 %v908
    %910 = vmatprep.subr.mxu0 0.0
    %v911 = vand.u32 %v102, 4294901760
    %v912 = vsub.f32 %v102, %v911
    %v913 = vand.u32 %v912, 4294901760
    %914 = vmatpush1.msra.mxu0 %v913
    %915 = vmatprep.subr.mxu0 0.0
    %v916 = vand.u32 %v103, 4294901760
    %v917 = vsub.f32 %v103, %v916
    %v918 = vand.u32 %v917, 4294901760
    %919 = vmatpush1.msra.mxu0 %v918
    %920 = vmatprep.subr.mxu0 0.0
    %v921 = vand.u32 %v104, 4294901760
    %v922 = vsub.f32 %v104, %v921
    %v923 = vand.u32 %v922, 4294901760
    %924 = vmatpush1.msra.mxu0 %v923
    %925 = vmatprep.subr.mxu0 0.0
    %v926 = vand.u32 %v105, 4294901760
    %v927 = vsub.f32 %v105, %v926
    %v928 = vand.u32 %v927, 4294901760
    %929 = vmatpush1.msra.mxu0 %v928
    %930 = vmatprep.subr.mxu0 0.0
    %v931 = vand.u32 %v106, 4294901760
    %v932 = vsub.f32 %v106, %v931
    %v933 = vand.u32 %v932, 4294901760
    %934 = vmatpush1.msra.mxu0 %v933
    %935 = vmatprep.subr.mxu0 0.0
    %v936 = vand.u32 %v107, 4294901760
    %v937 = vsub.f32 %v107, %v936
    %v938 = vand.u32 %v937, 4294901760
    %939 = vmatpush1.msra.mxu0 %v938
    %940 = vmatprep.subr.mxu0 0.0
    %v941 = vand.u32 %v108, 4294901760
    %v942 = vsub.f32 %v108, %v941
    %v943 = vand.u32 %v942, 4294901760
    %944 = vmatpush1.msra.mxu0 %v943
    %945 = vmatprep.subr.mxu0 0.0
    %v946 = vand.u32 %v109, 4294901760
    %v947 = vsub.f32 %v109, %v946
    %v948 = vand.u32 %v947, 4294901760
    %949 = vmatpush1.msra.mxu0 %v948
    %950 = vmatprep.subr.mxu0 0.0
    %v951 = vand.u32 %v110, 4294901760
    %v952 = vsub.f32 %v110, %v951
    %v953 = vand.u32 %v952, 4294901760
    %954 = vmatpush1.msra.mxu0 %v953
    %955 = vmatprep.subr.mxu0 0.0
    %v956 = vand.u32 %v111, 4294901760
    %v957 = vsub.f32 %v111, %v956
    %v958 = vand.u32 %v957, 4294901760
    %959 = vmatpush1.msra.mxu0 %v958
    %960 = vmatprep.subr.mxu0 0.0
    %v961 = vand.u32 %v112, 4294901760
    %v962 = vsub.f32 %v112, %v961
    %v963 = vand.u32 %v962, 4294901760
    %964 = vmatpush1.msra.mxu0 %v963
    %965 = vmatprep.subr.mxu0 0.0
    %v966 = vand.u32 %v113, 4294901760
    %v967 = vsub.f32 %v113, %v966
    %v968 = vand.u32 %v967, 4294901760
    %969 = vmatpush1.msra.mxu0 %v968
    %970 = vmatprep.subr.mxu0 0.0
    %v971 = vand.u32 %v114, 4294901760
    %v972 = vsub.f32 %v114, %v971
    %v973 = vand.u32 %v972, 4294901760
    %974 = vmatpush1.msra.mxu0 %v973
    %975 = vmatprep.subr.mxu0 0.0
    %v976 = vand.u32 %v115, 4294901760
    %v977 = vsub.f32 %v115, %v976
    %v978 = vand.u32 %v977, 4294901760
    %979 = vmatpush1.msra.mxu0 %v978
    %980 = vmatprep.subr.mxu0 0.0
    %v981 = vand.u32 %v116, 4294901760
    %v982 = vsub.f32 %v116, %v981
    %v983 = vand.u32 %v982, 4294901760
    %984 = vmatpush1.msra.mxu0 %v983
    %985 = vmatprep.subr.mxu0 0.0
    %v986 = vand.u32 %v117, 4294901760
    %v987 = vsub.f32 %v117, %v986
    %v988 = vand.u32 %v987, 4294901760
    %989 = vmatpush1.msra.mxu0 %v988
    %990 = vmatprep.subr.mxu0 0.0
    %v991 = vand.u32 %v118, 4294901760
    %v992 = vsub.f32 %v118, %v991
    %v993 = vand.u32 %v992, 4294901760
    %994 = vmatpush1.msra.mxu0 %v993
    %995 = vmatprep.subr.mxu0 0.0
    %v996 = vand.u32 %v119, 4294901760
    %v997 = vsub.f32 %v119, %v996
    %v998 = vand.u32 %v997, 4294901760
    %999 = vmatpush1.msra.mxu0 %v998
    %1000 = vmatprep.subr.mxu0 0.0
    %v1001 = vand.u32 %v120, 4294901760
    %v1002 = vsub.f32 %v120, %v1001
    %v1003 = vand.u32 %v1002, 4294901760
    %1004 = vmatpush1.msra.mxu0 %v1003
    %1005 = vmatprep.subr.mxu0 0.0
    %v1006 = vand.u32 %v121, 4294901760
    %v1007 = vsub.f32 %v121, %v1006
    %v1008 = vand.u32 %v1007, 4294901760
    %1009 = vmatpush1.msra.mxu0 %v1008
    %1010 = vmatprep.subr.mxu0 0.0
    %v1011 = vand.u32 %v122, 4294901760
    %v1012 = vsub.f32 %v122, %v1011
    %v1013 = vand.u32 %v1012, 4294901760
    %1014 = vmatpush1.msra.mxu0 %v1013
    %v1015 = vand.u32 %v76, 4294901760
    %1016 = vmatprep.mubr.f32.mxu0 %v1015
    %v1017 = vand.u32 %v75, 4294901760
    %1018 = vmatmul.mubr.f32.gmra.mrb[0].mxu0 %v1017
    %v1019 = vpop.f32.mrb[0].mxu0
    %v1020 = vadd.f32 %v841, %v1019
    %v1021 = vpop.f32.mrb[0].mxu0
    %v1022 = vand.u32 %v84, 4294901760
    %1023 = vmatprep.mubr.f32.mxu0 %v1022
    %v1024 = vand.u32 %v83, 4294901760
    %1025 = vmatmul.mubr.f32.gmra.mrb[0].mxu0 %v1024
    %v1026 = vpop.f32.mrb[0].mxu0
    %v1027 = vadd.f32 %v852, %v1026
    %v1028 = vpop.f32.mrb[0].mxu0
    %1029 = vdwg.mxu0
    %1030 = vmatprep.subr.mxu0 0.0
    %v1031 = vand.u32 %v91, 4294901760
    %1032 = vmatpush1.msra.mxu0 %v1031
    %1033 = vmatprep.subr.mxu0 0.0
    %v1034 = vand.u32 %v92, 4294901760
    %1035 = vmatpush1.msra.mxu0 %v1034
    %1036 = vmatprep.subr.mxu0 0.0
    %v1037 = vand.u32 %v93, 4294901760
    %1038 = vmatpush1.msra.mxu0 %v1037
    %1039 = vmatprep.subr.mxu0 0.0
    %v1040 = vand.u32 %v94, 4294901760
    %1041 = vmatpush1.msra.mxu0 %v1040
    %1042 = vmatprep.subr.mxu0 0.0
    %v1043 = vand.u32 %v95, 4294901760
    %1044 = vmatpush1.msra.mxu0 %v1043
    %1045 = vmatprep.subr.mxu0 0.0
    %v1046 = vand.u32 %v96, 4294901760
    %1047 = vmatpush1.msra.mxu0 %v1046
    %1048 = vmatprep.subr.mxu0 0.0
    %v1049 = vand.u32 %v97, 4294901760
    %1050 = vmatpush1.msra.mxu0 %v1049
    %1051 = vmatprep.subr.mxu0 0.0
    %v1052 = vand.u32 %v98, 4294901760
    %1053 = vmatpush1.msra.mxu0 %v1052
    %1054 = vmatprep.subr.mxu0 0.0
    %v1055 = vand.u32 %v99, 4294901760
    %1056 = vmatpush1.msra.mxu0 %v1055
    %1057 = vmatprep.subr.mxu0 0.0
    %v1058 = vand.u32 %v100, 4294901760
    %1059 = vmatpush1.msra.mxu0 %v1058
    %1060 = vmatprep.subr.mxu0 0.0
    %v1061 = vand.u32 %v101, 4294901760
    %1062 = vmatpush1.msra.mxu0 %v1061
    %1063 = vmatprep.subr.mxu0 0.0
    %v1064 = vand.u32 %v102, 4294901760
    %1065 = vmatpush1.msra.mxu0 %v1064
    %1066 = vmatprep.subr.mxu0 0.0
    %v1067 = vand.u32 %v103, 4294901760
    %1068 = vmatpush1.msra.mxu0 %v1067
    %1069 = vmatprep.subr.mxu0 0.0
    %v1070 = vand.u32 %v104, 4294901760
    %1071 = vmatpush1.msra.mxu0 %v1070
    %1072 = vmatprep.subr.mxu0 0.0
    %v1073 = vand.u32 %v105, 4294901760
    %1074 = vmatpush1.msra.mxu0 %v1073
    %1075 = vmatprep.subr.mxu0 0.0
    %v1076 = vand.u32 %v106, 4294901760
    %1077 = vmatpush1.msra.mxu0 %v1076
    %1078 = vmatprep.subr.mxu0 0.0
    %v1079 = vand.u32 %v107, 4294901760
    %1080 = vmatpush1.msra.mxu0 %v1079
    %1081 = vmatprep.subr.mxu0 0.0
    %v1082 = vand.u32 %v108, 4294901760
    %1083 = vmatpush1.msra.mxu0 %v1082
    %1084 = vmatprep.subr.mxu0 0.0
    %v1085 = vand.u32 %v109, 4294901760
    %1086 = vmatpush1.msra.mxu0 %v1085
    %1087 = vmatprep.subr.mxu0 0.0
    %v1088 = vand.u32 %v110, 4294901760
    %1089 = vmatpush1.msra.mxu0 %v1088
    %1090 = vmatprep.subr.mxu0 0.0
    %v1091 = vand.u32 %v111, 4294901760
    %1092 = vmatpush1.msra.mxu0 %v1091
    %1093 = vmatprep.subr.mxu0 0.0
    %v1094 = vand.u32 %v112, 4294901760
    %1095 = vmatpush1.msra.mxu0 %v1094
    %1096 = vmatprep.subr.mxu0 0.0
    %v1097 = vand.u32 %v113, 4294901760
    %1098 = vmatpush1.msra.mxu0 %v1097
    %1099 = vmatprep.subr.mxu0 0.0
    %v1100 = vand.u32 %v114, 4294901760
    %1101 = vmatpush1.msra.mxu0 %v1100
    %1102 = vmatprep.subr.mxu0 0.0
    %v1103 = vand.u32 %v115, 4294901760
    %1104 = vmatpush1.msra.mxu0 %v1103
    %1105 = vmatprep.subr.mxu0 0.0
    %v1106 = vand.u32 %v116, 4294901760
    %1107 = vmatpush1.msra.mxu0 %v1106
    %1108 = vmatprep.subr.mxu0 0.0
    %v1109 = vand.u32 %v117, 4294901760
    %1110 = vmatpush1.msra.mxu0 %v1109
    %1111 = vmatprep.subr.mxu0 0.0
    %v1112 = vand.u32 %v118, 4294901760
    %1113 = vmatpush1.msra.mxu0 %v1112
    %1114 = vmatprep.subr.mxu0 0.0
    %v1115 = vand.u32 %v119, 4294901760
    %1116 = vmatpush1.msra.mxu0 %v1115
    %1117 = vmatprep.subr.mxu0 0.0
    %v1118 = vand.u32 %v120, 4294901760
    %1119 = vmatpush1.msra.mxu0 %v1118
    %1120 = vmatprep.subr.mxu0 0.0
    %v1121 = vand.u32 %v121, 4294901760
    %1122 = vmatpush1.msra.mxu0 %v1121
    %1123 = vmatprep.subr.mxu0 0.0
    %v1124 = vand.u32 %v122, 4294901760
    %1125 = vmatpush1.msra.mxu0 %v1124
    %v1126 = vand.u32 %v76, 4294901760
    %1127 = vmatprep.mubr.f32.mxu0 %v1126
    %v1128 = vand.u32 %v75, 4294901760
    %1129 = vmatmul.mubr.f32.gmra.mrb[0].mxu0 %v1128
    %v1130 = vpop.f32.mrb[0].mxu0
    %v1131 = vadd.f32 %v1020, %v1130
    %v1132 = vpop.f32.mrb[0].mxu0
    %v1133 = vand.u32 %v84, 4294901760
    %1134 = vmatprep.mubr.f32.mxu0 %v1133
    %v1135 = vand.u32 %v83, 4294901760
    %1136 = vmatmul.mubr.f32.gmra.mrb[0].mxu0 %v1135
    %v1137 = vpop.f32.mrb[0].mxu0
    %v1138 = vadd.f32 %v1027, %v1137
    %v1139 = vpop.f32.mrb[0].mxu0
    %1140 = vdwg.mxu0
    %1141 = vmatprep.subr.mxu0 0.0
    %v1142 = vand.u32 %v123, 4294901760
    %1143 = vmatpush1.msra.mxu0 %v1142
    %1144 = vmatprep.subr.mxu0 0.0
    %v1145 = vand.u32 %v124, 4294901760
    %1146 = vmatpush1.msra.mxu0 %v1145
    %1147 = vmatprep.subr.mxu0 0.0
    %v1148 = vand.u32 %v125, 4294901760
    %1149 = vmatpush1.msra.mxu0 %v1148
    %1150 = vmatprep.subr.mxu0 0.0
    %v1151 = vand.u32 %v126, 4294901760
    %1152 = vmatpush1.msra.mxu0 %v1151
    %1153 = vmatprep.subr.mxu0 0.0
    %v1154 = vand.u32 %v127, 4294901760
    %1155 = vmatpush1.msra.mxu0 %v1154
    %1156 = vmatprep.subr.mxu0 0.0
    %v1157 = vand.u32 %v128, 4294901760
    %1158 = vmatpush1.msra.mxu0 %v1157
    %1159 = vmatprep.subr.mxu0 0.0
    %v1160 = vand.u32 %v129, 4294901760
    %1161 = vmatpush1.msra.mxu0 %v1160
    %1162 = vmatprep.subr.mxu0 0.0
    %v1163 = vand.u32 %v130, 4294901760
    %1164 = vmatpush1.msra.mxu0 %v1163
    %1165 = vmatprep.subr.mxu0 0.0
    %v1166 = vand.u32 %v131, 4294901760
    %1167 = vmatpush1.msra.mxu0 %v1166
    %1168 = vmatprep.subr.mxu0 0.0
    %v1169 = vand.u32 %v132, 4294901760
    %1170 = vmatpush1.msra.mxu0 %v1169
    %1171 = vmatprep.subr.mxu0 0.0
    %v1172 = vand.u32 %v133, 4294901760
    %1173 = vmatpush1.msra.mxu0 %v1172
    %1174 = vmatprep.subr.mxu0 0.0
    %v1175 = vand.u32 %v134, 4294901760
    %1176 = vmatpush1.msra.mxu0 %v1175
    %1177 = vmatprep.subr.mxu0 0.0
    %v1178 = vand.u32 %v135, 4294901760
    %1179 = vmatpush1.msra.mxu0 %v1178
    %1180 = vmatprep.subr.mxu0 0.0
    %v1181 = vand.u32 %v136, 4294901760
    %1182 = vmatpush1.msra.mxu0 %v1181
    %1183 = vmatprep.subr.mxu0 0.0
    %v1184 = vand.u32 %v137, 4294901760
    %1185 = vmatpush1.msra.mxu0 %v1184
    %1186 = vmatprep.subr.mxu0 0.0
    %v1187 = vand.u32 %v138, 4294901760
    %1188 = vmatpush1.msra.mxu0 %v1187
    %1189 = vmatprep.subr.mxu0 0.0
    %v1190 = vand.u32 %v139, 4294901760
    %1191 = vmatpush1.msra.mxu0 %v1190
    %1192 = vmatprep.subr.mxu0 0.0
    %v1193 = vand.u32 %v140, 4294901760
    %1194 = vmatpush1.msra.mxu0 %v1193
    %1195 = vmatprep.subr.mxu0 0.0
    %v1196 = vand.u32 %v141, 4294901760
    %1197 = vmatpush1.msra.mxu0 %v1196
    %1198 = vmatprep.subr.mxu0 0.0
    %v1199 = vand.u32 %v142, 4294901760
    %1200 = vmatpush1.msra.mxu0 %v1199
    %1201 = vmatprep.subr.mxu0 0.0
    %v1202 = vand.u32 %v143, 4294901760
    %1203 = vmatpush1.msra.mxu0 %v1202
    %1204 = vmatprep.subr.mxu0 0.0
    %v1205 = vand.u32 %v144, 4294901760
    %1206 = vmatpush1.msra.mxu0 %v1205
    %1207 = vmatprep.subr.mxu0 0.0
    %v1208 = vand.u32 %v145, 4294901760
    %1209 = vmatpush1.msra.mxu0 %v1208
    %1210 = vmatprep.subr.mxu0 0.0
    %v1211 = vand.u32 %v146, 4294901760
    %1212 = vmatpush1.msra.mxu0 %v1211
    %1213 = vmatprep.subr.mxu0 0.0
    %v1214 = vand.u32 %v147, 4294901760
    %1215 = vmatpush1.msra.mxu0 %v1214
    %1216 = vmatprep.subr.mxu0 0.0
    %v1217 = vand.u32 %v148, 4294901760
    %1218 = vmatpush1.msra.mxu0 %v1217
    %1219 = vmatprep.subr.mxu0 0.0
    %v1220 = vand.u32 %v149, 4294901760
    %1221 = vmatpush1.msra.mxu0 %v1220
    %1222 = vmatprep.subr.mxu0 0.0
    %v1223 = vand.u32 %v150, 4294901760
    %1224 = vmatpush1.msra.mxu0 %v1223
    %1225 = vmatprep.subr.mxu0 0.0
    %v1226 = vand.u32 %v151, 4294901760
    %1227 = vmatpush1.msra.mxu0 %v1226
    %1228 = vmatprep.subr.mxu0 0.0
    %v1229 = vand.u32 %v152, 4294901760
    %1230 = vmatpush1.msra.mxu0 %v1229
    %1231 = vmatprep.subr.mxu0 0.0
    %v1232 = vand.u32 %v153, 4294901760
    %1233 = vmatpush1.msra.mxu0 %v1232
    %1234 = vmatprep.subr.mxu0 0.0
    %v1235 = vand.u32 %v154, 4294901760
    %1236 = vmatpush1.msra.mxu0 %v1235
    %v1237 = vand.u32 %v78, 4294901760
    %v1238 = vsub.f32 %v78, %v1237
    %v1239 = vand.u32 %v1238, 4294901760
    %v1240 = vsub.f32 %v1238, %v1239
    %v1241 = vand.u32 %v1240, 4294901760
    %1242 = vmatprep.mubr.f32.mxu0 %v1241
    %v1243 = vand.u32 %v77, 4294901760
    %v1244 = vsub.f32 %v77, %v1243
    %v1245 = vand.u32 %v1244, 4294901760
    %v1246 = vsub.f32 %v1244, %v1245
    %v1247 = vand.u32 %v1246, 4294901760
    %1248 = vmatmul.mubr.f32.gmra.mrb[0].mxu0 %v1247
    %v1249 = vpop.f32.mrb[0].mxu0
    %v1250 = vadd.f32 %v1131, %v1249
    %v1251 = vpop.f32.mrb[0].mxu0
    %v1252 = vand.u32 %v86, 4294901760
    %v1253 = vsub.f32 %v86, %v1252
    %v1254 = vand.u32 %v1253, 4294901760
    %v1255 = vsub.f32 %v1253, %v1254
    %v1256 = vand.u32 %v1255, 4294901760
    %1257 = vmatprep.mubr.f32.mxu0 %v1256
    %v1258 = vand.u32 %v85, 4294901760
    %v1259 = vsub.f32 %v85, %v1258
    %v1260 = vand.u32 %v1259, 4294901760
    %v1261 = vsub.f32 %v1259, %v1260
    %v1262 = vand.u32 %v1261, 4294901760
    %1263 = vmatmul.mubr.f32.gmra.mrb[0].mxu0 %v1262
    %v1264 = vpop.f32.mrb[0].mxu0
    %v1265 = vadd.f32 %v1138, %v1264
    %v1266 = vpop.f32.mrb[0].mxu0
    %1267 = vdwg.mxu0
    %1268 = vmatprep.subr.mxu0 0.0
    %v1269 = vand.u32 %v123, 4294901760
    %v1270 = vsub.f32 %v123, %v1269
    %v1271 = vand.u32 %v1270, 4294901760
    %v1272 = vsub.f32 %v1270, %v1271
    %v1273 = vand.u32 %v1272, 4294901760
    %1274 = vmatpush1.msra.mxu0 %v1273
    %1275 = vmatprep.subr.mxu0 0.0
    %v1276 = vand.u32 %v124, 4294901760
    %v1277 = vsub.f32 %v124, %v1276
    %v1278 = vand.u32 %v1277, 4294901760
    %v1279 = vsub.f32 %v1277, %v1278
    %v1280 = vand.u32 %v1279, 4294901760
    %1281 = vmatpush1.msra.mxu0 %v1280
    %1282 = vmatprep.subr.mxu0 0.0
    %v1283 = vand.u32 %v125, 4294901760
    %v1284 = vsub.f32 %v125, %v1283
    %v1285 = vand.u32 %v1284, 4294901760
    %v1286 = vsub.f32 %v1284, %v1285
    %v1287 = vand.u32 %v1286, 4294901760
    %1288 = vmatpush1.msra.mxu0 %v1287
    %1289 = vmatprep.subr.mxu0 0.0
    %v1290 = vand.u32 %v126, 4294901760
    %v1291 = vsub.f32 %v126, %v1290
    %v1292 = vand.u32 %v1291, 4294901760
    %v1293 = vsub.f32 %v1291, %v1292
    %v1294 = vand.u32 %v1293, 4294901760
    %1295 = vmatpush1.msra.mxu0 %v1294
    %1296 = vmatprep.subr.mxu0 0.0
    %v1297 = vand.u32 %v127, 4294901760
    %v1298 = vsub.f32 %v127, %v1297
    %v1299 = vand.u32 %v1298, 4294901760
    %v1300 = vsub.f32 %v1298, %v1299
    %v1301 = vand.u32 %v1300, 4294901760
    %1302 = vmatpush1.msra.mxu0 %v1301
    %1303 = vmatprep.subr.mxu0 0.0
    %v1304 = vand.u32 %v128, 4294901760
    %v1305 = vsub.f32 %v128, %v1304
    %v1306 = vand.u32 %v1305, 4294901760
    %v1307 = vsub.f32 %v1305, %v1306
    %v1308 = vand.u32 %v1307, 4294901760
    %1309 = vmatpush1.msra.mxu0 %v1308
    %1310 = vmatprep.subr.mxu0 0.0
    %v1311 = vand.u32 %v129, 4294901760
    %v1312 = vsub.f32 %v129, %v1311
    %v1313 = vand.u32 %v1312, 4294901760
    %v1314 = vsub.f32 %v1312, %v1313
    %v1315 = vand.u32 %v1314, 4294901760
    %1316 = vmatpush1.msra.mxu0 %v1315
    %1317 = vmatprep.subr.mxu0 0.0
    %v1318 = vand.u32 %v130, 4294901760
    %v1319 = vsub.f32 %v130, %v1318
    %v1320 = vand.u32 %v1319, 4294901760
    %v1321 = vsub.f32 %v1319, %v1320
    %v1322 = vand.u32 %v1321, 4294901760
    %1323 = vmatpush1.msra.mxu0 %v1322
    %1324 = vmatprep.subr.mxu0 0.0
    %v1325 = vand.u32 %v131, 4294901760
    %v1326 = vsub.f32 %v131, %v1325
    %v1327 = vand.u32 %v1326, 4294901760
    %v1328 = vsub.f32 %v1326, %v1327
    %v1329 = vand.u32 %v1328, 4294901760
    %1330 = vmatpush1.msra.mxu0 %v1329
    %1331 = vmatprep.subr.mxu0 0.0
    %v1332 = vand.u32 %v132, 4294901760
    %v1333 = vsub.f32 %v132, %v1332
    %v1334 = vand.u32 %v1333, 4294901760
    %v1335 = vsub.f32 %v1333, %v1334
    %v1336 = vand.u32 %v1335, 4294901760
    %1337 = vmatpush1.msra.mxu0 %v1336
    %1338 = vmatprep.subr.mxu0 0.0
    %v1339 = vand.u32 %v133, 4294901760
    %v1340 = vsub.f32 %v133, %v1339
    %v1341 = vand.u32 %v1340, 4294901760
    %v1342 = vsub.f32 %v1340, %v1341
    %v1343 = vand.u32 %v1342, 4294901760
    %1344 = vmatpush1.msra.mxu0 %v1343
    %1345 = vmatprep.subr.mxu0 0.0
    %v1346 = vand.u32 %v134, 4294901760
    %v1347 = vsub.f32 %v134, %v1346
    %v1348 = vand.u32 %v1347, 4294901760
    %v1349 = vsub.f32 %v1347, %v1348
    %v1350 = vand.u32 %v1349, 4294901760
    %1351 = vmatpush1.msra.mxu0 %v1350
    %1352 = vmatprep.subr.mxu0 0.0
    %v1353 = vand.u32 %v135, 4294901760
    %v1354 = vsub.f32 %v135, %v1353
    %v1355 = vand.u32 %v1354, 4294901760
    %v1356 = vsub.f32 %v1354, %v1355
    %v1357 = vand.u32 %v1356, 4294901760
    %1358 = vmatpush1.msra.mxu0 %v1357
    %1359 = vmatprep.subr.mxu0 0.0
    %v1360 = vand.u32 %v136, 4294901760
    %v1361 = vsub.f32 %v136, %v1360
    %v1362 = vand.u32 %v1361, 4294901760
    %v1363 = vsub.f32 %v1361, %v1362
    %v1364 = vand.u32 %v1363, 4294901760
    %1365 = vmatpush1.msra.mxu0 %v1364
    %1366 = vmatprep.subr.mxu0 0.0
    %v1367 = vand.u32 %v137, 4294901760
    %v1368 = vsub.f32 %v137, %v1367
    %v1369 = vand.u32 %v1368, 4294901760
    %v1370 = vsub.f32 %v1368, %v1369
    %v1371 = vand.u32 %v1370, 4294901760
    %1372 = vmatpush1.msra.mxu0 %v1371
    %1373 = vmatprep.subr.mxu0 0.0
    %v1374 = vand.u32 %v138, 4294901760
    %v1375 = vsub.f32 %v138, %v1374
    %v1376 = vand.u32 %v1375, 4294901760
    %v1377 = vsub.f32 %v1375, %v1376
    %v1378 = vand.u32 %v1377, 4294901760
    %1379 = vmatpush1.msra.mxu0 %v1378
    %1380 = vmatprep.subr.mxu0 0.0
    %v1381 = vand.u32 %v139, 4294901760
    %v1382 = vsub.f32 %v139, %v1381
    %v1383 = vand.u32 %v1382, 4294901760
    %v1384 = vsub.f32 %v1382, %v1383
    %v1385 = vand.u32 %v1384, 4294901760
    %1386 = vmatpush1.msra.mxu0 %v1385
    %1387 = vmatprep.subr.mxu0 0.0
    %v1388 = vand.u32 %v140, 4294901760
    %v1389 = vsub.f32 %v140, %v1388
    %v1390 = vand.u32 %v1389, 4294901760
    %v1391 = vsub.f32 %v1389, %v1390
    %v1392 = vand.u32 %v1391, 4294901760
    %1393 = vmatpush1.msra.mxu0 %v1392
    %1394 = vmatprep.subr.mxu0 0.0
    %v1395 = vand.u32 %v141, 4294901760
    %v1396 = vsub.f32 %v141, %v1395
    %v1397 = vand.u32 %v1396, 4294901760
    %v1398 = vsub.f32 %v1396, %v1397
    %v1399 = vand.u32 %v1398, 4294901760
    %1400 = vmatpush1.msra.mxu0 %v1399
    %1401 = vmatprep.subr.mxu0 0.0
    %v1402 = vand.u32 %v142, 4294901760
    %v1403 = vsub.f32 %v142, %v1402
    %v1404 = vand.u32 %v1403, 4294901760
    %v1405 = vsub.f32 %v1403, %v1404
    %v1406 = vand.u32 %v1405, 4294901760
    %1407 = vmatpush1.msra.mxu0 %v1406
    %1408 = vmatprep.subr.mxu0 0.0
    %v1409 = vand.u32 %v143, 4294901760
    %v1410 = vsub.f32 %v143, %v1409
    %v1411 = vand.u32 %v1410, 4294901760
    %v1412 = vsub.f32 %v1410, %v1411
    %v1413 = vand.u32 %v1412, 4294901760
    %1414 = vmatpush1.msra.mxu0 %v1413
    %1415 = vmatprep.subr.mxu0 0.0
    %v1416 = vand.u32 %v144, 4294901760
    %v1417 = vsub.f32 %v144, %v1416
    %v1418 = vand.u32 %v1417, 4294901760
    %v1419 = vsub.f32 %v1417, %v1418
    %v1420 = vand.u32 %v1419, 4294901760
    %1421 = vmatpush1.msra.mxu0 %v1420
    %1422 = vmatprep.subr.mxu0 0.0
    %v1423 = vand.u32 %v145, 4294901760
    %v1424 = vsub.f32 %v145, %v1423
    %v1425 = vand.u32 %v1424, 4294901760
    %v1426 = vsub.f32 %v1424, %v1425
    %v1427 = vand.u32 %v1426, 4294901760
    %1428 = vmatpush1.msra.mxu0 %v1427
    %1429 = vmatprep.subr.mxu0 0.0
    %v1430 = vand.u32 %v146, 4294901760
    %v1431 = vsub.f32 %v146, %v1430
    %v1432 = vand.u32 %v1431, 4294901760
    %v1433 = vsub.f32 %v1431, %v1432
    %v1434 = vand.u32 %v1433, 4294901760
    %1435 = vmatpush1.msra.mxu0 %v1434
    %1436 = vmatprep.subr.mxu0 0.0
    %v1437 = vand.u32 %v147, 4294901760
    %v1438 = vsub.f32 %v147, %v1437
    %v1439 = vand.u32 %v1438, 4294901760
    %v1440 = vsub.f32 %v1438, %v1439
    %v1441 = vand.u32 %v1440, 4294901760
    %1442 = vmatpush1.msra.mxu0 %v1441
    %1443 = vmatprep.subr.mxu0 0.0
    %v1444 = vand.u32 %v148, 4294901760
    %v1445 = vsub.f32 %v148, %v1444
    %v1446 = vand.u32 %v1445, 4294901760
    %v1447 = vsub.f32 %v1445, %v1446
    %v1448 = vand.u32 %v1447, 4294901760
    %1449 = vmatpush1.msra.mxu0 %v1448
    %1450 = vmatprep.subr.mxu0 0.0
    %v1451 = vand.u32 %v149, 4294901760
    %v1452 = vsub.f32 %v149, %v1451
    %v1453 = vand.u32 %v1452, 4294901760
    %v1454 = vsub.f32 %v1452, %v1453
    %v1455 = vand.u32 %v1454, 4294901760
    %1456 = vmatpush1.msra.mxu0 %v1455
    %1457 = vmatprep.subr.mxu0 0.0
    %v1458 = vand.u32 %v150, 4294901760
    %v1459 = vsub.f32 %v150, %v1458
    %v1460 = vand.u32 %v1459, 4294901760
    %v1461 = vsub.f32 %v1459, %v1460
    %v1462 = vand.u32 %v1461, 4294901760
    %1463 = vmatpush1.msra.mxu0 %v1462
    %1464 = vmatprep.subr.mxu0 0.0
    %v1465 = vand.u32 %v151, 4294901760
    %v1466 = vsub.f32 %v151, %v1465
    %v1467 = vand.u32 %v1466, 4294901760
    %v1468 = vsub.f32 %v1466, %v1467
    %v1469 = vand.u32 %v1468, 4294901760
    %1470 = vmatpush1.msra.mxu0 %v1469
    %1471 = vmatprep.subr.mxu0 0.0
    %v1472 = vand.u32 %v152, 4294901760
    %v1473 = vsub.f32 %v152, %v1472
    %v1474 = vand.u32 %v1473, 4294901760
    %v1475 = vsub.f32 %v1473, %v1474
    %v1476 = vand.u32 %v1475, 4294901760
    %1477 = vmatpush1.msra.mxu0 %v1476
    %1478 = vmatprep.subr.mxu0 0.0
    %v1479 = vand.u32 %v153, 4294901760
    %v1480 = vsub.f32 %v153, %v1479
    %v1481 = vand.u32 %v1480, 4294901760
    %v1482 = vsub.f32 %v1480, %v1481
    %v1483 = vand.u32 %v1482, 4294901760
    %1484 = vmatpush1.msra.mxu0 %v1483
    %1485 = vmatprep.subr.mxu0 0.0
    %v1486 = vand.u32 %v154, 4294901760
    %v1487 = vsub.f32 %v154, %v1486
    %v1488 = vand.u32 %v1487, 4294901760
    %v1489 = vsub.f32 %v1487, %v1488
    %v1490 = vand.u32 %v1489, 4294901760
    %1491 = vmatpush1.msra.mxu0 %v1490
    %v1492 = vand.u32 %v78, 4294901760
    %1493 = vmatprep.mubr.f32.mxu0 %v1492
    %v1494 = vand.u32 %v77, 4294901760
    %1495 = vmatmul.mubr.f32.gmra.mrb[0].mxu0 %v1494
    %v1496 = vpop.f32.mrb[0].mxu0
    %v1497 = vadd.f32 %v1250, %v1496
    %v1498 = vpop.f32.mrb[0].mxu0
    %v1499 = vand.u32 %v86, 4294901760
    %1500 = vmatprep.mubr.f32.mxu0 %v1499
    %v1501 = vand.u32 %v85, 4294901760
    %1502 = vmatmul.mubr.f32.gmra.mrb[0].mxu0 %v1501
    %v1503 = vpop.f32.mrb[0].mxu0
    %v1504 = vadd.f32 %v1265, %v1503
    %v1505 = vpop.f32.mrb[0].mxu0
    %1506 = vdwg.mxu0
    %1507 = vmatprep.subr.mxu0 0.0
    %v1508 = vand.u32 %v123, 4294901760
    %v1509 = vsub.f32 %v123, %v1508
    %1510 = vmatpush1.msra.mxu0 %v1509
    %1511 = vmatprep.subr.mxu0 0.0
    %v1512 = vand.u32 %v124, 4294901760
    %v1513 = vsub.f32 %v124, %v1512
    %1514 = vmatpush1.msra.mxu0 %v1513
    %1515 = vmatprep.subr.mxu0 0.0
    %v1516 = vand.u32 %v125, 4294901760
    %v1517 = vsub.f32 %v125, %v1516
    %1518 = vmatpush1.msra.mxu0 %v1517
    %1519 = vmatprep.subr.mxu0 0.0
    %v1520 = vand.u32 %v126, 4294901760
    %v1521 = vsub.f32 %v126, %v1520
    %1522 = vmatpush1.msra.mxu0 %v1521
    %1523 = vmatprep.subr.mxu0 0.0
    %v1524 = vand.u32 %v127, 4294901760
    %v1525 = vsub.f32 %v127, %v1524
    %1526 = vmatpush1.msra.mxu0 %v1525
    %1527 = vmatprep.subr.mxu0 0.0
    %v1528 = vand.u32 %v128, 4294901760
    %v1529 = vsub.f32 %v128, %v1528
    %1530 = vmatpush1.msra.mxu0 %v1529
    %1531 = vmatprep.subr.mxu0 0.0
    %v1532 = vand.u32 %v129, 4294901760
    %v1533 = vsub.f32 %v129, %v1532
    %1534 = vmatpush1.msra.mxu0 %v1533
    %1535 = vmatprep.subr.mxu0 0.0
    %v1536 = vand.u32 %v130, 4294901760
    %v1537 = vsub.f32 %v130, %v1536
    %1538 = vmatpush1.msra.mxu0 %v1537
    %1539 = vmatprep.subr.mxu0 0.0
    %v1540 = vand.u32 %v131, 4294901760
    %v1541 = vsub.f32 %v131, %v1540
    %1542 = vmatpush1.msra.mxu0 %v1541
    %1543 = vmatprep.subr.mxu0 0.0
    %v1544 = vand.u32 %v132, 4294901760
    %v1545 = vsub.f32 %v132, %v1544
    %1546 = vmatpush1.msra.mxu0 %v1545
    %1547 = vmatprep.subr.mxu0 0.0
    %v1548 = vand.u32 %v133, 4294901760
    %v1549 = vsub.f32 %v133, %v1548
    %1550 = vmatpush1.msra.mxu0 %v1549
    %1551 = vmatprep.subr.mxu0 0.0
    %v1552 = vand.u32 %v134, 4294901760
    %v1553 = vsub.f32 %v134, %v1552
    %1554 = vmatpush1.msra.mxu0 %v1553
    %1555 = vmatprep.subr.mxu0 0.0
    %v1556 = vand.u32 %v135, 4294901760
    %v1557 = vsub.f32 %v135, %v1556
    %1558 = vmatpush1.msra.mxu0 %v1557
    %1559 = vmatprep.subr.mxu0 0.0
    %v1560 = vand.u32 %v136, 4294901760
    %v1561 = vsub.f32 %v136, %v1560
    %1562 = vmatpush1.msra.mxu0 %v1561
    %1563 = vmatprep.subr.mxu0 0.0
    %v1564 = vand.u32 %v137, 4294901760
    %v1565 = vsub.f32 %v137, %v1564
    %1566 = vmatpush1.msra.mxu0 %v1565
    %1567 = vmatprep.subr.mxu0 0.0
    %v1568 = vand.u32 %v138, 4294901760
    %v1569 = vsub.f32 %v138, %v1568
    %1570 = vmatpush1.msra.mxu0 %v1569
    %1571 = vmatprep.subr.mxu0 0.0
    %v1572 = vand.u32 %v139, 4294901760
    %v1573 = vsub.f32 %v139, %v1572
    %1574 = vmatpush1.msra.mxu0 %v1573
    %1575 = vmatprep.subr.mxu0 0.0
    %v1576 = vand.u32 %v140, 4294901760
    %v1577 = vsub.f32 %v140, %v1576
    %1578 = vmatpush1.msra.mxu0 %v1577
    %1579 = vmatprep.subr.mxu0 0.0
    %v1580 = vand.u32 %v141, 4294901760
    %v1581 = vsub.f32 %v141, %v1580
    %1582 = vmatpush1.msra.mxu0 %v1581
    %1583 = vmatprep.subr.mxu0 0.0
    %v1584 = vand.u32 %v142, 4294901760
    %v1585 = vsub.f32 %v142, %v1584
    %1586 = vmatpush1.msra.mxu0 %v1585
    %1587 = vmatprep.subr.mxu0 0.0
    %v1588 = vand.u32 %v143, 4294901760
    %v1589 = vsub.f32 %v143, %v1588
    %1590 = vmatpush1.msra.mxu0 %v1589
    %1591 = vmatprep.subr.mxu0 0.0
    %v1592 = vand.u32 %v144, 4294901760
    %v1593 = vsub.f32 %v144, %v1592
    %1594 = vmatpush1.msra.mxu0 %v1593
    %1595 = vmatprep.subr.mxu0 0.0
    %v1596 = vand.u32 %v145, 4294901760
    %v1597 = vsub.f32 %v145, %v1596
    %1598 = vmatpush1.msra.mxu0 %v1597
    %1599 = vmatprep.subr.mxu0 0.0
    %v1600 = vand.u32 %v146, 4294901760
    %v1601 = vsub.f32 %v146, %v1600
    %1602 = vmatpush1.msra.mxu0 %v1601
    %1603 = vmatprep.subr.mxu0 0.0
    %v1604 = vand.u32 %v147, 4294901760
    %v1605 = vsub.f32 %v147, %v1604
    %1606 = vmatpush1.msra.mxu0 %v1605
    %1607 = vmatprep.subr.mxu0 0.0
    %v1608 = vand.u32 %v148, 4294901760
    %v1609 = vsub.f32 %v148, %v1608
    %1610 = vmatpush1.msra.mxu0 %v1609
    %1611 = vmatprep.subr.mxu0 0.0
    %v1612 = vand.u32 %v149, 4294901760
    %v1613 = vsub.f32 %v149, %v1612
    %1614 = vmatpush1.msra.mxu0 %v1613
    %1615 = vmatprep.subr.mxu0 0.0
    %v1616 = vand.u32 %v150, 4294901760
    %v1617 = vsub.f32 %v150, %v1616
    %1618 = vmatpush1.msra.mxu0 %v1617
    %1619 = vmatprep.subr.mxu0 0.0
    %v1620 = vand.u32 %v151, 4294901760
    %v1621 = vsub.f32 %v151, %v1620
    %1622 = vmatpush1.msra.mxu0 %v1621
    %1623 = vmatprep.subr.mxu0 0.0
    %v1624 = vand.u32 %v152, 4294901760
    %v1625 = vsub.f32 %v152, %v1624
    %1626 = vmatpush1.msra.mxu0 %v1625
    %1627 = vmatprep.subr.mxu0 0.0
    %v1628 = vand.u32 %v153, 4294901760
    %v1629 = vsub.f32 %v153, %v1628
    %1630 = vmatpush1.msra.mxu0 %v1629
    %1631 = vmatprep.subr.mxu0 0.0
    %v1632 = vand.u32 %v154, 4294901760
    %v1633 = vsub.f32 %v154, %v1632
    %1634 = vmatpush1.msra.mxu0 %v1633
    %v1635 = vand.u32 %v78, 4294901760
    %v1636 = vsub.f32 %v78, %v1635
    %1637 = vmatprep.mubr.f32.mxu0 %v1636
    %v1638 = vand.u32 %v77, 4294901760
    %v1639 = vsub.f32 %v77, %v1638
    %1640 = vmatmul.mubr.f32.gmra.mrb[0].mxu0 %v1639
    %v1641 = vpop.f32.mrb[0].mxu0
    %v1642 = vadd.f32 %v1497, %v1641
    %v1643 = vpop.f32.mrb[0].mxu0
    %v1644 = vand.u32 %v86, 4294901760
    %v1645 = vsub.f32 %v86, %v1644
    %1646 = vmatprep.mubr.f32.mxu0 %v1645
    %v1647 = vand.u32 %v85, 4294901760
    %v1648 = vsub.f32 %v85, %v1647
    %1649 = vmatmul.mubr.f32.gmra.mrb[0].mxu0 %v1648
    %v1650 = vpop.f32.mrb[0].mxu0
    %v1651 = vadd.f32 %v1504, %v1650
    %v1652 = vpop.f32.mrb[0].mxu0
    %1653 = vdwg.mxu0
    %1654 = vmatprep.subr.mxu0 0.0
    %v1655 = vand.u32 %v123, 4294901760
    %1656 = vmatpush1.msra.mxu0 %v1655
    %1657 = vmatprep.subr.mxu0 0.0
    %v1658 = vand.u32 %v124, 4294901760
    %1659 = vmatpush1.msra.mxu0 %v1658
    %1660 = vmatprep.subr.mxu0 0.0
    %v1661 = vand.u32 %v125, 4294901760
    %1662 = vmatpush1.msra.mxu0 %v1661
    %1663 = vmatprep.subr.mxu0 0.0
    %v1664 = vand.u32 %v126, 4294901760
    %1665 = vmatpush1.msra.mxu0 %v1664
    %1666 = vmatprep.subr.mxu0 0.0
    %v1667 = vand.u32 %v127, 4294901760
    %1668 = vmatpush1.msra.mxu0 %v1667
    %1669 = vmatprep.subr.mxu0 0.0
    %v1670 = vand.u32 %v128, 4294901760
    %1671 = vmatpush1.msra.mxu0 %v1670
    %1672 = vmatprep.subr.mxu0 0.0
    %v1673 = vand.u32 %v129, 4294901760
    %1674 = vmatpush1.msra.mxu0 %v1673
    %1675 = vmatprep.subr.mxu0 0.0
    %v1676 = vand.u32 %v130, 4294901760
    %1677 = vmatpush1.msra.mxu0 %v1676
    %1678 = vmatprep.subr.mxu0 0.0
    %v1679 = vand.u32 %v131, 4294901760
    %1680 = vmatpush1.msra.mxu0 %v1679
    %1681 = vmatprep.subr.mxu0 0.0
    %v1682 = vand.u32 %v132, 4294901760
    %1683 = vmatpush1.msra.mxu0 %v1682
    %1684 = vmatprep.subr.mxu0 0.0
    %v1685 = vand.u32 %v133, 4294901760
    %1686 = vmatpush1.msra.mxu0 %v1685
    %1687 = vmatprep.subr.mxu0 0.0
    %v1688 = vand.u32 %v134, 4294901760
    %1689 = vmatpush1.msra.mxu0 %v1688
    %1690 = vmatprep.subr.mxu0 0.0
    %v1691 = vand.u32 %v135, 4294901760
    %1692 = vmatpush1.msra.mxu0 %v1691
    %1693 = vmatprep.subr.mxu0 0.0
    %v1694 = vand.u32 %v136, 4294901760
    %1695 = vmatpush1.msra.mxu0 %v1694
    %1696 = vmatprep.subr.mxu0 0.0
    %v1697 = vand.u32 %v137, 4294901760
    %1698 = vmatpush1.msra.mxu0 %v1697
    %1699 = vmatprep.subr.mxu0 0.0
    %v1700 = vand.u32 %v138, 4294901760
    %1701 = vmatpush1.msra.mxu0 %v1700
    %1702 = vmatprep.subr.mxu0 0.0
    %v1703 = vand.u32 %v139, 4294901760
    %1704 = vmatpush1.msra.mxu0 %v1703
    %1705 = vmatprep.subr.mxu0 0.0
    %v1706 = vand.u32 %v140, 4294901760
    %1707 = vmatpush1.msra.mxu0 %v1706
    %1708 = vmatprep.subr.mxu0 0.0
    %v1709 = vand.u32 %v141, 4294901760
    %1710 = vmatpush1.msra.mxu0 %v1709
    %1711 = vmatprep.subr.mxu0 0.0
    %v1712 = vand.u32 %v142, 4294901760
    %1713 = vmatpush1.msra.mxu0 %v1712
    %1714 = vmatprep.subr.mxu0 0.0
    %v1715 = vand.u32 %v143, 4294901760
    %1716 = vmatpush1.msra.mxu0 %v1715
    %1717 = vmatprep.subr.mxu0 0.0
    %v1718 = vand.u32 %v144, 4294901760
    %1719 = vmatpush1.msra.mxu0 %v1718
    %1720 = vmatprep.subr.mxu0 0.0
    %v1721 = vand.u32 %v145, 4294901760
    %1722 = vmatpush1.msra.mxu0 %v1721
    %1723 = vmatprep.subr.mxu0 0.0
    %v1724 = vand.u32 %v146, 4294901760
    %1725 = vmatpush1.msra.mxu0 %v1724
    %1726 = vmatprep.subr.mxu0 0.0
    %v1727 = vand.u32 %v147, 4294901760
    %1728 = vmatpush1.msra.mxu0 %v1727
    %1729 = vmatprep.subr.mxu0 0.0
    %v1730 = vand.u32 %v148, 4294901760
    %1731 = vmatpush1.msra.mxu0 %v1730
    %1732 = vmatprep.subr.mxu0 0.0
    %v1733 = vand.u32 %v149, 4294901760
    %1734 = vmatpush1.msra.mxu0 %v1733
    %1735 = vmatprep.subr.mxu0 0.0
    %v1736 = vand.u32 %v150, 4294901760
    %1737 = vmatpush1.msra.mxu0 %v1736
    %1738 = vmatprep.subr.mxu0 0.0
    %v1739 = vand.u32 %v151, 4294901760
    %1740 = vmatpush1.msra.mxu0 %v1739
    %1741 = vmatprep.subr.mxu0 0.0
    %v1742 = vand.u32 %v152, 4294901760
    %1743 = vmatpush1.msra.mxu0 %v1742
    %1744 = vmatprep.subr.mxu0 0.0
    %v1745 = vand.u32 %v153, 4294901760
    %1746 = vmatpush1.msra.mxu0 %v1745
    %1747 = vmatprep.subr.mxu0 0.0
    %v1748 = vand.u32 %v154, 4294901760
    %1749 = vmatpush1.msra.mxu0 %v1748
    %v1750 = vand.u32 %v78, 4294901760
    %v1751 = vsub.f32 %v78, %v1750
    %v1752 = vand.u32 %v1751, 4294901760
    %1753 = vmatprep.mubr.f32.mxu0 %v1752
    %v1754 = vand.u32 %v77, 4294901760
    %v1755 = vsub.f32 %v77, %v1754
    %v1756 = vand.u32 %v1755, 4294901760
    %1757 = vmatmul.mubr.f32.gmra.mrb[0].mxu0 %v1756
    %v1758 = vpop.f32.mrb[0].mxu0
    %v1759 = vadd.f32 %v1642, %v1758
    %v1760 = vpop.f32.mrb[0].mxu0
    %v1761 = vand.u32 %v86, 4294901760
    %v1762 = vsub.f32 %v86, %v1761
    %v1763 = vand.u32 %v1762, 4294901760
    %1764 = vmatprep.mubr.f32.mxu0 %v1763
    %v1765 = vand.u32 %v85, 4294901760
    %v1766 = vsub.f32 %v85, %v1765
    %v1767 = vand.u32 %v1766, 4294901760
    %1768 = vmatmul.mubr.f32.gmra.mrb[0].mxu0 %v1767
    %v1769 = vpop.f32.mrb[0].mxu0
    %v1770 = vadd.f32 %v1651, %v1769
    %v1771 = vpop.f32.mrb[0].mxu0
    %1772 = vdwg.mxu0
    %1773 = vmatprep.subr.mxu0 0.0
    %v1774 = vand.u32 %v123, 4294901760
    %v1775 = vsub.f32 %v123, %v1774
    %v1776 = vand.u32 %v1775, 4294901760
    %1777 = vmatpush1.msra.mxu0 %v1776
    %1778 = vmatprep.subr.mxu0 0.0
    %v1779 = vand.u32 %v124, 4294901760
    %v1780 = vsub.f32 %v124, %v1779
    %v1781 = vand.u32 %v1780, 4294901760
    %1782 = vmatpush1.msra.mxu0 %v1781
    %1783 = vmatprep.subr.mxu0 0.0
    %v1784 = vand.u32 %v125, 4294901760
    %v1785 = vsub.f32 %v125, %v1784
    %v1786 = vand.u32 %v1785, 4294901760
    %1787 = vmatpush1.msra.mxu0 %v1786
    %1788 = vmatprep.subr.mxu0 0.0
    %v1789 = vand.u32 %v126, 4294901760
    %v1790 = vsub.f32 %v126, %v1789
    %v1791 = vand.u32 %v1790, 4294901760
    %1792 = vmatpush1.msra.mxu0 %v1791
    %1793 = vmatprep.subr.mxu0 0.0
    %v1794 = vand.u32 %v127, 4294901760
    %v1795 = vsub.f32 %v127, %v1794
    %v1796 = vand.u32 %v1795, 4294901760
    %1797 = vmatpush1.msra.mxu0 %v1796
    %1798 = vmatprep.subr.mxu0 0.0
    %v1799 = vand.u32 %v128, 4294901760
    %v1800 = vsub.f32 %v128, %v1799
    %v1801 = vand.u32 %v1800, 4294901760
    %1802 = vmatpush1.msra.mxu0 %v1801
    %1803 = vmatprep.subr.mxu0 0.0
    %v1804 = vand.u32 %v129, 4294901760
    %v1805 = vsub.f32 %v129, %v1804
    %v1806 = vand.u32 %v1805, 4294901760
    %1807 = vmatpush1.msra.mxu0 %v1806
    %1808 = vmatprep.subr.mxu0 0.0
    %v1809 = vand.u32 %v130, 4294901760
    %v1810 = vsub.f32 %v130, %v1809
    %v1811 = vand.u32 %v1810, 4294901760
    %1812 = vmatpush1.msra.mxu0 %v1811
    %1813 = vmatprep.subr.mxu0 0.0
    %v1814 = vand.u32 %v131, 4294901760
    %v1815 = vsub.f32 %v131, %v1814
    %v1816 = vand.u32 %v1815, 4294901760
    %1817 = vmatpush1.msra.mxu0 %v1816
    %1818 = vmatprep.subr.mxu0 0.0
    %v1819 = vand.u32 %v132, 4294901760
    %v1820 = vsub.f32 %v132, %v1819
    %v1821 = vand.u32 %v1820, 4294901760
    %1822 = vmatpush1.msra.mxu0 %v1821
    %1823 = vmatprep.subr.mxu0 0.0
    %v1824 = vand.u32 %v133, 4294901760
    %v1825 = vsub.f32 %v133, %v1824
    %v1826 = vand.u32 %v1825, 4294901760
    %1827 = vmatpush1.msra.mxu0 %v1826
    %1828 = vmatprep.subr.mxu0 0.0
    %v1829 = vand.u32 %v134, 4294901760
    %v1830 = vsub.f32 %v134, %v1829
    %v1831 = vand.u32 %v1830, 4294901760
    %1832 = vmatpush1.msra.mxu0 %v1831
    %1833 = vmatprep.subr.mxu0 0.0
    %v1834 = vand.u32 %v135, 4294901760
    %v1835 = vsub.f32 %v135, %v1834
    %v1836 = vand.u32 %v1835, 4294901760
    %1837 = vmatpush1.msra.mxu0 %v1836
    %1838 = vmatprep.subr.mxu0 0.0
    %v1839 = vand.u32 %v136, 4294901760
    %v1840 = vsub.f32 %v136, %v1839
    %v1841 = vand.u32 %v1840, 4294901760
    %1842 = vmatpush1.msra.mxu0 %v1841
    %1843 = vmatprep.subr.mxu0 0.0
    %v1844 = vand.u32 %v137, 4294901760
    %v1845 = vsub.f32 %v137, %v1844
    %v1846 = vand.u32 %v1845, 4294901760
    %1847 = vmatpush1.msra.mxu0 %v1846
    %1848 = vmatprep.subr.mxu0 0.0
    %v1849 = vand.u32 %v138, 4294901760
    %v1850 = vsub.f32 %v138, %v1849
    %v1851 = vand.u32 %v1850, 4294901760
    %1852 = vmatpush1.msra.mxu0 %v1851
    %1853 = vmatprep.subr.mxu0 0.0
    %v1854 = vand.u32 %v139, 4294901760
    %v1855 = vsub.f32 %v139, %v1854
    %v1856 = vand.u32 %v1855, 4294901760
    %1857 = vmatpush1.msra.mxu0 %v1856
    %1858 = vmatprep.subr.mxu0 0.0
    %v1859 = vand.u32 %v140, 4294901760
    %v1860 = vsub.f32 %v140, %v1859
    %v1861 = vand.u32 %v1860, 4294901760
    %1862 = vmatpush1.msra.mxu0 %v1861
    %1863 = vmatprep.subr.mxu0 0.0
    %v1864 = vand.u32 %v141, 4294901760
    %v1865 = vsub.f32 %v141, %v1864
    %v1866 = vand.u32 %v1865, 4294901760
    %1867 = vmatpush1.msra.mxu0 %v1866
    %1868 = vmatprep.subr.mxu0 0.0
    %v1869 = vand.u32 %v142, 4294901760
    %v1870 = vsub.f32 %v142, %v1869
    %v1871 = vand.u32 %v1870, 4294901760
    %1872 = vmatpush1.msra.mxu0 %v1871
    %1873 = vmatprep.subr.mxu0 0.0
    %v1874 = vand.u32 %v143, 4294901760
    %v1875 = vsub.f32 %v143, %v1874
    %v1876 = vand.u32 %v1875, 4294901760
    %1877 = vmatpush1.msra.mxu0 %v1876
    %1878 = vmatprep.subr.mxu0 0.0
    %v1879 = vand.u32 %v144, 4294901760
    %v1880 = vsub.f32 %v144, %v1879
    %v1881 = vand.u32 %v1880, 4294901760
    %1882 = vmatpush1.msra.mxu0 %v1881
    %1883 = vmatprep.subr.mxu0 0.0
    %v1884 = vand.u32 %v145, 4294901760
    %v1885 = vsub.f32 %v145, %v1884
    %v1886 = vand.u32 %v1885, 4294901760
    %1887 = vmatpush1.msra.mxu0 %v1886
    %1888 = vmatprep.subr.mxu0 0.0
    %v1889 = vand.u32 %v146, 4294901760
    %v1890 = vsub.f32 %v146, %v1889
    %v1891 = vand.u32 %v1890, 4294901760
    %1892 = vmatpush1.msra.mxu0 %v1891
    %1893 = vmatprep.subr.mxu0 0.0
    %v1894 = vand.u32 %v147, 4294901760
    %v1895 = vsub.f32 %v147, %v1894
    %v1896 = vand.u32 %v1895, 4294901760
    %1897 = vmatpush1.msra.mxu0 %v1896
    %1898 = vmatprep.subr.mxu0 0.0
    %v1899 = vand.u32 %v148, 4294901760
    %v1900 = vsub.f32 %v148, %v1899
    %v1901 = vand.u32 %v1900, 4294901760
    %1902 = vmatpush1.msra.mxu0 %v1901
    %1903 = vmatprep.subr.mxu0 0.0
    %v1904 = vand.u32 %v149, 4294901760
    %v1905 = vsub.f32 %v149, %v1904
    %v1906 = vand.u32 %v1905, 4294901760
    %1907 = vmatpush1.msra.mxu0 %v1906
    %1908 = vmatprep.subr.mxu0 0.0
    %v1909 = vand.u32 %v150, 4294901760
    %v1910 = vsub.f32 %v150, %v1909
    %v1911 = vand.u32 %v1910, 4294901760
    %1912 = vmatpush1.msra.mxu0 %v1911
    %1913 = vmatprep.subr.mxu0 0.0
    %v1914 = vand.u32 %v151, 4294901760
    %v1915 = vsub.f32 %v151, %v1914
    %v1916 = vand.u32 %v1915, 4294901760
    %1917 = vmatpush1.msra.mxu0 %v1916
    %1918 = vmatprep.subr.mxu0 0.0
    %v1919 = vand.u32 %v152, 4294901760
    %v1920 = vsub.f32 %v152, %v1919
    %v1921 = vand.u32 %v1920, 4294901760
    %1922 = vmatpush1.msra.mxu0 %v1921
    %1923 = vmatprep.subr.mxu0 0.0
    %v1924 = vand.u32 %v153, 4294901760
    %v1925 = vsub.f32 %v153, %v1924
    %v1926 = vand.u32 %v1925, 4294901760
    %1927 = vmatpush1.msra.mxu0 %v1926
    %1928 = vmatprep.subr.mxu0 0.0
    %v1929 = vand.u32 %v154, 4294901760
    %v1930 = vsub.f32 %v154, %v1929
    %v1931 = vand.u32 %v1930, 4294901760
    %1932 = vmatpush1.msra.mxu0 %v1931
    %v1933 = vand.u32 %v78, 4294901760
    %1934 = vmatprep.mubr.f32.mxu0 %v1933
    %v1935 = vand.u32 %v77, 4294901760
    %1936 = vmatmul.mubr.f32.gmra.mrb[0].mxu0 %v1935
    %v1937 = vpop.f32.mrb[0].mxu0
    %v1938 = vadd.f32 %v1759, %v1937
    %v1939 = vpop.f32.mrb[0].mxu0
    %v1940 = vand.u32 %v86, 4294901760
    %1941 = vmatprep.mubr.f32.mxu0 %v1940
    %v1942 = vand.u32 %v85, 4294901760
    %1943 = vmatmul.mubr.f32.gmra.mrb[0].mxu0 %v1942
    %v1944 = vpop.f32.mrb[0].mxu0
    %v1945 = vadd.f32 %v1770, %v1944
    %v1946 = vpop.f32.mrb[0].mxu0
    %1947 = vdwg.mxu0
    %1948 = vmatprep.subr.mxu0 0.0
    %v1949 = vand.u32 %v123, 4294901760
    %1950 = vmatpush1.msra.mxu0 %v1949
    %1951 = vmatprep.subr.mxu0 0.0
    %v1952 = vand.u32 %v124, 4294901760
    %1953 = vmatpush1.msra.mxu0 %v1952
    %1954 = vmatprep.subr.mxu0 0.0
    %v1955 = vand.u32 %v125, 4294901760
    %1956 = vmatpush1.msra.mxu0 %v1955
    %1957 = vmatprep.subr.mxu0 0.0
    %v1958 = vand.u32 %v126, 4294901760
    %1959 = vmatpush1.msra.mxu0 %v1958
    %1960 = vmatprep.subr.mxu0 0.0
    %v1961 = vand.u32 %v127, 4294901760
    %1962 = vmatpush1.msra.mxu0 %v1961
    %1963 = vmatprep.subr.mxu0 0.0
    %v1964 = vand.u32 %v128, 4294901760
    %1965 = vmatpush1.msra.mxu0 %v1964
    %1966 = vmatprep.subr.mxu0 0.0
    %v1967 = vand.u32 %v129, 4294901760
    %1968 = vmatpush1.msra.mxu0 %v1967
    %1969 = vmatprep.subr.mxu0 0.0
    %v1970 = vand.u32 %v130, 4294901760
    %1971 = vmatpush1.msra.mxu0 %v1970
    %1972 = vmatprep.subr.mxu0 0.0
    %v1973 = vand.u32 %v131, 4294901760
    %1974 = vmatpush1.msra.mxu0 %v1973
    %1975 = vmatprep.subr.mxu0 0.0
    %v1976 = vand.u32 %v132, 4294901760
    %1977 = vmatpush1.msra.mxu0 %v1976
    %1978 = vmatprep.subr.mxu0 0.0
    %v1979 = vand.u32 %v133, 4294901760
    %1980 = vmatpush1.msra.mxu0 %v1979
    %1981 = vmatprep.subr.mxu0 0.0
    %v1982 = vand.u32 %v134, 4294901760
    %1983 = vmatpush1.msra.mxu0 %v1982
    %1984 = vmatprep.subr.mxu0 0.0
    %v1985 = vand.u32 %v135, 4294901760
    %1986 = vmatpush1.msra.mxu0 %v1985
    %1987 = vmatprep.subr.mxu0 0.0
    %v1988 = vand.u32 %v136, 4294901760
    %1989 = vmatpush1.msra.mxu0 %v1988
    %1990 = vmatprep.subr.mxu0 0.0
    %v1991 = vand.u32 %v137, 4294901760
    %1992 = vmatpush1.msra.mxu0 %v1991
    %1993 = vmatprep.subr.mxu0 0.0
    %v1994 = vand.u32 %v138, 4294901760
    %1995 = vmatpush1.msra.mxu0 %v1994
    %1996 = vmatprep.subr.mxu0 0.0
    %v1997 = vand.u32 %v139, 4294901760
    %1998 = vmatpush1.msra.mxu0 %v1997
    %1999 = vmatprep.subr.mxu0 0.0
    %v2000 = vand.u32 %v140, 4294901760
    %2001 = vmatpush1.msra.mxu0 %v2000
    %2002 = vmatprep.subr.mxu0 0.0
    %v2003 = vand.u32 %v141, 4294901760
    %2004 = vmatpush1.msra.mxu0 %v2003
    %2005 = vmatprep.subr.mxu0 0.0
    %v2006 = vand.u32 %v142, 4294901760
    %2007 = vmatpush1.msra.mxu0 %v2006
    %2008 = vmatprep.subr.mxu0 0.0
    %v2009 = vand.u32 %v143, 4294901760
    %2010 = vmatpush1.msra.mxu0 %v2009
    %2011 = vmatprep.subr.mxu0 0.0
    %v2012 = vand.u32 %v144, 4294901760
    %2013 = vmatpush1.msra.mxu0 %v2012
    %2014 = vmatprep.subr.mxu0 0.0
    %v2015 = vand.u32 %v145, 4294901760
    %2016 = vmatpush1.msra.mxu0 %v2015
    %2017 = vmatprep.subr.mxu0 0.0
    %v2018 = vand.u32 %v146, 4294901760
    %2019 = vmatpush1.msra.mxu0 %v2018
    %2020 = vmatprep.subr.mxu0 0.0
    %v2021 = vand.u32 %v147, 4294901760
    %2022 = vmatpush1.msra.mxu0 %v2021
    %2023 = vmatprep.subr.mxu0 0.0
    %v2024 = vand.u32 %v148, 4294901760
    %2025 = vmatpush1.msra.mxu0 %v2024
    %2026 = vmatprep.subr.mxu0 0.0
    %v2027 = vand.u32 %v149, 4294901760
    %2028 = vmatpush1.msra.mxu0 %v2027
    %2029 = vmatprep.subr.mxu0 0.0
    %v2030 = vand.u32 %v150, 4294901760
    %2031 = vmatpush1.msra.mxu0 %v2030
    %2032 = vmatprep.subr.mxu0 0.0
    %v2033 = vand.u32 %v151, 4294901760
    %2034 = vmatpush1.msra.mxu0 %v2033
    %2035 = vmatprep.subr.mxu0 0.0
    %v2036 = vand.u32 %v152, 4294901760
    %2037 = vmatpush1.msra.mxu0 %v2036
    %2038 = vmatprep.subr.mxu0 0.0
    %v2039 = vand.u32 %v153, 4294901760
    %2040 = vmatpush1.msra.mxu0 %v2039
    %2041 = vmatprep.subr.mxu0 0.0
    %v2042 = vand.u32 %v154, 4294901760
    %2043 = vmatpush1.msra.mxu0 %v2042
    %v2044 = vand.u32 %v78, 4294901760
    %2045 = vmatprep.mubr.f32.mxu0 %v2044
    %v2046 = vand.u32 %v77, 4294901760
    %2047 = vmatmul.mubr.f32.gmra.mrb[0].mxu0 %v2046
    %v2048 = vpop.f32.mrb[0].mxu0
    %v2049 = vadd.f32 %v1938, %v2048
    %v2050 = vpop.f32.mrb[0].mxu0
    %v2051 = vand.u32 %v86, 4294901760
    %2052 = vmatprep.mubr.f32.mxu0 %v2051
    %v2053 = vand.u32 %v85, 4294901760
    %2054 = vmatmul.mubr.f32.gmra.mrb[0].mxu0 %v2053
    %v2055 = vpop.f32.mrb[0].mxu0
    %v2056 = vadd.f32 %v1945, %v2055
    %v2057 = vpop.f32.mrb[0].mxu0
    %2058 = vdwg.mxu0
    %2059 = vmatprep.subr.mxu0 0.0
    %v2060 = vand.u32 %v155, 4294901760
    %2061 = vmatpush1.msra.mxu0 %v2060
    %2062 = vmatprep.subr.mxu0 0.0
    %v2063 = vand.u32 %v156, 4294901760
    %2064 = vmatpush1.msra.mxu0 %v2063
    %2065 = vmatprep.subr.mxu0 0.0
    %v2066 = vand.u32 %v157, 4294901760
    %2067 = vmatpush1.msra.mxu0 %v2066
    %2068 = vmatprep.subr.mxu0 0.0
    %v2069 = vand.u32 %v158, 4294901760
    %2070 = vmatpush1.msra.mxu0 %v2069
    %2071 = vmatprep.subr.mxu0 0.0
    %v2072 = vand.u32 %v159, 4294901760
    %2073 = vmatpush1.msra.mxu0 %v2072
    %2074 = vmatprep.subr.mxu0 0.0
    %v2075 = vand.u32 %v160, 4294901760
    %2076 = vmatpush1.msra.mxu0 %v2075
    %2077 = vmatprep.subr.mxu0 0.0
    %v2078 = vand.u32 %v161, 4294901760
    %2079 = vmatpush1.msra.mxu0 %v2078
    %2080 = vmatprep.subr.mxu0 0.0
    %v2081 = vand.u32 %v162, 4294901760
    %2082 = vmatpush1.msra.mxu0 %v2081
    %2083 = vmatprep.subr.mxu0 0.0
    %v2084 = vand.u32 %v163, 4294901760
    %2085 = vmatpush1.msra.mxu0 %v2084
    %2086 = vmatprep.subr.mxu0 0.0
    %v2087 = vand.u32 %v164, 4294901760
    %2088 = vmatpush1.msra.mxu0 %v2087
    %2089 = vmatprep.subr.mxu0 0.0
    %v2090 = vand.u32 %v165, 4294901760
    %2091 = vmatpush1.msra.mxu0 %v2090
    %2092 = vmatprep.subr.mxu0 0.0
    %v2093 = vand.u32 %v166, 4294901760
    %2094 = vmatpush1.msra.mxu0 %v2093
    %2095 = vmatprep.subr.mxu0 0.0
    %v2096 = vand.u32 %v167, 4294901760
    %2097 = vmatpush1.msra.mxu0 %v2096
    %2098 = vmatprep.subr.mxu0 0.0
    %v2099 = vand.u32 %v168, 4294901760
    %2100 = vmatpush1.msra.mxu0 %v2099
    %2101 = vmatprep.subr.mxu0 0.0
    %v2102 = vand.u32 %v169, 4294901760
    %2103 = vmatpush1.msra.mxu0 %v2102
    %2104 = vmatprep.subr.mxu0 0.0
    %v2105 = vand.u32 %v170, 4294901760
    %2106 = vmatpush1.msra.mxu0 %v2105
    %2107 = vmatprep.subr.mxu0 0.0
    %v2108 = vand.u32 %v171, 4294901760
    %2109 = vmatpush1.msra.mxu0 %v2108
    %2110 = vmatprep.subr.mxu0 0.0
    %v2111 = vand.u32 %v172, 4294901760
    %2112 = vmatpush1.msra.mxu0 %v2111
    %2113 = vmatprep.subr.mxu0 0.0
    %v2114 = vand.u32 %v173, 4294901760
    %2115 = vmatpush1.msra.mxu0 %v2114
    %2116 = vmatprep.subr.mxu0 0.0
    %v2117 = vand.u32 %v174, 4294901760
    %2118 = vmatpush1.msra.mxu0 %v2117
    %2119 = vmatprep.subr.mxu0 0.0
    %v2120 = vand.u32 %v175, 4294901760
    %2121 = vmatpush1.msra.mxu0 %v2120
    %2122 = vmatprep.subr.mxu0 0.0
    %v2123 = vand.u32 %v176, 4294901760
    %2124 = vmatpush1.msra.mxu0 %v2123
    %2125 = vmatprep.subr.mxu0 0.0
    %v2126 = vand.u32 %v177, 4294901760
    %2127 = vmatpush1.msra.mxu0 %v2126
    %2128 = vmatprep.subr.mxu0 0.0
    %v2129 = vand.u32 %v178, 4294901760
    %2130 = vmatpush1.msra.mxu0 %v2129
    %2131 = vmatprep.subr.mxu0 0.0
    %v2132 = vand.u32 %v179, 4294901760
    %2133 = vmatpush1.msra.mxu0 %v2132
    %2134 = vmatprep.subr.mxu0 0.0
    %v2135 = vand.u32 %v180, 4294901760
    %2136 = vmatpush1.msra.mxu0 %v2135
    %2137 = vmatprep.subr.mxu0 0.0
    %v2138 = vand.u32 %v181, 4294901760
    %2139 = vmatpush1.msra.mxu0 %v2138
    %2140 = vmatprep.subr.mxu0 0.0
    %v2141 = vand.u32 %v182, 4294901760
    %2142 = vmatpush1.msra.mxu0 %v2141
    %2143 = vmatprep.subr.mxu0 0.0
    %v2144 = vand.u32 %v183, 4294901760
    %2145 = vmatpush1.msra.mxu0 %v2144
    %2146 = vmatprep.subr.mxu0 0.0
    %v2147 = vand.u32 %v184, 4294901760
    %2148 = vmatpush1.msra.mxu0 %v2147
    %2149 = vmatprep.subr.mxu0 0.0
    %v2150 = vand.u32 %v185, 4294901760
    %2151 = vmatpush1.msra.mxu0 %v2150
    %2152 = vmatprep.subr.mxu0 0.0
    %v2153 = vand.u32 %v186, 4294901760
    %2154 = vmatpush1.msra.mxu0 %v2153
    %v2155 = vand.u32 %v80, 4294901760
    %v2156 = vsub.f32 %v80, %v2155
    %v2157 = vand.u32 %v2156, 4294901760
    %v2158 = vsub.f32 %v2156, %v2157
    %v2159 = vand.u32 %v2158, 4294901760
    %2160 = vmatprep.mubr.f32.mxu0 %v2159
    %v2161 = vand.u32 %v79, 4294901760
    %v2162 = vsub.f32 %v79, %v2161
    %v2163 = vand.u32 %v2162, 4294901760
    %v2164 = vsub.f32 %v2162, %v2163
    %v2165 = vand.u32 %v2164, 4294901760
    %2166 = vmatmul.mubr.f32.gmra.mrb[0].mxu0 %v2165
    %v2167 = vpop.f32.mrb[0].mxu0
    %v2168 = vadd.f32 %v2049, %v2167
    %v2169 = vpop.f32.mrb[0].mxu0
    %v2170 = vand.u32 %v88, 4294901760
    %v2171 = vsub.f32 %v88, %v2170
    %v2172 = vand.u32 %v2171, 4294901760
    %v2173 = vsub.f32 %v2171, %v2172
    %v2174 = vand.u32 %v2173, 4294901760
    %2175 = vmatprep.mubr.f32.mxu0 %v2174
    %v2176 = vand.u32 %v87, 4294901760
    %v2177 = vsub.f32 %v87, %v2176
    %v2178 = vand.u32 %v2177, 4294901760
    %v2179 = vsub.f32 %v2177, %v2178
    %v2180 = vand.u32 %v2179, 4294901760
    %2181 = vmatmul.mubr.f32.gmra.mrb[0].mxu0 %v2180
    %v2182 = vpop.f32.mrb[0].mxu0
    %v2183 = vadd.f32 %v2056, %v2182
    %v2184 = vpop.f32.mrb[0].mxu0
    %2185 = vdwg.mxu0
    %2186 = vmatprep.subr.mxu0 0.0
    %v2187 = vand.u32 %v155, 4294901760
    %v2188 = vsub.f32 %v155, %v2187
    %v2189 = vand.u32 %v2188, 4294901760
    %v2190 = vsub.f32 %v2188, %v2189
    %v2191 = vand.u32 %v2190, 4294901760
    %2192 = vmatpush1.msra.mxu0 %v2191
    %2193 = vmatprep.subr.mxu0 0.0
    %v2194 = vand.u32 %v156, 4294901760
    %v2195 = vsub.f32 %v156, %v2194
    %v2196 = vand.u32 %v2195, 4294901760
    %v2197 = vsub.f32 %v2195, %v2196
    %v2198 = vand.u32 %v2197, 4294901760
    %2199 = vmatpush1.msra.mxu0 %v2198
    %2200 = vmatprep.subr.mxu0 0.0
    %v2201 = vand.u32 %v157, 4294901760
    %v2202 = vsub.f32 %v157, %v2201
    %v2203 = vand.u32 %v2202, 4294901760
    %v2204 = vsub.f32 %v2202, %v2203
    %v2205 = vand.u32 %v2204, 4294901760
    %2206 = vmatpush1.msra.mxu0 %v2205
    %2207 = vmatprep.subr.mxu0 0.0
    %v2208 = vand.u32 %v158, 4294901760
    %v2209 = vsub.f32 %v158, %v2208
    %v2210 = vand.u32 %v2209, 4294901760
    %v2211 = vsub.f32 %v2209, %v2210
    %v2212 = vand.u32 %v2211, 4294901760
    %2213 = vmatpush1.msra.mxu0 %v2212
    %2214 = vmatprep.subr.mxu0 0.0
    %v2215 = vand.u32 %v159, 4294901760
    %v2216 = vsub.f32 %v159, %v2215
    %v2217 = vand.u32 %v2216, 4294901760
    %v2218 = vsub.f32 %v2216, %v2217
    %v2219 = vand.u32 %v2218, 4294901760
    %2220 = vmatpush1.msra.mxu0 %v2219
    %2221 = vmatprep.subr.mxu0 0.0
    %v2222 = vand.u32 %v160, 4294901760
    %v2223 = vsub.f32 %v160, %v2222
    %v2224 = vand.u32 %v2223, 4294901760
    %v2225 = vsub.f32 %v2223, %v2224
    %v2226 = vand.u32 %v2225, 4294901760
    %2227 = vmatpush1.msra.mxu0 %v2226
    %2228 = vmatprep.subr.mxu0 0.0
    %v2229 = vand.u32 %v161, 4294901760
    %v2230 = vsub.f32 %v161, %v2229
    %v2231 = vand.u32 %v2230, 4294901760
    %v2232 = vsub.f32 %v2230, %v2231
    %v2233 = vand.u32 %v2232, 4294901760
    %2234 = vmatpush1.msra.mxu0 %v2233
    %2235 = vmatprep.subr.mxu0 0.0
    %v2236 = vand.u32 %v162, 4294901760
    %v2237 = vsub.f32 %v162, %v2236
    %v2238 = vand.u32 %v2237, 4294901760
    %v2239 = vsub.f32 %v2237, %v2238
    %v2240 = vand.u32 %v2239, 4294901760
    %2241 = vmatpush1.msra.mxu0 %v2240
    %2242 = vmatprep.subr.mxu0 0.0
    %v2243 = vand.u32 %v163, 4294901760
    %v2244 = vsub.f32 %v163, %v2243
    %v2245 = vand.u32 %v2244, 4294901760
    %v2246 = vsub.f32 %v2244, %v2245
    %v2247 = vand.u32 %v2246, 4294901760
    %2248 = vmatpush1.msra.mxu0 %v2247
    %2249 = vmatprep.subr.mxu0 0.0
    %v2250 = vand.u32 %v164, 4294901760
    %v2251 = vsub.f32 %v164, %v2250
    %v2252 = vand.u32 %v2251, 4294901760
    %v2253 = vsub.f32 %v2251, %v2252
    %v2254 = vand.u32 %v2253, 4294901760
    %2255 = vmatpush1.msra.mxu0 %v2254
    %2256 = vmatprep.subr.mxu0 0.0
    %v2257 = vand.u32 %v165, 4294901760
    %v2258 = vsub.f32 %v165, %v2257
    %v2259 = vand.u32 %v2258, 4294901760
    %v2260 = vsub.f32 %v2258, %v2259
    %v2261 = vand.u32 %v2260, 4294901760
    %2262 = vmatpush1.msra.mxu0 %v2261
    %2263 = vmatprep.subr.mxu0 0.0
    %v2264 = vand.u32 %v166, 4294901760
    %v2265 = vsub.f32 %v166, %v2264
    %v2266 = vand.u32 %v2265, 4294901760
    %v2267 = vsub.f32 %v2265, %v2266
    %v2268 = vand.u32 %v2267, 4294901760
    %2269 = vmatpush1.msra.mxu0 %v2268
    %2270 = vmatprep.subr.mxu0 0.0
    %v2271 = vand.u32 %v167, 4294901760
    %v2272 = vsub.f32 %v167, %v2271
    %v2273 = vand.u32 %v2272, 4294901760
    %v2274 = vsub.f32 %v2272, %v2273
    %v2275 = vand.u32 %v2274, 4294901760
    %2276 = vmatpush1.msra.mxu0 %v2275
    %2277 = vmatprep.subr.mxu0 0.0
    %v2278 = vand.u32 %v168, 4294901760
    %v2279 = vsub.f32 %v168, %v2278
    %v2280 = vand.u32 %v2279, 4294901760
    %v2281 = vsub.f32 %v2279, %v2280
    %v2282 = vand.u32 %v2281, 4294901760
    %2283 = vmatpush1.msra.mxu0 %v2282
    %2284 = vmatprep.subr.mxu0 0.0
    %v2285 = vand.u32 %v169, 4294901760
    %v2286 = vsub.f32 %v169, %v2285
    %v2287 = vand.u32 %v2286, 4294901760
    %v2288 = vsub.f32 %v2286, %v2287
    %v2289 = vand.u32 %v2288, 4294901760
    %2290 = vmatpush1.msra.mxu0 %v2289
    %2291 = vmatprep.subr.mxu0 0.0
    %v2292 = vand.u32 %v170, 4294901760
    %v2293 = vsub.f32 %v170, %v2292
    %v2294 = vand.u32 %v2293, 4294901760
    %v2295 = vsub.f32 %v2293, %v2294
    %v2296 = vand.u32 %v2295, 4294901760
    %2297 = vmatpush1.msra.mxu0 %v2296
    %2298 = vmatprep.subr.mxu0 0.0
    %v2299 = vand.u32 %v171, 4294901760
    %v2300 = vsub.f32 %v171, %v2299
    %v2301 = vand.u32 %v2300, 4294901760
    %v2302 = vsub.f32 %v2300, %v2301
    %v2303 = vand.u32 %v2302, 4294901760
    %2304 = vmatpush1.msra.mxu0 %v2303
    %2305 = vmatprep.subr.mxu0 0.0
    %v2306 = vand.u32 %v172, 4294901760
    %v2307 = vsub.f32 %v172, %v2306
    %v2308 = vand.u32 %v2307, 4294901760
    %v2309 = vsub.f32 %v2307, %v2308
    %v2310 = vand.u32 %v2309, 4294901760
    %2311 = vmatpush1.msra.mxu0 %v2310
    %2312 = vmatprep.subr.mxu0 0.0
    %v2313 = vand.u32 %v173, 4294901760
    %v2314 = vsub.f32 %v173, %v2313
    %v2315 = vand.u32 %v2314, 4294901760
    %v2316 = vsub.f32 %v2314, %v2315
    %v2317 = vand.u32 %v2316, 4294901760
    %2318 = vmatpush1.msra.mxu0 %v2317
    %2319 = vmatprep.subr.mxu0 0.0
    %v2320 = vand.u32 %v174, 4294901760
    %v2321 = vsub.f32 %v174, %v2320
    %v2322 = vand.u32 %v2321, 4294901760
    %v2323 = vsub.f32 %v2321, %v2322
    %v2324 = vand.u32 %v2323, 4294901760
    %2325 = vmatpush1.msra.mxu0 %v2324
    %2326 = vmatprep.subr.mxu0 0.0
    %v2327 = vand.u32 %v175, 4294901760
    %v2328 = vsub.f32 %v175, %v2327
    %v2329 = vand.u32 %v2328, 4294901760
    %v2330 = vsub.f32 %v2328, %v2329
    %v2331 = vand.u32 %v2330, 4294901760
    %2332 = vmatpush1.msra.mxu0 %v2331
    %2333 = vmatprep.subr.mxu0 0.0
    %v2334 = vand.u32 %v176, 4294901760
    %v2335 = vsub.f32 %v176, %v2334
    %v2336 = vand.u32 %v2335, 4294901760
    %v2337 = vsub.f32 %v2335, %v2336
    %v2338 = vand.u32 %v2337, 4294901760
    %2339 = vmatpush1.msra.mxu0 %v2338
    %2340 = vmatprep.subr.mxu0 0.0
    %v2341 = vand.u32 %v177, 4294901760
    %v2342 = vsub.f32 %v177, %v2341
    %v2343 = vand.u32 %v2342, 4294901760
    %v2344 = vsub.f32 %v2342, %v2343
    %v2345 = vand.u32 %v2344, 4294901760
    %2346 = vmatpush1.msra.mxu0 %v2345
    %2347 = vmatprep.subr.mxu0 0.0
    %v2348 = vand.u32 %v178, 4294901760
    %v2349 = vsub.f32 %v178, %v2348
    %v2350 = vand.u32 %v2349, 4294901760
    %v2351 = vsub.f32 %v2349, %v2350
    %v2352 = vand.u32 %v2351, 4294901760
    %2353 = vmatpush1.msra.mxu0 %v2352
    %2354 = vmatprep.subr.mxu0 0.0
    %v2355 = vand.u32 %v179, 4294901760
    %v2356 = vsub.f32 %v179, %v2355
    %v2357 = vand.u32 %v2356, 4294901760
    %v2358 = vsub.f32 %v2356, %v2357
    %v2359 = vand.u32 %v2358, 4294901760
    %2360 = vmatpush1.msra.mxu0 %v2359
    %2361 = vmatprep.subr.mxu0 0.0
    %v2362 = vand.u32 %v180, 4294901760
    %v2363 = vsub.f32 %v180, %v2362
    %v2364 = vand.u32 %v2363, 4294901760
    %v2365 = vsub.f32 %v2363, %v2364
    %v2366 = vand.u32 %v2365, 4294901760
    %2367 = vmatpush1.msra.mxu0 %v2366
    %2368 = vmatprep.subr.mxu0 0.0
    %v2369 = vand.u32 %v181, 4294901760
    %v2370 = vsub.f32 %v181, %v2369
    %v2371 = vand.u32 %v2370, 4294901760
    %v2372 = vsub.f32 %v2370, %v2371
    %v2373 = vand.u32 %v2372, 4294901760
    %2374 = vmatpush1.msra.mxu0 %v2373
    %2375 = vmatprep.subr.mxu0 0.0
    %v2376 = vand.u32 %v182, 4294901760
    %v2377 = vsub.f32 %v182, %v2376
    %v2378 = vand.u32 %v2377, 4294901760
    %v2379 = vsub.f32 %v2377, %v2378
    %v2380 = vand.u32 %v2379, 4294901760
    %2381 = vmatpush1.msra.mxu0 %v2380
    %2382 = vmatprep.subr.mxu0 0.0
    %v2383 = vand.u32 %v183, 4294901760
    %v2384 = vsub.f32 %v183, %v2383
    %v2385 = vand.u32 %v2384, 4294901760
    %v2386 = vsub.f32 %v2384, %v2385
    %v2387 = vand.u32 %v2386, 4294901760
    %2388 = vmatpush1.msra.mxu0 %v2387
    %2389 = vmatprep.subr.mxu0 0.0
    %v2390 = vand.u32 %v184, 4294901760
    %v2391 = vsub.f32 %v184, %v2390
    %v2392 = vand.u32 %v2391, 4294901760
    %v2393 = vsub.f32 %v2391, %v2392
    %v2394 = vand.u32 %v2393, 4294901760
    %2395 = vmatpush1.msra.mxu0 %v2394
    %2396 = vmatprep.subr.mxu0 0.0
    %v2397 = vand.u32 %v185, 4294901760
    %v2398 = vsub.f32 %v185, %v2397
    %v2399 = vand.u32 %v2398, 4294901760
    %v2400 = vsub.f32 %v2398, %v2399
    %v2401 = vand.u32 %v2400, 4294901760
    %2402 = vmatpush1.msra.mxu0 %v2401
    %2403 = vmatprep.subr.mxu0 0.0
    %v2404 = vand.u32 %v186, 4294901760
    %v2405 = vsub.f32 %v186, %v2404
    %v2406 = vand.u32 %v2405, 4294901760
    %v2407 = vsub.f32 %v2405, %v2406
    %v2408 = vand.u32 %v2407, 4294901760
    %2409 = vmatpush1.msra.mxu0 %v2408
    %v2410 = vand.u32 %v80, 4294901760
    %2411 = vmatprep.mubr.f32.mxu0 %v2410
    %v2412 = vand.u32 %v79, 4294901760
    %2413 = vmatmul.mubr.f32.gmra.mrb[0].mxu0 %v2412
    %v2414 = vpop.f32.mrb[0].mxu0
    %v2415 = vadd.f32 %v2168, %v2414
    %v2416 = vpop.f32.mrb[0].mxu0
    %v2417 = vand.u32 %v88, 4294901760
    %2418 = vmatprep.mubr.f32.mxu0 %v2417
    %v2419 = vand.u32 %v87, 4294901760
    %2420 = vmatmul.mubr.f32.gmra.mrb[0].mxu0 %v2419
    %v2421 = vpop.f32.mrb[0].mxu0
    %v2422 = vadd.f32 %v2183, %v2421
    %v2423 = vpop.f32.mrb[0].mxu0
    %2424 = vdwg.mxu0
    %2425 = vmatprep.subr.mxu0 0.0
    %v2426 = vand.u32 %v155, 4294901760
    %v2427 = vsub.f32 %v155, %v2426
    %2428 = vmatpush1.msra.mxu0 %v2427
    %2429 = vmatprep.subr.mxu0 0.0
    %v2430 = vand.u32 %v156, 4294901760
    %v2431 = vsub.f32 %v156, %v2430
    %2432 = vmatpush1.msra.mxu0 %v2431
    %2433 = vmatprep.subr.mxu0 0.0
    %v2434 = vand.u32 %v157, 4294901760
    %v2435 = vsub.f32 %v157, %v2434
    %2436 = vmatpush1.msra.mxu0 %v2435
    %2437 = vmatprep.subr.mxu0 0.0
    %v2438 = vand.u32 %v158, 4294901760
    %v2439 = vsub.f32 %v158, %v2438
    %2440 = vmatpush1.msra.mxu0 %v2439
    %2441 = vmatprep.subr.mxu0 0.0
    %v2442 = vand.u32 %v159, 4294901760
    %v2443 = vsub.f32 %v159, %v2442
    %2444 = vmatpush1.msra.mxu0 %v2443
    %2445 = vmatprep.subr.mxu0 0.0
    %v2446 = vand.u32 %v160, 4294901760
    %v2447 = vsub.f32 %v160, %v2446
    %2448 = vmatpush1.msra.mxu0 %v2447
    %2449 = vmatprep.subr.mxu0 0.0
    %v2450 = vand.u32 %v161, 4294901760
    %v2451 = vsub.f32 %v161, %v2450
    %2452 = vmatpush1.msra.mxu0 %v2451
    %2453 = vmatprep.subr.mxu0 0.0
    %v2454 = vand.u32 %v162, 4294901760
    %v2455 = vsub.f32 %v162, %v2454
    %2456 = vmatpush1.msra.mxu0 %v2455
    %2457 = vmatprep.subr.mxu0 0.0
    %v2458 = vand.u32 %v163, 4294901760
    %v2459 = vsub.f32 %v163, %v2458
    %2460 = vmatpush1.msra.mxu0 %v2459
    %2461 = vmatprep.subr.mxu0 0.0
    %v2462 = vand.u32 %v164, 4294901760
    %v2463 = vsub.f32 %v164, %v2462
    %2464 = vmatpush1.msra.mxu0 %v2463
    %2465 = vmatprep.subr.mxu0 0.0
    %v2466 = vand.u32 %v165, 4294901760
    %v2467 = vsub.f32 %v165, %v2466
    %2468 = vmatpush1.msra.mxu0 %v2467
    %2469 = vmatprep.subr.mxu0 0.0
    %v2470 = vand.u32 %v166, 4294901760
    %v2471 = vsub.f32 %v166, %v2470
    %2472 = vmatpush1.msra.mxu0 %v2471
    %2473 = vmatprep.subr.mxu0 0.0
    %v2474 = vand.u32 %v167, 4294901760
    %v2475 = vsub.f32 %v167, %v2474
    %2476 = vmatpush1.msra.mxu0 %v2475
    %2477 = vmatprep.subr.mxu0 0.0
    %v2478 = vand.u32 %v168, 4294901760
    %v2479 = vsub.f32 %v168, %v2478
    %2480 = vmatpush1.msra.mxu0 %v2479
    %2481 = vmatprep.subr.mxu0 0.0
    %v2482 = vand.u32 %v169, 4294901760
    %v2483 = vsub.f32 %v169, %v2482
    %2484 = vmatpush1.msra.mxu0 %v2483
    %2485 = vmatprep.subr.mxu0 0.0
    %v2486 = vand.u32 %v170, 4294901760
    %v2487 = vsub.f32 %v170, %v2486
    %2488 = vmatpush1.msra.mxu0 %v2487
    %2489 = vmatprep.subr.mxu0 0.0
    %v2490 = vand.u32 %v171, 4294901760
    %v2491 = vsub.f32 %v171, %v2490
    %2492 = vmatpush1.msra.mxu0 %v2491
    %2493 = vmatprep.subr.mxu0 0.0
    %v2494 = vand.u32 %v172, 4294901760
    %v2495 = vsub.f32 %v172, %v2494
    %2496 = vmatpush1.msra.mxu0 %v2495
    %2497 = vmatprep.subr.mxu0 0.0
    %v2498 = vand.u32 %v173, 4294901760
    %v2499 = vsub.f32 %v173, %v2498
    %2500 = vmatpush1.msra.mxu0 %v2499
    %2501 = vmatprep.subr.mxu0 0.0
    %v2502 = vand.u32 %v174, 4294901760
    %v2503 = vsub.f32 %v174, %v2502
    %2504 = vmatpush1.msra.mxu0 %v2503
    %2505 = vmatprep.subr.mxu0 0.0
    %v2506 = vand.u32 %v175, 4294901760
    %v2507 = vsub.f32 %v175, %v2506
    %2508 = vmatpush1.msra.mxu0 %v2507
    %2509 = vmatprep.subr.mxu0 0.0
    %v2510 = vand.u32 %v176, 4294901760
    %v2511 = vsub.f32 %v176, %v2510
    %2512 = vmatpush1.msra.mxu0 %v2511
    %2513 = vmatprep.subr.mxu0 0.0
    %v2514 = vand.u32 %v177, 4294901760
    %v2515 = vsub.f32 %v177, %v2514
    %2516 = vmatpush1.msra.mxu0 %v2515
    %2517 = vmatprep.subr.mxu0 0.0
    %v2518 = vand.u32 %v178, 4294901760
    %v2519 = vsub.f32 %v178, %v2518
    %2520 = vmatpush1.msra.mxu0 %v2519
    %2521 = vmatprep.subr.mxu0 0.0
    %v2522 = vand.u32 %v179, 4294901760
    %v2523 = vsub.f32 %v179, %v2522
    %2524 = vmatpush1.msra.mxu0 %v2523
    %2525 = vmatprep.subr.mxu0 0.0
    %v2526 = vand.u32 %v180, 4294901760
    %v2527 = vsub.f32 %v180, %v2526
    %2528 = vmatpush1.msra.mxu0 %v2527
    %2529 = vmatprep.subr.mxu0 0.0
    %v2530 = vand.u32 %v181, 4294901760
    %v2531 = vsub.f32 %v181, %v2530
    %2532 = vmatpush1.msra.mxu0 %v2531
    %2533 = vmatprep.subr.mxu0 0.0
    %v2534 = vand.u32 %v182, 4294901760
    %v2535 = vsub.f32 %v182, %v2534
    %2536 = vmatpush1.msra.mxu0 %v2535
    %2537 = vmatprep.subr.mxu0 0.0
    %v2538 = vand.u32 %v183, 4294901760
    %v2539 = vsub.f32 %v183, %v2538
    %2540 = vmatpush1.msra.mxu0 %v2539
    %2541 = vmatprep.subr.mxu0 0.0
    %v2542 = vand.u32 %v184, 4294901760
    %v2543 = vsub.f32 %v184, %v2542
    %2544 = vmatpush1.msra.mxu0 %v2543
    %2545 = vmatprep.subr.mxu0 0.0
    %v2546 = vand.u32 %v185, 4294901760
    %v2547 = vsub.f32 %v185, %v2546
    %2548 = vmatpush1.msra.mxu0 %v2547
    %2549 = vmatprep.subr.mxu0 0.0
    %v2550 = vand.u32 %v186, 4294901760
    %v2551 = vsub.f32 %v186, %v2550
    %2552 = vmatpush1.msra.mxu0 %v2551
    %v2553 = vand.u32 %v80, 4294901760
    %v2554 = vsub.f32 %v80, %v2553
    %2555 = vmatprep.mubr.f32.mxu0 %v2554
    %v2556 = vand.u32 %v79, 4294901760
    %v2557 = vsub.f32 %v79, %v2556
    %2558 = vmatmul.mubr.f32.gmra.mrb[0].mxu0 %v2557
    %v2559 = vpop.f32.mrb[0].mxu0
    %v2560 = vadd.f32 %v2415, %v2559
    %v2561 = vpop.f32.mrb[0].mxu0
    %v2562 = vand.u32 %v88, 4294901760
    %v2563 = vsub.f32 %v88, %v2562
    %2564 = vmatprep.mubr.f32.mxu0 %v2563
    %v2565 = vand.u32 %v87, 4294901760
    %v2566 = vsub.f32 %v87, %v2565
    %2567 = vmatmul.mubr.f32.gmra.mrb[0].mxu0 %v2566
    %v2568 = vpop.f32.mrb[0].mxu0
    %v2569 = vadd.f32 %v2422, %v2568
    %v2570 = vpop.f32.mrb[0].mxu0
    %2571 = vdwg.mxu0
    %2572 = vmatprep.subr.mxu0 0.0
    %v2573 = vand.u32 %v155, 4294901760
    %2574 = vmatpush1.msra.mxu0 %v2573
    %2575 = vmatprep.subr.mxu0 0.0
    %v2576 = vand.u32 %v156, 4294901760
    %2577 = vmatpush1.msra.mxu0 %v2576
    %2578 = vmatprep.subr.mxu0 0.0
    %v2579 = vand.u32 %v157, 4294901760
    %2580 = vmatpush1.msra.mxu0 %v2579
    %2581 = vmatprep.subr.mxu0 0.0
    %v2582 = vand.u32 %v158, 4294901760
    %2583 = vmatpush1.msra.mxu0 %v2582
    %2584 = vmatprep.subr.mxu0 0.0
    %v2585 = vand.u32 %v159, 4294901760
    %2586 = vmatpush1.msra.mxu0 %v2585
    %2587 = vmatprep.subr.mxu0 0.0
    %v2588 = vand.u32 %v160, 4294901760
    %2589 = vmatpush1.msra.mxu0 %v2588
    %2590 = vmatprep.subr.mxu0 0.0
    %v2591 = vand.u32 %v161, 4294901760
    %2592 = vmatpush1.msra.mxu0 %v2591
    %2593 = vmatprep.subr.mxu0 0.0
    %v2594 = vand.u32 %v162, 4294901760
    %2595 = vmatpush1.msra.mxu0 %v2594
    %2596 = vmatprep.subr.mxu0 0.0
    %v2597 = vand.u32 %v163, 4294901760
    %2598 = vmatpush1.msra.mxu0 %v2597
    %2599 = vmatprep.subr.mxu0 0.0
    %v2600 = vand.u32 %v164, 4294901760
    %2601 = vmatpush1.msra.mxu0 %v2600
    %2602 = vmatprep.subr.mxu0 0.0
    %v2603 = vand.u32 %v165, 4294901760
    %2604 = vmatpush1.msra.mxu0 %v2603
    %2605 = vmatprep.subr.mxu0 0.0
    %v2606 = vand.u32 %v166, 4294901760
    %2607 = vmatpush1.msra.mxu0 %v2606
    %2608 = vmatprep.subr.mxu0 0.0
    %v2609 = vand.u32 %v167, 4294901760
    %2610 = vmatpush1.msra.mxu0 %v2609
    %2611 = vmatprep.subr.mxu0 0.0
    %v2612 = vand.u32 %v168, 4294901760
    %2613 = vmatpush1.msra.mxu0 %v2612
    %2614 = vmatprep.subr.mxu0 0.0
    %v2615 = vand.u32 %v169, 4294901760
    %2616 = vmatpush1.msra.mxu0 %v2615
    %2617 = vmatprep.subr.mxu0 0.0
    %v2618 = vand.u32 %v170, 4294901760
    %2619 = vmatpush1.msra.mxu0 %v2618
    %2620 = vmatprep.subr.mxu0 0.0
    %v2621 = vand.u32 %v171, 4294901760
    %2622 = vmatpush1.msra.mxu0 %v2621
    %2623 = vmatprep.subr.mxu0 0.0
    %v2624 = vand.u32 %v172, 4294901760
    %2625 = vmatpush1.msra.mxu0 %v2624
    %2626 = vmatprep.subr.mxu0 0.0
    %v2627 = vand.u32 %v173, 4294901760
    %2628 = vmatpush1.msra.mxu0 %v2627
    %2629 = vmatprep.subr.mxu0 0.0
    %v2630 = vand.u32 %v174, 4294901760
    %2631 = vmatpush1.msra.mxu0 %v2630
    %2632 = vmatprep.subr.mxu0 0.0
    %v2633 = vand.u32 %v175, 4294901760
    %2634 = vmatpush1.msra.mxu0 %v2633
    %2635 = vmatprep.subr.mxu0 0.0
    %v2636 = vand.u32 %v176, 4294901760
    %2637 = vmatpush1.msra.mxu0 %v2636
    %2638 = vmatprep.subr.mxu0 0.0
    %v2639 = vand.u32 %v177, 4294901760
    %2640 = vmatpush1.msra.mxu0 %v2639
    %2641 = vmatprep.subr.mxu0 0.0
    %v2642 = vand.u32 %v178, 4294901760
    %2643 = vmatpush1.msra.mxu0 %v2642
    %2644 = vmatprep.subr.mxu0 0.0
    %v2645 = vand.u32 %v179, 4294901760
    %2646 = vmatpush1.msra.mxu0 %v2645
    %2647 = vmatprep.subr.mxu0 0.0
    %v2648 = vand.u32 %v180, 4294901760
    %2649 = vmatpush1.msra.mxu0 %v2648
    %2650 = vmatprep.subr.mxu0 0.0
    %v2651 = vand.u32 %v181, 4294901760
    %2652 = vmatpush1.msra.mxu0 %v2651
    %2653 = vmatprep.subr.mxu0 0.0
    %v2654 = vand.u32 %v182, 4294901760
    %2655 = vmatpush1.msra.mxu0 %v2654
    %2656 = vmatprep.subr.mxu0 0.0
    %v2657 = vand.u32 %v183, 4294901760
    %2658 = vmatpush1.msra.mxu0 %v2657
    %2659 = vmatprep.subr.mxu0 0.0
    %v2660 = vand.u32 %v184, 4294901760
    %2661 = vmatpush1.msra.mxu0 %v2660
    %2662 = vmatprep.subr.mxu0 0.0
    %v2663 = vand.u32 %v185, 4294901760
    %2664 = vmatpush1.msra.mxu0 %v2663
    %2665 = vmatprep.subr.mxu0 0.0
    %v2666 = vand.u32 %v186, 4294901760
    %2667 = vmatpush1.msra.mxu0 %v2666
    %v2668 = vand.u32 %v80, 4294901760
    %v2669 = vsub.f32 %v80, %v2668
    %v2670 = vand.u32 %v2669, 4294901760
    %2671 = vmatprep.mubr.f32.mxu0 %v2670
    %v2672 = vand.u32 %v79, 4294901760
    %v2673 = vsub.f32 %v79, %v2672
    %v2674 = vand.u32 %v2673, 4294901760
    %2675 = vmatmul.mubr.f32.gmra.mrb[0].mxu0 %v2674
    %v2676 = vpop.f32.mrb[0].mxu0
    %v2677 = vadd.f32 %v2560, %v2676
    %v2678 = vpop.f32.mrb[0].mxu0
    %v2679 = vand.u32 %v88, 4294901760
    %v2680 = vsub.f32 %v88, %v2679
    %v2681 = vand.u32 %v2680, 4294901760
    %2682 = vmatprep.mubr.f32.mxu0 %v2681
    %v2683 = vand.u32 %v87, 4294901760
    %v2684 = vsub.f32 %v87, %v2683
    %v2685 = vand.u32 %v2684, 4294901760
    %2686 = vmatmul.mubr.f32.gmra.mrb[0].mxu0 %v2685
    %v2687 = vpop.f32.mrb[0].mxu0
    %v2688 = vadd.f32 %v2569, %v2687
    %v2689 = vpop.f32.mrb[0].mxu0
    %2690 = vdwg.mxu0
    %2691 = vmatprep.subr.mxu0 0.0
    %v2692 = vand.u32 %v155, 4294901760
    %v2693 = vsub.f32 %v155, %v2692
    %v2694 = vand.u32 %v2693, 4294901760
    %2695 = vmatpush1.msra.mxu0 %v2694
    %2696 = vmatprep.subr.mxu0 0.0
    %v2697 = vand.u32 %v156, 4294901760
    %v2698 = vsub.f32 %v156, %v2697
    %v2699 = vand.u32 %v2698, 4294901760
    %2700 = vmatpush1.msra.mxu0 %v2699
    %2701 = vmatprep.subr.mxu0 0.0
    %v2702 = vand.u32 %v157, 4294901760
    %v2703 = vsub.f32 %v157, %v2702
    %v2704 = vand.u32 %v2703, 4294901760
    %2705 = vmatpush1.msra.mxu0 %v2704
    %2706 = vmatprep.subr.mxu0 0.0
    %v2707 = vand.u32 %v158, 4294901760
    %v2708 = vsub.f32 %v158, %v2707
    %v2709 = vand.u32 %v2708, 4294901760
    %2710 = vmatpush1.msra.mxu0 %v2709
    %2711 = vmatprep.subr.mxu0 0.0
    %v2712 = vand.u32 %v159, 4294901760
    %v2713 = vsub.f32 %v159, %v2712
    %v2714 = vand.u32 %v2713, 4294901760
    %2715 = vmatpush1.msra.mxu0 %v2714
    %2716 = vmatprep.subr.mxu0 0.0
    %v2717 = vand.u32 %v160, 4294901760
    %v2718 = vsub.f32 %v160, %v2717
    %v2719 = vand.u32 %v2718, 4294901760
    %2720 = vmatpush1.msra.mxu0 %v2719
    %2721 = vmatprep.subr.mxu0 0.0
    %v2722 = vand.u32 %v161, 4294901760
    %v2723 = vsub.f32 %v161, %v2722
    %v2724 = vand.u32 %v2723, 4294901760
    %2725 = vmatpush1.msra.mxu0 %v2724
    %2726 = vmatprep.subr.mxu0 0.0
    %v2727 = vand.u32 %v162, 4294901760
    %v2728 = vsub.f32 %v162, %v2727
    %v2729 = vand.u32 %v2728, 4294901760
    %2730 = vmatpush1.msra.mxu0 %v2729
    %2731 = vmatprep.subr.mxu0 0.0
    %v2732 = vand.u32 %v163, 4294901760
    %v2733 = vsub.f32 %v163, %v2732
    %v2734 = vand.u32 %v2733, 4294901760
    %2735 = vmatpush1.msra.mxu0 %v2734
    %2736 = vmatprep.subr.mxu0 0.0
    %v2737 = vand.u32 %v164, 4294901760
    %v2738 = vsub.f32 %v164, %v2737
    %v2739 = vand.u32 %v2738, 4294901760
    %2740 = vmatpush1.msra.mxu0 %v2739
    %2741 = vmatprep.subr.mxu0 0.0
    %v2742 = vand.u32 %v165, 4294901760
    %v2743 = vsub.f32 %v165, %v2742
    %v2744 = vand.u32 %v2743, 4294901760
    %2745 = vmatpush1.msra.mxu0 %v2744
    %2746 = vmatprep.subr.mxu0 0.0
    %v2747 = vand.u32 %v166, 4294901760
    %v2748 = vsub.f32 %v166, %v2747
    %v2749 = vand.u32 %v2748, 4294901760
    %2750 = vmatpush1.msra.mxu0 %v2749
    %2751 = vmatprep.subr.mxu0 0.0
    %v2752 = vand.u32 %v167, 4294901760
    %v2753 = vsub.f32 %v167, %v2752
    %v2754 = vand.u32 %v2753, 4294901760
    %2755 = vmatpush1.msra.mxu0 %v2754
    %2756 = vmatprep.subr.mxu0 0.0
    %v2757 = vand.u32 %v168, 4294901760
    %v2758 = vsub.f32 %v168, %v2757
    %v2759 = vand.u32 %v2758, 4294901760
    %2760 = vmatpush1.msra.mxu0 %v2759
    %2761 = vmatprep.subr.mxu0 0.0
    %v2762 = vand.u32 %v169, 4294901760
    %v2763 = vsub.f32 %v169, %v2762
    %v2764 = vand.u32 %v2763, 4294901760
    %2765 = vmatpush1.msra.mxu0 %v2764
    %2766 = vmatprep.subr.mxu0 0.0
    %v2767 = vand.u32 %v170, 4294901760
    %v2768 = vsub.f32 %v170, %v2767
    %v2769 = vand.u32 %v2768, 4294901760
    %2770 = vmatpush1.msra.mxu0 %v2769
    %2771 = vmatprep.subr.mxu0 0.0
    %v2772 = vand.u32 %v171, 4294901760
    %v2773 = vsub.f32 %v171, %v2772
    %v2774 = vand.u32 %v2773, 4294901760
    %2775 = vmatpush1.msra.mxu0 %v2774
    %2776 = vmatprep.subr.mxu0 0.0
    %v2777 = vand.u32 %v172, 4294901760
    %v2778 = vsub.f32 %v172, %v2777
    %v2779 = vand.u32 %v2778, 4294901760
    %2780 = vmatpush1.msra.mxu0 %v2779
    %2781 = vmatprep.subr.mxu0 0.0
    %v2782 = vand.u32 %v173, 4294901760
    %v2783 = vsub.f32 %v173, %v2782
    %v2784 = vand.u32 %v2783, 4294901760
    %2785 = vmatpush1.msra.mxu0 %v2784
    %2786 = vmatprep.subr.mxu0 0.0
    %v2787 = vand.u32 %v174, 4294901760
    %v2788 = vsub.f32 %v174, %v2787
    %v2789 = vand.u32 %v2788, 4294901760
    %2790 = vmatpush1.msra.mxu0 %v2789
    %2791 = vmatprep.subr.mxu0 0.0
    %v2792 = vand.u32 %v175, 4294901760
    %v2793 = vsub.f32 %v175, %v2792
    %v2794 = vand.u32 %v2793, 4294901760
    %2795 = vmatpush1.msra.mxu0 %v2794
    %2796 = vmatprep.subr.mxu0 0.0
    %v2797 = vand.u32 %v176, 4294901760
    %v2798 = vsub.f32 %v176, %v2797
    %v2799 = vand.u32 %v2798, 4294901760
    %2800 = vmatpush1.msra.mxu0 %v2799
    %2801 = vmatprep.subr.mxu0 0.0
    %v2802 = vand.u32 %v177, 4294901760
    %v2803 = vsub.f32 %v177, %v2802
    %v2804 = vand.u32 %v2803, 4294901760
    %2805 = vmatpush1.msra.mxu0 %v2804
    %2806 = vmatprep.subr.mxu0 0.0
    %v2807 = vand.u32 %v178, 4294901760
    %v2808 = vsub.f32 %v178, %v2807
    %v2809 = vand.u32 %v2808, 4294901760
    %2810 = vmatpush1.msra.mxu0 %v2809
    %2811 = vmatprep.subr.mxu0 0.0
    %v2812 = vand.u32 %v179, 4294901760
    %v2813 = vsub.f32 %v179, %v2812
    %v2814 = vand.u32 %v2813, 4294901760
    %2815 = vmatpush1.msra.mxu0 %v2814
    %2816 = vmatprep.subr.mxu0 0.0
    %v2817 = vand.u32 %v180, 4294901760
    %v2818 = vsub.f32 %v180, %v2817
    %v2819 = vand.u32 %v2818, 4294901760
    %2820 = vmatpush1.msra.mxu0 %v2819
    %2821 = vmatprep.subr.mxu0 0.0
    %v2822 = vand.u32 %v181, 4294901760
    %v2823 = vsub.f32 %v181, %v2822
    %v2824 = vand.u32 %v2823, 4294901760
    %2825 = vmatpush1.msra.mxu0 %v2824
    %2826 = vmatprep.subr.mxu0 0.0
    %v2827 = vand.u32 %v182, 4294901760
    %v2828 = vsub.f32 %v182, %v2827
    %v2829 = vand.u32 %v2828, 4294901760
    %2830 = vmatpush1.msra.mxu0 %v2829
    %2831 = vmatprep.subr.mxu0 0.0
    %v2832 = vand.u32 %v183, 4294901760
    %v2833 = vsub.f32 %v183, %v2832
    %v2834 = vand.u32 %v2833, 4294901760
    %2835 = vmatpush1.msra.mxu0 %v2834
    %2836 = vmatprep.subr.mxu0 0.0
    %v2837 = vand.u32 %v184, 4294901760
    %v2838 = vsub.f32 %v184, %v2837
    %v2839 = vand.u32 %v2838, 4294901760
    %2840 = vmatpush1.msra.mxu0 %v2839
    %2841 = vmatprep.subr.mxu0 0.0
    %v2842 = vand.u32 %v185, 4294901760
    %v2843 = vsub.f32 %v185, %v2842
    %v2844 = vand.u32 %v2843, 4294901760
    %2845 = vmatpush1.msra.mxu0 %v2844
    %2846 = vmatprep.subr.mxu0 0.0
    %v2847 = vand.u32 %v186, 4294901760
    %v2848 = vsub.f32 %v186, %v2847
    %v2849 = vand.u32 %v2848, 4294901760
    %2850 = vmatpush1.msra.mxu0 %v2849
    %v2851 = vand.u32 %v80, 4294901760
    %2852 = vmatprep.mubr.f32.mxu0 %v2851
    %v2853 = vand.u32 %v79, 4294901760
    %2854 = vmatmul.mubr.f32.gmra.mrb[0].mxu0 %v2853
    %v2855 = vpop.f32.mrb[0].mxu0
    %v2856 = vadd.f32 %v2677, %v2855
    %v2857 = vpop.f32.mrb[0].mxu0
    %v2858 = vand.u32 %v88, 4294901760
    %2859 = vmatprep.mubr.f32.mxu0 %v2858
    %v2860 = vand.u32 %v87, 4294901760
    %2861 = vmatmul.mubr.f32.gmra.mrb[0].mxu0 %v2860
    %v2862 = vpop.f32.mrb[0].mxu0
    %v2863 = vadd.f32 %v2688, %v2862
    %v2864 = vpop.f32.mrb[0].mxu0
    %2865 = vdwg.mxu0
    %2866 = vmatprep.subr.mxu0 0.0
    %v2867 = vand.u32 %v155, 4294901760
    %2868 = vmatpush1.msra.mxu0 %v2867
    %2869 = vmatprep.subr.mxu0 0.0
    %v2870 = vand.u32 %v156, 4294901760
    %2871 = vmatpush1.msra.mxu0 %v2870
    %2872 = vmatprep.subr.mxu0 0.0
    %v2873 = vand.u32 %v157, 4294901760
    %2874 = vmatpush1.msra.mxu0 %v2873
    %2875 = vmatprep.subr.mxu0 0.0
    %v2876 = vand.u32 %v158, 4294901760
    %2877 = vmatpush1.msra.mxu0 %v2876
    %2878 = vmatprep.subr.mxu0 0.0
    %v2879 = vand.u32 %v159, 4294901760
    %2880 = vmatpush1.msra.mxu0 %v2879
    %2881 = vmatprep.subr.mxu0 0.0
    %v2882 = vand.u32 %v160, 4294901760
    %2883 = vmatpush1.msra.mxu0 %v2882
    %2884 = vmatprep.subr.mxu0 0.0
    %v2885 = vand.u32 %v161, 4294901760
    %2886 = vmatpush1.msra.mxu0 %v2885
    %2887 = vmatprep.subr.mxu0 0.0
    %v2888 = vand.u32 %v162, 4294901760
    %2889 = vmatpush1.msra.mxu0 %v2888
    %2890 = vmatprep.subr.mxu0 0.0
    %v2891 = vand.u32 %v163, 4294901760
    %2892 = vmatpush1.msra.mxu0 %v2891
    %2893 = vmatprep.subr.mxu0 0.0
    %v2894 = vand.u32 %v164, 4294901760
    %2895 = vmatpush1.msra.mxu0 %v2894
    %2896 = vmatprep.subr.mxu0 0.0
    %v2897 = vand.u32 %v165, 4294901760
    %2898 = vmatpush1.msra.mxu0 %v2897
    %2899 = vmatprep.subr.mxu0 0.0
    %v2900 = vand.u32 %v166, 4294901760
    %2901 = vmatpush1.msra.mxu0 %v2900
    %2902 = vmatprep.subr.mxu0 0.0
    %v2903 = vand.u32 %v167, 4294901760
    %2904 = vmatpush1.msra.mxu0 %v2903
    %2905 = vmatprep.subr.mxu0 0.0
    %v2906 = vand.u32 %v168, 4294901760
    %2907 = vmatpush1.msra.mxu0 %v2906
    %2908 = vmatprep.subr.mxu0 0.0
    %v2909 = vand.u32 %v169, 4294901760
    %2910 = vmatpush1.msra.mxu0 %v2909
    %2911 = vmatprep.subr.mxu0 0.0
    %v2912 = vand.u32 %v170, 4294901760
    %2913 = vmatpush1.msra.mxu0 %v2912
    %2914 = vmatprep.subr.mxu0 0.0
    %v2915 = vand.u32 %v171, 4294901760
    %2916 = vmatpush1.msra.mxu0 %v2915
    %2917 = vmatprep.subr.mxu0 0.0
    %v2918 = vand.u32 %v172, 4294901760
    %2919 = vmatpush1.msra.mxu0 %v2918
    %2920 = vmatprep.subr.mxu0 0.0
    %v2921 = vand.u32 %v173, 4294901760
    %2922 = vmatpush1.msra.mxu0 %v2921
    %2923 = vmatprep.subr.mxu0 0.0
    %v2924 = vand.u32 %v174, 4294901760
    %2925 = vmatpush1.msra.mxu0 %v2924
    %2926 = vmatprep.subr.mxu0 0.0
    %v2927 = vand.u32 %v175, 4294901760
    %2928 = vmatpush1.msra.mxu0 %v2927
    %2929 = vmatprep.subr.mxu0 0.0
    %v2930 = vand.u32 %v176, 4294901760
    %2931 = vmatpush1.msra.mxu0 %v2930
    %2932 = vmatprep.subr.mxu0 0.0
    %v2933 = vand.u32 %v177, 4294901760
    %2934 = vmatpush1.msra.mxu0 %v2933
    %2935 = vmatprep.subr.mxu0 0.0
    %v2936 = vand.u32 %v178, 4294901760
    %2937 = vmatpush1.msra.mxu0 %v2936
    %2938 = vmatprep.subr.mxu0 0.0
    %v2939 = vand.u32 %v179, 4294901760
    %2940 = vmatpush1.msra.mxu0 %v2939
    %2941 = vmatprep.subr.mxu0 0.0
    %v2942 = vand.u32 %v180, 4294901760
    %2943 = vmatpush1.msra.mxu0 %v2942
    %2944 = vmatprep.subr.mxu0 0.0
    %v2945 = vand.u32 %v181, 4294901760
    %2946 = vmatpush1.msra.mxu0 %v2945
    %2947 = vmatprep.subr.mxu0 0.0
    %v2948 = vand.u32 %v182, 4294901760
    %2949 = vmatpush1.msra.mxu0 %v2948
    %2950 = vmatprep.subr.mxu0 0.0
    %v2951 = vand.u32 %v183, 4294901760
    %2952 = vmatpush1.msra.mxu0 %v2951
    %2953 = vmatprep.subr.mxu0 0.0
    %v2954 = vand.u32 %v184, 4294901760
    %2955 = vmatpush1.msra.mxu0 %v2954
    %2956 = vmatprep.subr.mxu0 0.0
    %v2957 = vand.u32 %v185, 4294901760
    %2958 = vmatpush1.msra.mxu0 %v2957
    %2959 = vmatprep.subr.mxu0 0.0
    %v2960 = vand.u32 %v186, 4294901760
    %2961 = vmatpush1.msra.mxu0 %v2960
    %v2962 = vand.u32 %v80, 4294901760
    %2963 = vmatprep.mubr.f32.mxu0 %v2962
    %v2964 = vand.u32 %v79, 4294901760
    %2965 = vmatmul.mubr.f32.gmra.mrb[0].mxu0 %v2964
    %v2966 = vpop.f32.mrb[0].mxu0
    %v2967 = vadd.f32 %v2856, %v2966
    %v2968 = vpop.f32.mrb[0].mxu0
    %v2969 = vand.u32 %v88, 4294901760
    %2970 = vmatprep.mubr.f32.mxu0 %v2969
    %v2971 = vand.u32 %v87, 4294901760
    %2972 = vmatmul.mubr.f32.gmra.mrb[0].mxu0 %v2971
    %v2973 = vpop.f32.mrb[0].mxu0
    %v2974 = vadd.f32 %v2863, %v2973
    %v2975 = vpop.f32.mrb[0].mxu0
    %2976 = vdwg.mxu0
    %2977 = vmatprep.subr.mxu0 0.0
    %v2978 = vand.u32 %v187, 4294901760
    %2979 = vmatpush1.msra.mxu0 %v2978
    %2980 = vmatprep.subr.mxu0 0.0
    %v2981 = vand.u32 %v188, 4294901760
    %2982 = vmatpush1.msra.mxu0 %v2981
    %2983 = vmatprep.subr.mxu0 0.0
    %v2984 = vand.u32 %v189, 4294901760
    %2985 = vmatpush1.msra.mxu0 %v2984
    %2986 = vmatprep.subr.mxu0 0.0
    %v2987 = vand.u32 %v190, 4294901760
    %2988 = vmatpush1.msra.mxu0 %v2987
    %2989 = vmatprep.subr.mxu0 0.0
    %v2990 = vand.u32 %v191, 4294901760
    %2991 = vmatpush1.msra.mxu0 %v2990
    %2992 = vmatprep.subr.mxu0 0.0
    %v2993 = vand.u32 %v192, 4294901760
    %2994 = vmatpush1.msra.mxu0 %v2993
    %2995 = vmatprep.subr.mxu0 0.0
    %v2996 = vand.u32 %v193, 4294901760
    %2997 = vmatpush1.msra.mxu0 %v2996
    %2998 = vmatprep.subr.mxu0 0.0
    %v2999 = vand.u32 %v194, 4294901760
    %3000 = vmatpush1.msra.mxu0 %v2999
    %3001 = vmatprep.subr.mxu0 0.0
    %v3002 = vand.u32 %v195, 4294901760
    %3003 = vmatpush1.msra.mxu0 %v3002
    %3004 = vmatprep.subr.mxu0 0.0
    %v3005 = vand.u32 %v196, 4294901760
    %3006 = vmatpush1.msra.mxu0 %v3005
    %3007 = vmatprep.subr.mxu0 0.0
    %v3008 = vand.u32 %v197, 4294901760
    %3009 = vmatpush1.msra.mxu0 %v3008
    %3010 = vmatprep.subr.mxu0 0.0
    %v3011 = vand.u32 %v198, 4294901760
    %3012 = vmatpush1.msra.mxu0 %v3011
    %3013 = vmatprep.subr.mxu0 0.0
    %v3014 = vand.u32 %v199, 4294901760
    %3015 = vmatpush1.msra.mxu0 %v3014
    %3016 = vmatprep.subr.mxu0 0.0
    %v3017 = vand.u32 %v200, 4294901760
    %3018 = vmatpush1.msra.mxu0 %v3017
    %3019 = vmatprep.subr.mxu0 0.0
    %v3020 = vand.u32 %v201, 4294901760
    %3021 = vmatpush1.msra.mxu0 %v3020
    %3022 = vmatprep.subr.mxu0 0.0
    %v3023 = vand.u32 %v202, 4294901760
    %3024 = vmatpush1.msra.mxu0 %v3023
    %3025 = vmatprep.subr.mxu0 0.0
    %v3026 = vand.u32 %v203, 4294901760
    %3027 = vmatpush1.msra.mxu0 %v3026
    %3028 = vmatprep.subr.mxu0 0.0
    %v3029 = vand.u32 %v204, 4294901760
    %3030 = vmatpush1.msra.mxu0 %v3029
    %3031 = vmatprep.subr.mxu0 0.0
    %v3032 = vand.u32 %v205, 4294901760
    %3033 = vmatpush1.msra.mxu0 %v3032
    %3034 = vmatprep.subr.mxu0 0.0
    %v3035 = vand.u32 %v206, 4294901760
    %3036 = vmatpush1.msra.mxu0 %v3035
    %3037 = vmatprep.subr.mxu0 0.0
    %v3038 = vand.u32 %v207, 4294901760
    %3039 = vmatpush1.msra.mxu0 %v3038
    %3040 = vmatprep.subr.mxu0 0.0
    %v3041 = vand.u32 %v208, 4294901760
    %3042 = vmatpush1.msra.mxu0 %v3041
    %3043 = vmatprep.subr.mxu0 0.0
    %v3044 = vand.u32 %v209, 4294901760
    %3045 = vmatpush1.msra.mxu0 %v3044
    %3046 = vmatprep.subr.mxu0 0.0
    %v3047 = vand.u32 %v210, 4294901760
    %3048 = vmatpush1.msra.mxu0 %v3047
    %3049 = vmatprep.subr.mxu0 0.0
    %v3050 = vand.u32 %v211, 4294901760
    %3051 = vmatpush1.msra.mxu0 %v3050
    %3052 = vmatprep.subr.mxu0 0.0
    %v3053 = vand.u32 %v212, 4294901760
    %3054 = vmatpush1.msra.mxu0 %v3053
    %3055 = vmatprep.subr.mxu0 0.0
    %v3056 = vand.u32 %v213, 4294901760
    %3057 = vmatpush1.msra.mxu0 %v3056
    %3058 = vmatprep.subr.mxu0 0.0
    %v3059 = vand.u32 %v214, 4294901760
    %3060 = vmatpush1.msra.mxu0 %v3059
    %3061 = vmatprep.subr.mxu0 0.0
    %v3062 = vand.u32 %v215, 4294901760
    %3063 = vmatpush1.msra.mxu0 %v3062
    %3064 = vmatprep.subr.mxu0 0.0
    %3065 = vmatpush1.msra.mxu0 0.0
    %3066 = vmatprep.subr.mxu0 0.0
    %3067 = vmatpush1.msra.mxu0 0.0
    %3068 = vmatprep.subr.mxu0 0.0
    %3069 = vmatpush1.msra.mxu0 0.0
    %v3070 = vand.u32 %v218, 4294901760
    %v3071 = vsub.f32 %v218, %v3070
    %v3072 = vand.u32 %v3071, 4294901760
    %v3073 = vsub.f32 %v3071, %v3072
    %v3074 = vand.u32 %v3073, 4294901760
    %3075 = vmatprep.mubr.f32.mxu0 %v3074
    %v3076 = vand.u32 %v81, 4294901760
    %v3077 = vsub.f32 %v81, %v3076
    %v3078 = vand.u32 %v3077, 4294901760
    %v3079 = vsub.f32 %v3077, %v3078
    %v3080 = vand.u32 %v3079, 4294901760
    %3081 = vmatmul.mubr.f32.gmra.mrb[0].mxu0 %v3080
    %v3082 = vpop.f32.mrb[0].mxu0
    %v3083 = vadd.f32 %v2967, %v3082
    %v3084 = vpop.f32.mrb[0].mxu0
    %v3085 = vand.u32 %v221, 4294901760
    %v3086 = vsub.f32 %v221, %v3085
    %v3087 = vand.u32 %v3086, 4294901760
    %v3088 = vsub.f32 %v3086, %v3087
    %v3089 = vand.u32 %v3088, 4294901760
    %3090 = vmatprep.mubr.f32.mxu0 %v3089
    %v3091 = vand.u32 %v89, 4294901760
    %v3092 = vsub.f32 %v89, %v3091
    %v3093 = vand.u32 %v3092, 4294901760
    %v3094 = vsub.f32 %v3092, %v3093
    %v3095 = vand.u32 %v3094, 4294901760
    %3096 = vmatmul.mubr.f32.gmra.mrb[0].mxu0 %v3095
    %v3097 = vpop.f32.mrb[0].mxu0
    %v3098 = vadd.f32 %v2974, %v3097
    %v3099 = vpop.f32.mrb[0].mxu0
    %3100 = vdwg.mxu0
    %3101 = vmatprep.subr.mxu0 0.0
    %v3102 = vand.u32 %v187, 4294901760
    %v3103 = vsub.f32 %v187, %v3102
    %v3104 = vand.u32 %v3103, 4294901760
    %v3105 = vsub.f32 %v3103, %v3104
    %v3106 = vand.u32 %v3105, 4294901760
    %3107 = vmatpush1.msra.mxu0 %v3106
    %3108 = vmatprep.subr.mxu0 0.0
    %v3109 = vand.u32 %v188, 4294901760
    %v3110 = vsub.f32 %v188, %v3109
    %v3111 = vand.u32 %v3110, 4294901760
    %v3112 = vsub.f32 %v3110, %v3111
    %v3113 = vand.u32 %v3112, 4294901760
    %3114 = vmatpush1.msra.mxu0 %v3113
    %3115 = vmatprep.subr.mxu0 0.0
    %v3116 = vand.u32 %v189, 4294901760
    %v3117 = vsub.f32 %v189, %v3116
    %v3118 = vand.u32 %v3117, 4294901760
    %v3119 = vsub.f32 %v3117, %v3118
    %v3120 = vand.u32 %v3119, 4294901760
    %3121 = vmatpush1.msra.mxu0 %v3120
    %3122 = vmatprep.subr.mxu0 0.0
    %v3123 = vand.u32 %v190, 4294901760
    %v3124 = vsub.f32 %v190, %v3123
    %v3125 = vand.u32 %v3124, 4294901760
    %v3126 = vsub.f32 %v3124, %v3125
    %v3127 = vand.u32 %v3126, 4294901760
    %3128 = vmatpush1.msra.mxu0 %v3127
    %3129 = vmatprep.subr.mxu0 0.0
    %v3130 = vand.u32 %v191, 4294901760
    %v3131 = vsub.f32 %v191, %v3130
    %v3132 = vand.u32 %v3131, 4294901760
    %v3133 = vsub.f32 %v3131, %v3132
    %v3134 = vand.u32 %v3133, 4294901760
    %3135 = vmatpush1.msra.mxu0 %v3134
    %3136 = vmatprep.subr.mxu0 0.0
    %v3137 = vand.u32 %v192, 4294901760
    %v3138 = vsub.f32 %v192, %v3137
    %v3139 = vand.u32 %v3138, 4294901760
    %v3140 = vsub.f32 %v3138, %v3139
    %v3141 = vand.u32 %v3140, 4294901760
    %3142 = vmatpush1.msra.mxu0 %v3141
    %3143 = vmatprep.subr.mxu0 0.0
    %v3144 = vand.u32 %v193, 4294901760
    %v3145 = vsub.f32 %v193, %v3144
    %v3146 = vand.u32 %v3145, 4294901760
    %v3147 = vsub.f32 %v3145, %v3146
    %v3148 = vand.u32 %v3147, 4294901760
    %3149 = vmatpush1.msra.mxu0 %v3148
    %3150 = vmatprep.subr.mxu0 0.0
    %v3151 = vand.u32 %v194, 4294901760
    %v3152 = vsub.f32 %v194, %v3151
    %v3153 = vand.u32 %v3152, 4294901760
    %v3154 = vsub.f32 %v3152, %v3153
    %v3155 = vand.u32 %v3154, 4294901760
    %3156 = vmatpush1.msra.mxu0 %v3155
    %3157 = vmatprep.subr.mxu0 0.0
    %v3158 = vand.u32 %v195, 4294901760
    %v3159 = vsub.f32 %v195, %v3158
    %v3160 = vand.u32 %v3159, 4294901760
    %v3161 = vsub.f32 %v3159, %v3160
    %v3162 = vand.u32 %v3161, 4294901760
    %3163 = vmatpush1.msra.mxu0 %v3162
    %3164 = vmatprep.subr.mxu0 0.0
    %v3165 = vand.u32 %v196, 4294901760
    %v3166 = vsub.f32 %v196, %v3165
    %v3167 = vand.u32 %v3166, 4294901760
    %v3168 = vsub.f32 %v3166, %v3167
    %v3169 = vand.u32 %v3168, 4294901760
    %3170 = vmatpush1.msra.mxu0 %v3169
    %3171 = vmatprep.subr.mxu0 0.0
    %v3172 = vand.u32 %v197, 4294901760
    %v3173 = vsub.f32 %v197, %v3172
    %v3174 = vand.u32 %v3173, 4294901760
    %v3175 = vsub.f32 %v3173, %v3174
    %v3176 = vand.u32 %v3175, 4294901760
    %3177 = vmatpush1.msra.mxu0 %v3176
    %3178 = vmatprep.subr.mxu0 0.0
    %v3179 = vand.u32 %v198, 4294901760
    %v3180 = vsub.f32 %v198, %v3179
    %v3181 = vand.u32 %v3180, 4294901760
    %v3182 = vsub.f32 %v3180, %v3181
    %v3183 = vand.u32 %v3182, 4294901760
    %3184 = vmatpush1.msra.mxu0 %v3183
    %3185 = vmatprep.subr.mxu0 0.0
    %v3186 = vand.u32 %v199, 4294901760
    %v3187 = vsub.f32 %v199, %v3186
    %v3188 = vand.u32 %v3187, 4294901760
    %v3189 = vsub.f32 %v3187, %v3188
    %v3190 = vand.u32 %v3189, 4294901760
    %3191 = vmatpush1.msra.mxu0 %v3190
    %3192 = vmatprep.subr.mxu0 0.0
    %v3193 = vand.u32 %v200, 4294901760
    %v3194 = vsub.f32 %v200, %v3193
    %v3195 = vand.u32 %v3194, 4294901760
    %v3196 = vsub.f32 %v3194, %v3195
    %v3197 = vand.u32 %v3196, 4294901760
    %3198 = vmatpush1.msra.mxu0 %v3197
    %3199 = vmatprep.subr.mxu0 0.0
    %v3200 = vand.u32 %v201, 4294901760
    %v3201 = vsub.f32 %v201, %v3200
    %v3202 = vand.u32 %v3201, 4294901760
    %v3203 = vsub.f32 %v3201, %v3202
    %v3204 = vand.u32 %v3203, 4294901760
    %3205 = vmatpush1.msra.mxu0 %v3204
    %3206 = vmatprep.subr.mxu0 0.0
    %v3207 = vand.u32 %v202, 4294901760
    %v3208 = vsub.f32 %v202, %v3207
    %v3209 = vand.u32 %v3208, 4294901760
    %v3210 = vsub.f32 %v3208, %v3209
    %v3211 = vand.u32 %v3210, 4294901760
    %3212 = vmatpush1.msra.mxu0 %v3211
    %3213 = vmatprep.subr.mxu0 0.0
    %v3214 = vand.u32 %v203, 4294901760
    %v3215 = vsub.f32 %v203, %v3214
    %v3216 = vand.u32 %v3215, 4294901760
    %v3217 = vsub.f32 %v3215, %v3216
    %v3218 = vand.u32 %v3217, 4294901760
    %3219 = vmatpush1.msra.mxu0 %v3218
    %3220 = vmatprep.subr.mxu0 0.0
    %v3221 = vand.u32 %v204, 4294901760
    %v3222 = vsub.f32 %v204, %v3221
    %v3223 = vand.u32 %v3222, 4294901760
    %v3224 = vsub.f32 %v3222, %v3223
    %v3225 = vand.u32 %v3224, 4294901760
    %3226 = vmatpush1.msra.mxu0 %v3225
    %3227 = vmatprep.subr.mxu0 0.0
    %v3228 = vand.u32 %v205, 4294901760
    %v3229 = vsub.f32 %v205, %v3228
    %v3230 = vand.u32 %v3229, 4294901760
    %v3231 = vsub.f32 %v3229, %v3230
    %v3232 = vand.u32 %v3231, 4294901760
    %3233 = vmatpush1.msra.mxu0 %v3232
    %3234 = vmatprep.subr.mxu0 0.0
    %v3235 = vand.u32 %v206, 4294901760
    %v3236 = vsub.f32 %v206, %v3235
    %v3237 = vand.u32 %v3236, 4294901760
    %v3238 = vsub.f32 %v3236, %v3237
    %v3239 = vand.u32 %v3238, 4294901760
    %3240 = vmatpush1.msra.mxu0 %v3239
    %3241 = vmatprep.subr.mxu0 0.0
    %v3242 = vand.u32 %v207, 4294901760
    %v3243 = vsub.f32 %v207, %v3242
    %v3244 = vand.u32 %v3243, 4294901760
    %v3245 = vsub.f32 %v3243, %v3244
    %v3246 = vand.u32 %v3245, 4294901760
    %3247 = vmatpush1.msra.mxu0 %v3246
    %3248 = vmatprep.subr.mxu0 0.0
    %v3249 = vand.u32 %v208, 4294901760
    %v3250 = vsub.f32 %v208, %v3249
    %v3251 = vand.u32 %v3250, 4294901760
    %v3252 = vsub.f32 %v3250, %v3251
    %v3253 = vand.u32 %v3252, 4294901760
    %3254 = vmatpush1.msra.mxu0 %v3253
    %3255 = vmatprep.subr.mxu0 0.0
    %v3256 = vand.u32 %v209, 4294901760
    %v3257 = vsub.f32 %v209, %v3256
    %v3258 = vand.u32 %v3257, 4294901760
    %v3259 = vsub.f32 %v3257, %v3258
    %v3260 = vand.u32 %v3259, 4294901760
    %3261 = vmatpush1.msra.mxu0 %v3260
    %3262 = vmatprep.subr.mxu0 0.0
    %v3263 = vand.u32 %v210, 4294901760
    %v3264 = vsub.f32 %v210, %v3263
    %v3265 = vand.u32 %v3264, 4294901760
    %v3266 = vsub.f32 %v3264, %v3265
    %v3267 = vand.u32 %v3266, 4294901760
    %3268 = vmatpush1.msra.mxu0 %v3267
    %3269 = vmatprep.subr.mxu0 0.0
    %v3270 = vand.u32 %v211, 4294901760
    %v3271 = vsub.f32 %v211, %v3270
    %v3272 = vand.u32 %v3271, 4294901760
    %v3273 = vsub.f32 %v3271, %v3272
    %v3274 = vand.u32 %v3273, 4294901760
    %3275 = vmatpush1.msra.mxu0 %v3274
    %3276 = vmatprep.subr.mxu0 0.0
    %v3277 = vand.u32 %v212, 4294901760
    %v3278 = vsub.f32 %v212, %v3277
    %v3279 = vand.u32 %v3278, 4294901760
    %v3280 = vsub.f32 %v3278, %v3279
    %v3281 = vand.u32 %v3280, 4294901760
    %3282 = vmatpush1.msra.mxu0 %v3281
    %3283 = vmatprep.subr.mxu0 0.0
    %v3284 = vand.u32 %v213, 4294901760
    %v3285 = vsub.f32 %v213, %v3284
    %v3286 = vand.u32 %v3285, 4294901760
    %v3287 = vsub.f32 %v3285, %v3286
    %v3288 = vand.u32 %v3287, 4294901760
    %3289 = vmatpush1.msra.mxu0 %v3288
    %3290 = vmatprep.subr.mxu0 0.0
    %v3291 = vand.u32 %v214, 4294901760
    %v3292 = vsub.f32 %v214, %v3291
    %v3293 = vand.u32 %v3292, 4294901760
    %v3294 = vsub.f32 %v3292, %v3293
    %v3295 = vand.u32 %v3294, 4294901760
    %3296 = vmatpush1.msra.mxu0 %v3295
    %3297 = vmatprep.subr.mxu0 0.0
    %v3298 = vand.u32 %v215, 4294901760
    %v3299 = vsub.f32 %v215, %v3298
    %v3300 = vand.u32 %v3299, 4294901760
    %v3301 = vsub.f32 %v3299, %v3300
    %v3302 = vand.u32 %v3301, 4294901760
    %3303 = vmatpush1.msra.mxu0 %v3302
    %3304 = vmatprep.subr.mxu0 0.0
    %3305 = vmatpush1.msra.mxu0 0.0
    %3306 = vmatprep.subr.mxu0 0.0
    %3307 = vmatpush1.msra.mxu0 0.0
    %3308 = vmatprep.subr.mxu0 0.0
    %3309 = vmatpush1.msra.mxu0 0.0
    %v3310 = vand.u32 %v218, 4294901760
    %3311 = vmatprep.mubr.f32.mxu0 %v3310
    %v3312 = vand.u32 %v81, 4294901760
    %3313 = vmatmul.mubr.f32.gmra.mrb[0].mxu0 %v3312
    %v3314 = vpop.f32.mrb[0].mxu0
    %v3315 = vadd.f32 %v3083, %v3314
    %v3316 = vpop.f32.mrb[0].mxu0
    %v3317 = vand.u32 %v221, 4294901760
    %3318 = vmatprep.mubr.f32.mxu0 %v3317
    %v3319 = vand.u32 %v89, 4294901760
    %3320 = vmatmul.mubr.f32.gmra.mrb[0].mxu0 %v3319
    %v3321 = vpop.f32.mrb[0].mxu0
    %v3322 = vadd.f32 %v3098, %v3321
    %v3323 = vpop.f32.mrb[0].mxu0
    %3324 = vdwg.mxu0
    %3325 = vmatprep.subr.mxu0 0.0
    %v3326 = vand.u32 %v187, 4294901760
    %v3327 = vsub.f32 %v187, %v3326
    %3328 = vmatpush1.msra.mxu0 %v3327
    %3329 = vmatprep.subr.mxu0 0.0
    %v3330 = vand.u32 %v188, 4294901760
    %v3331 = vsub.f32 %v188, %v3330
    %3332 = vmatpush1.msra.mxu0 %v3331
    %3333 = vmatprep.subr.mxu0 0.0
    %v3334 = vand.u32 %v189, 4294901760
    %v3335 = vsub.f32 %v189, %v3334
    %3336 = vmatpush1.msra.mxu0 %v3335
    %3337 = vmatprep.subr.mxu0 0.0
    %v3338 = vand.u32 %v190, 4294901760
    %v3339 = vsub.f32 %v190, %v3338
    %3340 = vmatpush1.msra.mxu0 %v3339
    %3341 = vmatprep.subr.mxu0 0.0
    %v3342 = vand.u32 %v191, 4294901760
    %v3343 = vsub.f32 %v191, %v3342
    %3344 = vmatpush1.msra.mxu0 %v3343
    %3345 = vmatprep.subr.mxu0 0.0
    %v3346 = vand.u32 %v192, 4294901760
    %v3347 = vsub.f32 %v192, %v3346
    %3348 = vmatpush1.msra.mxu0 %v3347
    %3349 = vmatprep.subr.mxu0 0.0
    %v3350 = vand.u32 %v193, 4294901760
    %v3351 = vsub.f32 %v193, %v3350
    %3352 = vmatpush1.msra.mxu0 %v3351
    %3353 = vmatprep.subr.mxu0 0.0
    %v3354 = vand.u32 %v194, 4294901760
    %v3355 = vsub.f32 %v194, %v3354
    %3356 = vmatpush1.msra.mxu0 %v3355
    %3357 = vmatprep.subr.mxu0 0.0
    %v3358 = vand.u32 %v195, 4294901760
    %v3359 = vsub.f32 %v195, %v3358
    %3360 = vmatpush1.msra.mxu0 %v3359
    %3361 = vmatprep.subr.mxu0 0.0
    %v3362 = vand.u32 %v196, 4294901760
    %v3363 = vsub.f32 %v196, %v3362
    %3364 = vmatpush1.msra.mxu0 %v3363
    %3365 = vmatprep.subr.mxu0 0.0
    %v3366 = vand.u32 %v197, 4294901760
    %v3367 = vsub.f32 %v197, %v3366
    %3368 = vmatpush1.msra.mxu0 %v3367
    %3369 = vmatprep.subr.mxu0 0.0
    %v3370 = vand.u32 %v198, 4294901760
    %v3371 = vsub.f32 %v198, %v3370
    %3372 = vmatpush1.msra.mxu0 %v3371
    %3373 = vmatprep.subr.mxu0 0.0
    %v3374 = vand.u32 %v199, 4294901760
    %v3375 = vsub.f32 %v199, %v3374
    %3376 = vmatpush1.msra.mxu0 %v3375
    %3377 = vmatprep.subr.mxu0 0.0
    %v3378 = vand.u32 %v200, 4294901760
    %v3379 = vsub.f32 %v200, %v3378
    %3380 = vmatpush1.msra.mxu0 %v3379
    %3381 = vmatprep.subr.mxu0 0.0
    %v3382 = vand.u32 %v201, 4294901760
    %v3383 = vsub.f32 %v201, %v3382
    %3384 = vmatpush1.msra.mxu0 %v3383
    %3385 = vmatprep.subr.mxu0 0.0
    %v3386 = vand.u32 %v202, 4294901760
    %v3387 = vsub.f32 %v202, %v3386
    %3388 = vmatpush1.msra.mxu0 %v3387
    %3389 = vmatprep.subr.mxu0 0.0
    %v3390 = vand.u32 %v203, 4294901760
    %v3391 = vsub.f32 %v203, %v3390
    %3392 = vmatpush1.msra.mxu0 %v3391
    %3393 = vmatprep.subr.mxu0 0.0
    %v3394 = vand.u32 %v204, 4294901760
    %v3395 = vsub.f32 %v204, %v3394
    %3396 = vmatpush1.msra.mxu0 %v3395
    %3397 = vmatprep.subr.mxu0 0.0
    %v3398 = vand.u32 %v205, 4294901760
    %v3399 = vsub.f32 %v205, %v3398
    %3400 = vmatpush1.msra.mxu0 %v3399
    %3401 = vmatprep.subr.mxu0 0.0
    %v3402 = vand.u32 %v206, 4294901760
    %v3403 = vsub.f32 %v206, %v3402
    %3404 = vmatpush1.msra.mxu0 %v3403
    %3405 = vmatprep.subr.mxu0 0.0
    %v3406 = vand.u32 %v207, 4294901760
    %v3407 = vsub.f32 %v207, %v3406
    %3408 = vmatpush1.msra.mxu0 %v3407
    %3409 = vmatprep.subr.mxu0 0.0
    %v3410 = vand.u32 %v208, 4294901760
    %v3411 = vsub.f32 %v208, %v3410
    %3412 = vmatpush1.msra.mxu0 %v3411
    %3413 = vmatprep.subr.mxu0 0.0
    %v3414 = vand.u32 %v209, 4294901760
    %v3415 = vsub.f32 %v209, %v3414
    %3416 = vmatpush1.msra.mxu0 %v3415
    %3417 = vmatprep.subr.mxu0 0.0
    %v3418 = vand.u32 %v210, 4294901760
    %v3419 = vsub.f32 %v210, %v3418
    %3420 = vmatpush1.msra.mxu0 %v3419
    %3421 = vmatprep.subr.mxu0 0.0
    %v3422 = vand.u32 %v211, 4294901760
    %v3423 = vsub.f32 %v211, %v3422
    %3424 = vmatpush1.msra.mxu0 %v3423
    %3425 = vmatprep.subr.mxu0 0.0
    %v3426 = vand.u32 %v212, 4294901760
    %v3427 = vsub.f32 %v212, %v3426
    %3428 = vmatpush1.msra.mxu0 %v3427
    %3429 = vmatprep.subr.mxu0 0.0
    %v3430 = vand.u32 %v213, 4294901760
    %v3431 = vsub.f32 %v213, %v3430
    %3432 = vmatpush1.msra.mxu0 %v3431
    %3433 = vmatprep.subr.mxu0 0.0
    %v3434 = vand.u32 %v214, 4294901760
    %v3435 = vsub.f32 %v214, %v3434
    %3436 = vmatpush1.msra.mxu0 %v3435
    %3437 = vmatprep.subr.mxu0 0.0
    %v3438 = vand.u32 %v215, 4294901760
    %v3439 = vsub.f32 %v215, %v3438
    %3440 = vmatpush1.msra.mxu0 %v3439
    %3441 = vmatprep.subr.mxu0 0.0
    %3442 = vmatpush1.msra.mxu0 0.0
    %3443 = vmatprep.subr.mxu0 0.0
    %3444 = vmatpush1.msra.mxu0 0.0
    %3445 = vmatprep.subr.mxu0 0.0
    %3446 = vmatpush1.msra.mxu0 0.0
    %v3447 = vand.u32 %v218, 4294901760
    %v3448 = vsub.f32 %v218, %v3447
    %3449 = vmatprep.mubr.f32.mxu0 %v3448
    %v3450 = vand.u32 %v81, 4294901760
    %v3451 = vsub.f32 %v81, %v3450
    %3452 = vmatmul.mubr.f32.gmra.mrb[0].mxu0 %v3451
    %v3453 = vpop.f32.mrb[0].mxu0
    %v3454 = vadd.f32 %v3315, %v3453
    %v3455 = vpop.f32.mrb[0].mxu0
    %v3456 = vand.u32 %v221, 4294901760
    %v3457 = vsub.f32 %v221, %v3456
    %3458 = vmatprep.mubr.f32.mxu0 %v3457
    %v3459 = vand.u32 %v89, 4294901760
    %v3460 = vsub.f32 %v89, %v3459
    %3461 = vmatmul.mubr.f32.gmra.mrb[0].mxu0 %v3460
    %v3462 = vpop.f32.mrb[0].mxu0
    %v3463 = vadd.f32 %v3322, %v3462
    %v3464 = vpop.f32.mrb[0].mxu0
    %3465 = vdwg.mxu0
    %3466 = vmatprep.subr.mxu0 0.0
    %v3467 = vand.u32 %v187, 4294901760
    %3468 = vmatpush1.msra.mxu0 %v3467
    %3469 = vmatprep.subr.mxu0 0.0
    %v3470 = vand.u32 %v188, 4294901760
    %3471 = vmatpush1.msra.mxu0 %v3470
    %3472 = vmatprep.subr.mxu0 0.0
    %v3473 = vand.u32 %v189, 4294901760
    %3474 = vmatpush1.msra.mxu0 %v3473
    %3475 = vmatprep.subr.mxu0 0.0
    %v3476 = vand.u32 %v190, 4294901760
    %3477 = vmatpush1.msra.mxu0 %v3476
    %3478 = vmatprep.subr.mxu0 0.0
    %v3479 = vand.u32 %v191, 4294901760
    %3480 = vmatpush1.msra.mxu0 %v3479
    %3481 = vmatprep.subr.mxu0 0.0
    %v3482 = vand.u32 %v192, 4294901760
    %3483 = vmatpush1.msra.mxu0 %v3482
    %3484 = vmatprep.subr.mxu0 0.0
    %v3485 = vand.u32 %v193, 4294901760
    %3486 = vmatpush1.msra.mxu0 %v3485
    %3487 = vmatprep.subr.mxu0 0.0
    %v3488 = vand.u32 %v194, 4294901760
    %3489 = vmatpush1.msra.mxu0 %v3488
    %3490 = vmatprep.subr.mxu0 0.0
    %v3491 = vand.u32 %v195, 4294901760
    %3492 = vmatpush1.msra.mxu0 %v3491
    %3493 = vmatprep.subr.mxu0 0.0
    %v3494 = vand.u32 %v196, 4294901760
    %3495 = vmatpush1.msra.mxu0 %v3494
    %3496 = vmatprep.subr.mxu0 0.0
    %v3497 = vand.u32 %v197, 4294901760
    %3498 = vmatpush1.msra.mxu0 %v3497
    %3499 = vmatprep.subr.mxu0 0.0
    %v3500 = vand.u32 %v198, 4294901760
    %3501 = vmatpush1.msra.mxu0 %v3500
    %3502 = vmatprep.subr.mxu0 0.0
    %v3503 = vand.u32 %v199, 4294901760
    %3504 = vmatpush1.msra.mxu0 %v3503
    %3505 = vmatprep.subr.mxu0 0.0
    %v3506 = vand.u32 %v200, 4294901760
    %3507 = vmatpush1.msra.mxu0 %v3506
    %3508 = vmatprep.subr.mxu0 0.0
    %v3509 = vand.u32 %v201, 4294901760
    %3510 = vmatpush1.msra.mxu0 %v3509
    %3511 = vmatprep.subr.mxu0 0.0
    %v3512 = vand.u32 %v202, 4294901760
    %3513 = vmatpush1.msra.mxu0 %v3512
    %3514 = vmatprep.subr.mxu0 0.0
    %v3515 = vand.u32 %v203, 4294901760
    %3516 = vmatpush1.msra.mxu0 %v3515
    %3517 = vmatprep.subr.mxu0 0.0
    %v3518 = vand.u32 %v204, 4294901760
    %3519 = vmatpush1.msra.mxu0 %v3518
    %3520 = vmatprep.subr.mxu0 0.0
    %v3521 = vand.u32 %v205, 4294901760
    %3522 = vmatpush1.msra.mxu0 %v3521
    %3523 = vmatprep.subr.mxu0 0.0
    %v3524 = vand.u32 %v206, 4294901760
    %3525 = vmatpush1.msra.mxu0 %v3524
    %3526 = vmatprep.subr.mxu0 0.0
    %v3527 = vand.u32 %v207, 4294901760
    %3528 = vmatpush1.msra.mxu0 %v3527
    %3529 = vmatprep.subr.mxu0 0.0
    %v3530 = vand.u32 %v208, 4294901760
    %3531 = vmatpush1.msra.mxu0 %v3530
    %3532 = vmatprep.subr.mxu0 0.0
    %v3533 = vand.u32 %v209, 4294901760
    %3534 = vmatpush1.msra.mxu0 %v3533
    %3535 = vmatprep.subr.mxu0 0.0
    %v3536 = vand.u32 %v210, 4294901760
    %3537 = vmatpush1.msra.mxu0 %v3536
    %3538 = vmatprep.subr.mxu0 0.0
    %v3539 = vand.u32 %v211, 4294901760
    %3540 = vmatpush1.msra.mxu0 %v3539
    %3541 = vmatprep.subr.mxu0 0.0
    %v3542 = vand.u32 %v212, 4294901760
    %3543 = vmatpush1.msra.mxu0 %v3542
    %3544 = vmatprep.subr.mxu0 0.0
    %v3545 = vand.u32 %v213, 4294901760
    %3546 = vmatpush1.msra.mxu0 %v3545
    %3547 = vmatprep.subr.mxu0 0.0
    %v3548 = vand.u32 %v214, 4294901760
    %3549 = vmatpush1.msra.mxu0 %v3548
    %3550 = vmatprep.subr.mxu0 0.0
    %v3551 = vand.u32 %v215, 4294901760
    %3552 = vmatpush1.msra.mxu0 %v3551
    %3553 = vmatprep.subr.mxu0 0.0
    %3554 = vmatpush1.msra.mxu0 0.0
    %3555 = vmatprep.subr.mxu0 0.0
    %3556 = vmatpush1.msra.mxu0 0.0
    %3557 = vmatprep.subr.mxu0 0.0
    %3558 = vmatpush1.msra.mxu0 0.0
    %v3559 = vand.u32 %v218, 4294901760
    %v3560 = vsub.f32 %v218, %v3559
    %v3561 = vand.u32 %v3560, 4294901760
    %3562 = vmatprep.mubr.f32.mxu0 %v3561
    %v3563 = vand.u32 %v81, 4294901760
    %v3564 = vsub.f32 %v81, %v3563
    %v3565 = vand.u32 %v3564, 4294901760
    %3566 = vmatmul.mubr.f32.gmra.mrb[0].mxu0 %v3565
    %v3567 = vpop.f32.mrb[0].mxu0
    %v3568 = vadd.f32 %v3454, %v3567
    %v3569 = vpop.f32.mrb[0].mxu0
    %v3570 = vand.u32 %v221, 4294901760
    %v3571 = vsub.f32 %v221, %v3570
    %v3572 = vand.u32 %v3571, 4294901760
    %3573 = vmatprep.mubr.f32.mxu0 %v3572
    %v3574 = vand.u32 %v89, 4294901760
    %v3575 = vsub.f32 %v89, %v3574
    %v3576 = vand.u32 %v3575, 4294901760
    %3577 = vmatmul.mubr.f32.gmra.mrb[0].mxu0 %v3576
    %v3578 = vpop.f32.mrb[0].mxu0
    %v3579 = vadd.f32 %v3463, %v3578
    %v3580 = vpop.f32.mrb[0].mxu0
    %3581 = vdwg.mxu0
    %3582 = vmatprep.subr.mxu0 0.0
    %v3583 = vand.u32 %v187, 4294901760
    %v3584 = vsub.f32 %v187, %v3583
    %v3585 = vand.u32 %v3584, 4294901760
    %3586 = vmatpush1.msra.mxu0 %v3585
    %3587 = vmatprep.subr.mxu0 0.0
    %v3588 = vand.u32 %v188, 4294901760
    %v3589 = vsub.f32 %v188, %v3588
    %v3590 = vand.u32 %v3589, 4294901760
    %3591 = vmatpush1.msra.mxu0 %v3590
    %3592 = vmatprep.subr.mxu0 0.0
    %v3593 = vand.u32 %v189, 4294901760
    %v3594 = vsub.f32 %v189, %v3593
    %v3595 = vand.u32 %v3594, 4294901760
    %3596 = vmatpush1.msra.mxu0 %v3595
    %3597 = vmatprep.subr.mxu0 0.0
    %v3598 = vand.u32 %v190, 4294901760
    %v3599 = vsub.f32 %v190, %v3598
    %v3600 = vand.u32 %v3599, 4294901760
    %3601 = vmatpush1.msra.mxu0 %v3600
    %3602 = vmatprep.subr.mxu0 0.0
    %v3603 = vand.u32 %v191, 4294901760
    %v3604 = vsub.f32 %v191, %v3603
    %v3605 = vand.u32 %v3604, 4294901760
    %3606 = vmatpush1.msra.mxu0 %v3605
    %3607 = vmatprep.subr.mxu0 0.0
    %v3608 = vand.u32 %v192, 4294901760
    %v3609 = vsub.f32 %v192, %v3608
    %v3610 = vand.u32 %v3609, 4294901760
    %3611 = vmatpush1.msra.mxu0 %v3610
    %3612 = vmatprep.subr.mxu0 0.0
    %v3613 = vand.u32 %v193, 4294901760
    %v3614 = vsub.f32 %v193, %v3613
    %v3615 = vand.u32 %v3614, 4294901760
    %3616 = vmatpush1.msra.mxu0 %v3615
    %3617 = vmatprep.subr.mxu0 0.0
    %v3618 = vand.u32 %v194, 4294901760
    %v3619 = vsub.f32 %v194, %v3618
    %v3620 = vand.u32 %v3619, 4294901760
    %3621 = vmatpush1.msra.mxu0 %v3620
    %3622 = vmatprep.subr.mxu0 0.0
    %v3623 = vand.u32 %v195, 4294901760
    %v3624 = vsub.f32 %v195, %v3623
    %v3625 = vand.u32 %v3624, 4294901760
    %3626 = vmatpush1.msra.mxu0 %v3625
    %3627 = vmatprep.subr.mxu0 0.0
    %v3628 = vand.u32 %v196, 4294901760
    %v3629 = vsub.f32 %v196, %v3628
    %v3630 = vand.u32 %v3629, 4294901760
    %3631 = vmatpush1.msra.mxu0 %v3630
    %3632 = vmatprep.subr.mxu0 0.0
    %v3633 = vand.u32 %v197, 4294901760
    %v3634 = vsub.f32 %v197, %v3633
    %v3635 = vand.u32 %v3634, 4294901760
    %3636 = vmatpush1.msra.mxu0 %v3635
    %3637 = vmatprep.subr.mxu0 0.0
    %v3638 = vand.u32 %v198, 4294901760
    %v3639 = vsub.f32 %v198, %v3638
    %v3640 = vand.u32 %v3639, 4294901760
    %3641 = vmatpush1.msra.mxu0 %v3640
    %3642 = vmatprep.subr.mxu0 0.0
    %v3643 = vand.u32 %v199, 4294901760
    %v3644 = vsub.f32 %v199, %v3643
    %v3645 = vand.u32 %v3644, 4294901760
    %3646 = vmatpush1.msra.mxu0 %v3645
    %3647 = vmatprep.subr.mxu0 0.0
    %v3648 = vand.u32 %v200, 4294901760
    %v3649 = vsub.f32 %v200, %v3648
    %v3650 = vand.u32 %v3649, 4294901760
    %3651 = vmatpush1.msra.mxu0 %v3650
    %3652 = vmatprep.subr.mxu0 0.0
    %v3653 = vand.u32 %v201, 4294901760
    %v3654 = vsub.f32 %v201, %v3653
    %v3655 = vand.u32 %v3654, 4294901760
    %3656 = vmatpush1.msra.mxu0 %v3655
    %3657 = vmatprep.subr.mxu0 0.0
    %v3658 = vand.u32 %v202, 4294901760
    %v3659 = vsub.f32 %v202, %v3658
    %v3660 = vand.u32 %v3659, 4294901760
    %3661 = vmatpush1.msra.mxu0 %v3660
    %3662 = vmatprep.subr.mxu0 0.0
    %v3663 = vand.u32 %v203, 4294901760
    %v3664 = vsub.f32 %v203, %v3663
    %v3665 = vand.u32 %v3664, 4294901760
    %3666 = vmatpush1.msra.mxu0 %v3665
    %3667 = vmatprep.subr.mxu0 0.0
    %v3668 = vand.u32 %v204, 4294901760
    %v3669 = vsub.f32 %v204, %v3668
    %v3670 = vand.u32 %v3669, 4294901760
    %3671 = vmatpush1.msra.mxu0 %v3670
    %3672 = vmatprep.subr.mxu0 0.0
    %v3673 = vand.u32 %v205, 4294901760
    %v3674 = vsub.f32 %v205, %v3673
    %v3675 = vand.u32 %v3674, 4294901760
    %3676 = vmatpush1.msra.mxu0 %v3675
    %3677 = vmatprep.subr.mxu0 0.0
    %v3678 = vand.u32 %v206, 4294901760
    %v3679 = vsub.f32 %v206, %v3678
    %v3680 = vand.u32 %v3679, 4294901760
    %3681 = vmatpush1.msra.mxu0 %v3680
    %3682 = vmatprep.subr.mxu0 0.0
    %v3683 = vand.u32 %v207, 4294901760
    %v3684 = vsub.f32 %v207, %v3683
    %v3685 = vand.u32 %v3684, 4294901760
    %3686 = vmatpush1.msra.mxu0 %v3685
    %3687 = vmatprep.subr.mxu0 0.0
    %v3688 = vand.u32 %v208, 4294901760
    %v3689 = vsub.f32 %v208, %v3688
    %v3690 = vand.u32 %v3689, 4294901760
    %3691 = vmatpush1.msra.mxu0 %v3690
    %3692 = vmatprep.subr.mxu0 0.0
    %v3693 = vand.u32 %v209, 4294901760
    %v3694 = vsub.f32 %v209, %v3693
    %v3695 = vand.u32 %v3694, 4294901760
    %3696 = vmatpush1.msra.mxu0 %v3695
    %3697 = vmatprep.subr.mxu0 0.0
    %v3698 = vand.u32 %v210, 4294901760
    %v3699 = vsub.f32 %v210, %v3698
    %v3700 = vand.u32 %v3699, 4294901760
    %3701 = vmatpush1.msra.mxu0 %v3700
    %3702 = vmatprep.subr.mxu0 0.0
    %v3703 = vand.u32 %v211, 4294901760
    %v3704 = vsub.f32 %v211, %v3703
    %v3705 = vand.u32 %v3704, 4294901760
    %3706 = vmatpush1.msra.mxu0 %v3705
    %3707 = vmatprep.subr.mxu0 0.0
    %v3708 = vand.u32 %v212, 4294901760
    %v3709 = vsub.f32 %v212, %v3708
    %v3710 = vand.u32 %v3709, 4294901760
    %3711 = vmatpush1.msra.mxu0 %v3710
    %3712 = vmatprep.subr.mxu0 0.0
    %v3713 = vand.u32 %v213, 4294901760
    %v3714 = vsub.f32 %v213, %v3713
    %v3715 = vand.u32 %v3714, 4294901760
    %3716 = vmatpush1.msra.mxu0 %v3715
    %3717 = vmatprep.subr.mxu0 0.0
    %v3718 = vand.u32 %v214, 4294901760
    %v3719 = vsub.f32 %v214, %v3718
    %v3720 = vand.u32 %v3719, 4294901760
    %3721 = vmatpush1.msra.mxu0 %v3720
    %3722 = vmatprep.subr.mxu0 0.0
    %v3723 = vand.u32 %v215, 4294901760
    %v3724 = vsub.f32 %v215, %v3723
    %v3725 = vand.u32 %v3724, 4294901760
    %3726 = vmatpush1.msra.mxu0 %v3725
    %3727 = vmatprep.subr.mxu0 0.0
    %3728 = vmatpush1.msra.mxu0 0.0
    %3729 = vmatprep.subr.mxu0 0.0
    %3730 = vmatpush1.msra.mxu0 0.0
    %3731 = vmatprep.subr.mxu0 0.0
    %3732 = vmatpush1.msra.mxu0 0.0
    %v3733 = vand.u32 %v218, 4294901760
    %3734 = vmatprep.mubr.f32.mxu0 %v3733
    %v3735 = vand.u32 %v81, 4294901760
    %3736 = vmatmul.mubr.f32.gmra.mrb[0].mxu0 %v3735
    %v3737 = vpop.f32.mrb[0].mxu0
    %v3738 = vadd.f32 %v3568, %v3737
    %v3739 = vpop.f32.mrb[0].mxu0
    %v3740 = vand.u32 %v221, 4294901760
    %3741 = vmatprep.mubr.f32.mxu0 %v3740
    %v3742 = vand.u32 %v89, 4294901760
    %3743 = vmatmul.mubr.f32.gmra.mrb[0].mxu0 %v3742
    %v3744 = vpop.f32.mrb[0].mxu0
    %v3745 = vadd.f32 %v3579, %v3744
    %v3746 = vpop.f32.mrb[0].mxu0
    %3747 = vdwg.mxu0
    %3748 = vmatprep.subr.mxu0 0.0
    %v3749 = vand.u32 %v187, 4294901760
    %3750 = vmatpush1.msra.mxu0 %v3749
    %3751 = vmatprep.subr.mxu0 0.0
    %v3752 = vand.u32 %v188, 4294901760
    %3753 = vmatpush1.msra.mxu0 %v3752
    %3754 = vmatprep.subr.mxu0 0.0
    %v3755 = vand.u32 %v189, 4294901760
    %3756 = vmatpush1.msra.mxu0 %v3755
    %3757 = vmatprep.subr.mxu0 0.0
    %v3758 = vand.u32 %v190, 4294901760
    %3759 = vmatpush1.msra.mxu0 %v3758
    %3760 = vmatprep.subr.mxu0 0.0
    %v3761 = vand.u32 %v191, 4294901760
    %3762 = vmatpush1.msra.mxu0 %v3761
    %3763 = vmatprep.subr.mxu0 0.0
    %v3764 = vand.u32 %v192, 4294901760
    %3765 = vmatpush1.msra.mxu0 %v3764
    %3766 = vmatprep.subr.mxu0 0.0
    %v3767 = vand.u32 %v193, 4294901760
    %3768 = vmatpush1.msra.mxu0 %v3767
    %3769 = vmatprep.subr.mxu0 0.0
    %v3770 = vand.u32 %v194, 4294901760
    %3771 = vmatpush1.msra.mxu0 %v3770
    %3772 = vmatprep.subr.mxu0 0.0
    %v3773 = vand.u32 %v195, 4294901760
    %3774 = vmatpush1.msra.mxu0 %v3773
    %3775 = vmatprep.subr.mxu0 0.0
    %v3776 = vand.u32 %v196, 4294901760
    %3777 = vmatpush1.msra.mxu0 %v3776
    %3778 = vmatprep.subr.mxu0 0.0
    %v3779 = vand.u32 %v197, 4294901760
    %3780 = vmatpush1.msra.mxu0 %v3779
    %3781 = vmatprep.subr.mxu0 0.0
    %v3782 = vand.u32 %v198, 4294901760
    %3783 = vmatpush1.msra.mxu0 %v3782
    %3784 = vmatprep.subr.mxu0 0.0
    %v3785 = vand.u32 %v199, 4294901760
    %3786 = vmatpush1.msra.mxu0 %v3785
    %3787 = vmatprep.subr.mxu0 0.0
    %v3788 = vand.u32 %v200, 4294901760
    %3789 = vmatpush1.msra.mxu0 %v3788
    %3790 = vmatprep.subr.mxu0 0.0
    %v3791 = vand.u32 %v201, 4294901760
    %3792 = vmatpush1.msra.mxu0 %v3791
    %3793 = vmatprep.subr.mxu0 0.0
    %v3794 = vand.u32 %v202, 4294901760
    %3795 = vmatpush1.msra.mxu0 %v3794
    %3796 = vmatprep.subr.mxu0 0.0
    %v3797 = vand.u32 %v203, 4294901760
    %3798 = vmatpush1.msra.mxu0 %v3797
    %3799 = vmatprep.subr.mxu0 0.0
    %v3800 = vand.u32 %v204, 4294901760
    %3801 = vmatpush1.msra.mxu0 %v3800
    %3802 = vmatprep.subr.mxu0 0.0
    %v3803 = vand.u32 %v205, 4294901760
    %3804 = vmatpush1.msra.mxu0 %v3803
    %3805 = vmatprep.subr.mxu0 0.0
    %v3806 = vand.u32 %v206, 4294901760
    %3807 = vmatpush1.msra.mxu0 %v3806
    %3808 = vmatprep.subr.mxu0 0.0
    %v3809 = vand.u32 %v207, 4294901760
    %3810 = vmatpush1.msra.mxu0 %v3809
    %3811 = vmatprep.subr.mxu0 0.0
    %v3812 = vand.u32 %v208, 4294901760
    %3813 = vmatpush1.msra.mxu0 %v3812
    %3814 = vmatprep.subr.mxu0 0.0
    %v3815 = vand.u32 %v209, 4294901760
    %3816 = vmatpush1.msra.mxu0 %v3815
    %3817 = vmatprep.subr.mxu0 0.0
    %v3818 = vand.u32 %v210, 4294901760
    %3819 = vmatpush1.msra.mxu0 %v3818
    %3820 = vmatprep.subr.mxu0 0.0
    %v3821 = vand.u32 %v211, 4294901760
    %3822 = vmatpush1.msra.mxu0 %v3821
    %3823 = vmatprep.subr.mxu0 0.0
    %v3824 = vand.u32 %v212, 4294901760
    %3825 = vmatpush1.msra.mxu0 %v3824
    %3826 = vmatprep.subr.mxu0 0.0
    %v3827 = vand.u32 %v213, 4294901760
    %3828 = vmatpush1.msra.mxu0 %v3827
    %3829 = vmatprep.subr.mxu0 0.0
    %v3830 = vand.u32 %v214, 4294901760
    %3831 = vmatpush1.msra.mxu0 %v3830
    %3832 = vmatprep.subr.mxu0 0.0
    %v3833 = vand.u32 %v215, 4294901760
    %3834 = vmatpush1.msra.mxu0 %v3833
    %3835 = vmatprep.subr.mxu0 0.0
    %3836 = vmatpush1.msra.mxu0 0.0
    %3837 = vmatprep.subr.mxu0 0.0
    %3838 = vmatpush1.msra.mxu0 0.0
    %3839 = vmatprep.subr.mxu0 0.0
    %3840 = vmatpush1.msra.mxu0 0.0
    %v3841 = vand.u32 %v218, 4294901760
    %3842 = vmatprep.mubr.f32.mxu0 %v3841
    %v3843 = vand.u32 %v81, 4294901760
    %3844 = vmatmul.mubr.f32.gmra.mrb[0].mxu0 %v3843
    %v3845 = vpop.f32.mrb[0].mxu0
    %v3846 = vadd.f32 %v3738, %v3845
    %v3847 = vpop.f32.mrb[0].mxu0
    %v3848 = vand.u32 %v221, 4294901760
    %3849 = vmatprep.mubr.f32.mxu0 %v3848
    %v3850 = vand.u32 %v89, 4294901760
    %3851 = vmatmul.mubr.f32.gmra.mrb[0].mxu0 %v3850
    %v3852 = vpop.f32.mrb[0].mxu0
    %v3853 = vadd.f32 %v3745, %v3852
    %v3854 = vpop.f32.mrb[0].mxu0
    %3855 = vdwg.mxu0
    %v3856 = vmul.f32 %v3846, 11.313708
    %v3857 = vmul.f32 %v3853, 11.313708
    %3858 = vst [vmem:[#allocation5] sm:$0xff] %v3856
    %3859 = vst [vmem:[#allocation5 + $0x8] sm:$0xff] %v3857
    // Predicated region
    $region14: #{tpu_custom_call.1} parent=1 // pred_check
      _
    $region15: #{tpu_custom_call.1} parent=1 // pred_check_branch
      %3861 = sbr.rel (0) target = $region17
    $region16: #{tpu_custom_call.1} parent=1 // pred_region
      %s3863 = ssub.s32 256, 256
      %3864 = vsyncadd [#allocation4], %s3863
      %s3865 = sshll.u32 [#allocation5], 4
      %s3866 = int_to_ptr.vmem [resolvable:$true] %s3865
      %3871 = dma.vmem_to_hbm [thread:$0]  %s3866, 256, %s2, [#allocation4], 128, 128, 8
    $region17: #{tpu_custom_call.1} parent=1 // pred_fallthru
      _
    // Predicated region
    $region18: #{tpu_custom_call.1} parent=1 // pred_check
      _
    $region19: #{tpu_custom_call.1} parent=1 // pred_check_branch
      %3873 = sbr.rel (0) target = $region21
    $region20: #{tpu_custom_call.1} parent=1 // pred_region
      %3874 = dma.done [#allocation4], 256
    $region21: #{tpu_custom_call.1} parent=1 // pred_fallthru
      _
    %3875 = vsyncpa [#allocation3], 1
    %3876 = vsyncpa [#allocation4], 1

</llo_original>
